<compile_context>
chip_gen: v7x
topology: tpu7x:2x2x1
jax: 0.10.0
libtpu: 0.0.40
codegen_flags: <defaults>
</compile_context>

<pallas_src>
import functools

import jax
import jax.numpy as jnp
from jax.experimental import pallas as pl
from jax.experimental.pallas import tpu as pltpu


# ----------------------------------------------------------------------------
# Kernel: fused embedder (one-hot MXU gather) + all convs as one block-Toeplitz
# matmul + bias + ReLU + max over time positions, lane-dense bf16 store.
# ----------------------------------------------------------------------------
def fused_conv_kernel(ctx_ref, lmask_ref, rmask_ref, cemb_ref, delta_ref,
                      w_ref, b_ref, o_ref):
    """ctx/lmask/rmask: [TB, L] int32; cemb: [V, D] bf16 (char emb with both
    'space-mask 0' embeddings folded in); delta: [2, D] f32 (mask-1 minus
    mask-0 for left/right); w: [L*D, P*F] bf16 block-Toeplitz; b: [1, P*F] f32;
    o: [TB, F] bf16, F = n_conv * D (concatenated pooled conv features)."""
    tb, seq_len = ctx_ref.shape
    vocab, d = cemb_ref.shape
    pf = w_ref.shape[1]
    feat = o_ref.shape[1]

    iota_v = jax.lax.broadcasted_iota(jnp.int32, (tb, vocab), 1)
    ldelta = delta_ref[0:1, :]                        # [1, D] f32
    rdelta = delta_ref[1:2, :]

    acc = jnp.zeros((tb, pf), jnp.float32)
    for l in range(seq_len):                          # static, fully unrolled
        ids = ctx_ref[:, l:l + 1]                     # [TB, 1] int32
        onehot = jnp.where(ids == iota_v, 1.0, 0.0).astype(jnp.bfloat16)
        emb = jnp.dot(onehot, cemb_ref[...],          # lane-friendly gather
                      preferred_element_type=jnp.float32)        # [TB, D] f32
        lm = lmask_ref[:, l:l + 1].astype(jnp.float32)
        rm = rmask_ref[:, l:l + 1].astype(jnp.float32)
        emb = emb + lm * ldelta + rm * rdelta
        acc = acc + jnp.dot(emb.astype(jnp.bfloat16),
                            w_ref[l * d:(l + 1) * d, :],
                            preferred_element_type=jnp.float32)

    # Bias + ReLU in f32.  NOTE: padded (invalid) time positions carry zero
    # weight AND zero bias, so they yield ReLU(0)=0, which can never win the
    # max against valid ReLU outputs (>= 0).  This trick REQUIRES the ReLU;
    # if the activation ever changes, padded positions need a -inf bias.
    y = jnp.maximum(acc + b_ref[...], 0.0)

    n_pos = pf // feat
    pooled = y[:, :feat]
    for p in range(1, n_pos):                         # static 128-aligned slabs
        pooled = jnp.maximum(pooled, y[:, p * feat:(p + 1) * feat])
    o_ref[...] = pooled.astype(o_ref.dtype)           # bf16: halves writeback


# ----------------------------------------------------------------------------
# Wrapper: tiling, padding, BlockSpecs
# ----------------------------------------------------------------------------
def _round_up(x, m):
    return ((x + m - 1) // m) * m


def _choose_batch_tile(batch, block_b):
    """>=2 grid steps whenever the batch allows it (keeps both v7x TCs busy);
    rows/step capped at block_b (1024 default amortizes per-step overhead and
    keeps the f32 accumulator inside v5e's 16 MiB default scoped VMEM)."""
    if batch < 16:
        return _round_up(batch, 8)
    return min(block_b, max(8, _round_up(pl.cdiv(batch, 2), 8)))


def conv_layer_pallas(contexts, left_spc_masks, right_spc_masks,
                      cemb_adj, spc_deltas, w_fused, b_fused, feature_dim,
                      *, block_b=1024, single_buffer_consts=True):
    """ids [B, L] int32 -> pooled conv features [B, feature_dim] bf16."""
    B, L = contexts.shape
    vocab, D = cemb_adj.shape
    assert w_fused.shape[0] == L * D

    tb = _choose_batch_tile(B, block_b)
    bp = _round_up(B, tb)
    if bp != B:
        pad = ((0, bp - B), (0, 0))   # padded rows compute garbage, sliced off
        contexts = jnp.pad(contexts, pad)
        left_spc_masks = jnp.pad(left_spc_masks, pad)
        right_spc_masks = jnp.pad(right_spc_masks, pad)

    def id_spec():
        return pl.BlockSpec((tb, L), lambda i: (i, 0))

    def const_spec(shape):
        # Constant index_map -> block DMA'd once; double-buffering it only
        # wastes VMEM (matters at production embed dims, esp. on v7x).
        if single_buffer_consts:
            return pl.BlockSpec(shape, lambda i: (0, 0),
                                pipeline_mode=pl.Buffered(1))
        return pl.BlockSpec(shape, lambda i: (0, 0))

    pf = w_fused.shape[1]
    flops = bp * L * (2 * vocab * D + 2 * D * pf) + bp * pf
    bytes_accessed = (3 * bp * L * 4 + vocab * D * 2 + spc_deltas.size * 4
                      + w_fused.size * 2 + b_fused.size * 4
                      + bp * feature_dim * 2)

    out = pl.pallas_call(
        fused_conv_kernel,
        out_shape=jax.ShapeDtypeStruct((bp, feature_dim), jnp.bfloat16),
        grid_spec=pltpu.PrefetchScalarGridSpec(
            num_scalar_prefetch=0,
            grid=(bp // tb,),
            in_specs=[
                id_spec(), id_spec(), id_spec(),
                const_spec(cemb_adj.shape),
                const_spec(spc_deltas.shape),
                const_spec(w_fused.shape),
                const_spec(b_fused.shape),
            ],
            out_specs=pl.BlockSpec((tb, feature_dim), lambda i: (i, 0)),
        ),
        compiler_params=pltpu.CompilerParams(
            # Batch axis is embarrassingly parallel -> v7x shards it across
            # both TensorCores (no-op on single-TC v5e/v6e).
            dimension_semantics=("parallel",)),
        cost_estimate=pl.CostEstimate(flops=int(flops), transcendentals=0,
                                      bytes_accessed=int(bytes_accessed)),
    )(contexts, left_spc_masks, right_spc_masks,
      cemb_adj, spc_deltas, w_fused, b_fused)
    return out[:B]


# ----------------------------------------------------------------------------
# Fold all Conv1d weights into one block-Toeplitz matrix (built once, eagerly)
# ----------------------------------------------------------------------------
def build_fused_conv_params(conv_ws, conv_bs, seq_len, embed_dim):
    """Output axis ordered (position, conv, channel): every position is one
    contiguous lane-dense (n_conv*D)-wide slab for the in-kernel max-pool."""
    L, D = seq_len, embed_dim
    n_conv = len(conv_ws)
    n_pos = [L - int(w.shape[0]) + 1 for w in conv_ws]
    if min(n_pos) < 1:
        raise ValueError("sequence length must be >= the largest conv kernel size")
    P = max(n_pos)
    W = jnp.zeros((L, D, P, n_conv, D), jnp.float32)
    Bv = jnp.zeros((P, n_conv, D), jnp.float32)
    for c, (w, b) in enumerate(zip(conv_ws, conv_bs)):
        ks = int(w.shape[0])
        for p in range(L - ks + 1):
            for k in range(ks):
                W = W.at[p + k, :, p, c, :].set(w[k])
            Bv = Bv.at[p, c, :].set(b)
        # positions p >= L-ks+1 keep zero weight & zero bias -> ReLU(0)=0 pad
    w_fused = W.reshape(L * D, P * n_conv * D).astype(jnp.bfloat16)
    b_fused = Bv.reshape(1, P * n_conv * D)              # kept f32
    return w_fused, b_fused


def build_embedder_tables(params):
    """Fold both 'space-mask == 0' embeddings into the char table (bf16, used
    by the in-kernel one-hot MXU gather); keep the mask-1 deltas in f32."""
    base = params["left_spc_emb"][0] + params["right_spc_emb"][0]
    cemb_adj = (params["char_emb"] + base[None, :]).astype(jnp.bfloat16)
    spc_deltas = jnp.stack(
        [params["left_spc_emb"][1] - params["left_spc_emb"][0],
         params["right_spc_emb"][1] - params["right_spc_emb"][0]], axis=0)
    return cemb_adj, spc_deltas


# ----------------------------------------------------------------------------
# Parameters, plain-JAX embedder and pure-JAX reference (for correctness only)
# ----------------------------------------------------------------------------
def init_params(key, *, vocab_in, embed_dim, window):
    seq_len = 2 * window + 1
    ngram = min(5, seq_len)
    kernel_sizes = list(range(2, ngram + 1))
    ki = iter(jax.random.split(key, 3 + 2 * len(kernel_sizes)))

    def unif(k, shape, fan_in):
        bound = 1.0 / jnp.sqrt(jnp.float32(fan_in))
        return jax.random.uniform(k, shape, jnp.float32, -bound, bound)

    params = {
        # TODO(synk): exact khaiii `Embedder` semantics unavailable; modeled as
        # char-embedding lookup + additive left/right space-mask embeddings.
        "char_emb": 0.1 * jax.random.normal(next(ki), (vocab_in, embed_dim), jnp.float32),
        "left_spc_emb": 0.1 * jax.random.normal(next(ki), (2, embed_dim), jnp.float32),
        "right_spc_emb": 0.1 * jax.random.normal(next(ki), (2, embed_dim), jnp.float32),
        "conv_ws": [],   # [ks, D_in, D_out] = torch Conv1d weight [D_out, D_in, ks] permuted
        "conv_bs": [],   # [D_out]
    }
    for ks in kernel_sizes:
        params["conv_ws"].append(unif(next(ki), (ks, embed_dim, embed_dim), embed_dim * ks))
        params["conv_bs"].append(unif(next(ki), (embed_dim,), embed_dim * ks))
    return params, kernel_sizes


def embedder(params, contexts, left_spc_masks, right_spc_masks):
    embeds = params["char_emb"][contexts]                      # [B, L, D]
    embeds = embeds + params["left_spc_emb"][left_spc_masks]
    embeds = embeds + params["right_spc_emb"][right_spc_masks]
    return embeds


def conv_layer_reference(embeds, conv_ws, conv_bs):
    """Pure-JAX f32 reference of ConvLayer.forward."""
    _, L, _ = embeds.shape
    pooled = []
    for w, b in zip(conv_ws, conv_bs):
        ks = w.shape[0]
        outs = []
        for t in range(L - ks + 1):
            acc = b
            for k in range(ks):
                acc = acc + embeds[:, t + k, :] @ w[k]
            outs.append(jnp.maximum(acc, 0.0))
        pooled.append(jnp.max(jnp.stack(outs, 0), axis=0))
    return jnp.concatenate(pooled, axis=1)


# ----------------------------------------------------------------------------
# Main
# ----------------------------------------------------------------------------
if __name__ == "__main__":
    VOCAB_IN = 64
    EMBED_DIM = 32
    WINDOW = 3        # seq len = 7, convs ks = 2..5 -> 4*32 = 128 features
    BATCH = 24        # >16 so the toy run exercises 2 grid steps + row padding
    SEQ = 2 * WINDOW + 1

    key = jax.random.PRNGKey(0)
    k_par, k_ctx, k_l, k_r = jax.random.split(key, 4)
    params, kernel_sizes = init_params(k_par, vocab_in=VOCAB_IN,
                                       embed_dim=EMBED_DIM, window=WINDOW)
    feature_dim = len(kernel_sizes) * EMBED_DIM

    w_fused, b_fused = build_fused_conv_params(
        params["conv_ws"], params["conv_bs"], SEQ, EMBED_DIM)
    cemb_adj, spc_deltas = build_embedder_tables(params)

    contexts = jax.random.randint(k_ctx, (BATCH, SEQ), 0, VOCAB_IN, dtype=jnp.int32)
    left_spc_masks = jax.random.randint(k_l, (BATCH, SEQ), 0, 2, dtype=jnp.int32)
    right_spc_masks = jax.random.randint(k_r, (BATCH, SEQ), 0, 2, dtype=jnp.int32)

    def run(single_buffer_consts):
        fwd = jax.jit(functools.partial(
            conv_layer_pallas, feature_dim=feature_dim,
            single_buffer_consts=single_buffer_consts))
        return jax.block_until_ready(
            fwd(contexts, left_spc_masks, right_spc_masks,
                cemb_adj, spc_deltas, w_fused, b_fused))

    try:
        features = run(True)
    except Exception:           # pl.Buffered(1) rejected by this JAX build:
        features = run(False)   # fall back to default double buffering

    assert features.shape == (BATCH, feature_dim)
    assert features.dtype == jnp.bfloat16

    # Correctness vs. pure-JAX f32 reference (bf16 gather/matmul/output -> loose tol).
    embeds = embedder(params, contexts, left_spc_masks, right_spc_masks)
    ref = conv_layer_reference(embeds, params["conv_ws"], params["conv_bs"])
    got = features.astype(jnp.float32)
    if not jnp.allclose(got, ref, atol=3e-2, rtol=3e-2):
        raise AssertionError(
            f"mismatch vs reference, max abs err {jnp.max(jnp.abs(got - ref))}")

    print("KERNEL_OK")
</pallas_src>

<mosaic_0001>
module attributes {stable_mosaic.version = 11 : i64} {
  func.func @fused_conv_kernel(%arg0: i32, %arg1: memref<16x7xi32, #tpu.memory_space<vmem>>, %arg2: memref<16x7xi32, #tpu.memory_space<vmem>>, %arg3: memref<16x7xi32, #tpu.memory_space<vmem>>, %arg4: memref<64x32xbf16, #tpu.memory_space<vmem>>, %arg5: memref<2x32xf32, #tpu.memory_space<vmem>>, %arg6: memref<224x768xbf16, #tpu.memory_space<vmem>>, %arg7: memref<1x768xf32, #tpu.memory_space<vmem>>, %arg8: memref<16x128xbf16, #tpu.memory_space<vmem>>) attributes {dimension_semantics = [#tpu.dimension_semantics<parallel>], iteration_bounds = array<i64: 2>, scalar_prefetch = 0 : i64, scratch_operands = 0 : i64, tpu.core_type = #tpu.core_type<tc>, window_params = [{transform_indices = @transform_0, window_bounds = array<i64: 16, 7>}, {transform_indices = @transform_1, window_bounds = array<i64: 16, 7>}, {transform_indices = @transform_2, window_bounds = array<i64: 16, 7>}, {pipeline_mode = #tpu.pipeline_mode<synchronous>, transform_indices = @transform_3, window_bounds = array<i64: 64, 32>}, {pipeline_mode = #tpu.pipeline_mode<synchronous>, transform_indices = @transform_4, window_bounds = array<i64: 2, 32>}, {pipeline_mode = #tpu.pipeline_mode<synchronous>, transform_indices = @transform_5, window_bounds = array<i64: 224, 768>}, {pipeline_mode = #tpu.pipeline_mode<synchronous>, transform_indices = @transform_6, window_bounds = array<i64: 1, 768>}, {transform_indices = @transform_7, window_bounds = array<i64: 16, 128>}]} {
    %0 = tpu.iota {dimensions = array<i32: 1>} : vector<16x64xi32>
    %c0 = arith.constant 0 : index
    %c0_0 = arith.constant 0 : index
    %1 = vector.load %arg5[%c0, %c0_0] : memref<2x32xf32, #tpu.memory_space<vmem>>, vector<1x32xf32>
    %c1 = arith.constant 1 : index
    %c0_1 = arith.constant 0 : index
    %2 = vector.load %arg5[%c1, %c0_1] : memref<2x32xf32, #tpu.memory_space<vmem>>, vector<1x32xf32>
    %cst = arith.constant 0.000000e+00 : f32
    %3 = vector.broadcast %cst : f32 to vector<16x768xf32>
    %c0_2 = arith.constant 0 : index
    %c0_3 = arith.constant 0 : index
    %4 = vector.load %arg1[%c0_2, %c0_3] : memref<16x7xi32, #tpu.memory_space<vmem>>, vector<16x1xi32>
    %5 = vector.broadcast %4 : vector<16x1xi32> to vector<16x64xi32>
    %6 = arith.cmpi eq, %5, %0 : vector<16x64xi32>
    %cst_4 = arith.constant 1.000000e+00 : f32
    %cst_5 = arith.constant 0.000000e+00 : f32
    %7 = vector.broadcast %cst_4 : f32 to vector<16x64xf32>
    %8 = vector.broadcast %cst_5 : f32 to vector<16x64xf32>
    %9 = arith.select %6, %7, %8 : vector<16x64xi1>, vector<16x64xf32>
    %10 = arith.truncf %9 : vector<16x64xf32> to vector<16x64xbf16>
    %c0_6 = arith.constant 0 : index
    %c0_7 = arith.constant 0 : index
    %11 = vector.load %arg4[%c0_6, %c0_7] : memref<64x32xbf16, #tpu.memory_space<vmem>>, vector<64x32xbf16>
    %cst_8 = arith.constant dense<0.000000e+00> : vector<16x32xf32>
    %12 = tpu.matmul %10, %11, %cst_8 {dimension_numbers = #tpu.dot_dimension_numbers<[1], [0], [0], [1], [0, 0, 1, 1], [], []>} : vector<16x64xbf16>, vector<64x32xbf16>, vector<16x32xf32> -> vector<16x32xf32>
    %c0_9 = arith.constant 0 : index
    %c0_10 = arith.constant 0 : index
    %13 = vector.load %arg2[%c0_9, %c0_10] : memref<16x7xi32, #tpu.memory_space<vmem>>, vector<16x1xi32>
    %14 = arith.sitofp %13 : vector<16x1xi32> to vector<16x1xf32>
    %c0_11 = arith.constant 0 : index
    %c0_12 = arith.constant 0 : index
    %15 = vector.load %arg3[%c0_11, %c0_12] : memref<16x7xi32, #tpu.memory_space<vmem>>, vector<16x1xi32>
    %16 = arith.sitofp %15 : vector<16x1xi32> to vector<16x1xf32>
    %17 = vector.broadcast %14 : vector<16x1xf32> to vector<16x32xf32>
    %18 = vector.broadcast %1 : vector<1x32xf32> to vector<16x32xf32>
    %19 = arith.mulf %17, %18 : vector<16x32xf32>
    %20 = arith.addf %12, %19 : vector<16x32xf32>
    %21 = vector.broadcast %16 : vector<16x1xf32> to vector<16x32xf32>
    %22 = vector.broadcast %2 : vector<1x32xf32> to vector<16x32xf32>
    %23 = arith.mulf %21, %22 : vector<16x32xf32>
    %24 = arith.addf %20, %23 : vector<16x32xf32>
    %25 = arith.truncf %24 : vector<16x32xf32> to vector<16x32xbf16>
    %c0_13 = arith.constant 0 : index
    %c0_14 = arith.constant 0 : index
    %26 = vector.load %arg6[%c0_13, %c0_14] : memref<224x768xbf16, #tpu.memory_space<vmem>>, vector<32x768xbf16>
    %cst_15 = arith.constant dense<0.000000e+00> : vector<16x768xf32>
    %27 = tpu.matmul %25, %26, %cst_15 {dimension_numbers = #tpu.dot_dimension_numbers<[1], [0], [0], [1], [0, 0, 1, 1], [], []>} : vector<16x32xbf16>, vector<32x768xbf16>, vector<16x768xf32> -> vector<16x768xf32>
    %28 = arith.addf %3, %27 : vector<16x768xf32>
    %c0_16 = arith.constant 0 : index
    %c1_17 = arith.constant 1 : index
    %29 = vector.load %arg1[%c0_16, %c1_17] : memref<16x7xi32, #tpu.memory_space<vmem>>, vector<16x1xi32>
    %30 = vector.broadcast %29 : vector<16x1xi32> to vector<16x64xi32>
    %31 = arith.cmpi eq, %30, %0 : vector<16x64xi32>
    %cst_18 = arith.constant 1.000000e+00 : f32
    %cst_19 = arith.constant 0.000000e+00 : f32
    %32 = vector.broadcast %cst_18 : f32 to vector<16x64xf32>
    %33 = vector.broadcast %cst_19 : f32 to vector<16x64xf32>
    %34 = arith.select %31, %32, %33 : vector<16x64xi1>, vector<16x64xf32>
    %35 = arith.truncf %34 : vector<16x64xf32> to vector<16x64xbf16>
    %c0_20 = arith.constant 0 : index
    %c0_21 = arith.constant 0 : index
    %36 = vector.load %arg4[%c0_20, %c0_21] : memref<64x32xbf16, #tpu.memory_space<vmem>>, vector<64x32xbf16>
    %cst_22 = arith.constant dense<0.000000e+00> : vector<16x32xf32>
    %37 = tpu.matmul %35, %36, %cst_22 {dimension_numbers = #tpu.dot_dimension_numbers<[1], [0], [0], [1], [0, 0, 1, 1], [], []>} : vector<16x64xbf16>, vector<64x32xbf16>, vector<16x32xf32> -> vector<16x32xf32>
    %c0_23 = arith.constant 0 : index
    %c1_24 = arith.constant 1 : index
    %38 = vector.load %arg2[%c0_23, %c1_24] : memref<16x7xi32, #tpu.memory_space<vmem>>, vector<16x1xi32>
    %39 = arith.sitofp %38 : vector<16x1xi32> to vector<16x1xf32>
    %c0_25 = arith.constant 0 : index
    %c1_26 = arith.constant 1 : index
    %40 = vector.load %arg3[%c0_25, %c1_26] : memref<16x7xi32, #tpu.memory_space<vmem>>, vector<16x1xi32>
    %41 = arith.sitofp %40 : vector<16x1xi32> to vector<16x1xf32>
    %42 = vector.broadcast %39 : vector<16x1xf32> to vector<16x32xf32>
    %43 = vector.broadcast %1 : vector<1x32xf32> to vector<16x32xf32>
    %44 = arith.mulf %42, %43 : vector<16x32xf32>
    %45 = arith.addf %37, %44 : vector<16x32xf32>
    %46 = vector.broadcast %41 : vector<16x1xf32> to vector<16x32xf32>
    %47 = vector.broadcast %2 : vector<1x32xf32> to vector<16x32xf32>
    %48 = arith.mulf %46, %47 : vector<16x32xf32>
    %49 = arith.addf %45, %48 : vector<16x32xf32>
    %50 = arith.truncf %49 : vector<16x32xf32> to vector<16x32xbf16>
    %c32 = arith.constant 32 : index
    %c0_27 = arith.constant 0 : index
    %51 = vector.load %arg6[%c32, %c0_27] : memref<224x768xbf16, #tpu.memory_space<vmem>>, vector<32x768xbf16>
    %cst_28 = arith.constant dense<0.000000e+00> : vector<16x768xf32>
    %52 = tpu.matmul %50, %51, %cst_28 {dimension_numbers = #tpu.dot_dimension_numbers<[1], [0], [0], [1], [0, 0, 1, 1], [], []>} : vector<16x32xbf16>, vector<32x768xbf16>, vector<16x768xf32> -> vector<16x768xf32>
    %53 = arith.addf %28, %52 : vector<16x768xf32>
    %c0_29 = arith.constant 0 : index
    %c2 = arith.constant 2 : index
    %54 = vector.load %arg1[%c0_29, %c2] : memref<16x7xi32, #tpu.memory_space<vmem>>, vector<16x1xi32>
    %55 = vector.broadcast %54 : vector<16x1xi32> to vector<16x64xi32>
    %56 = arith.cmpi eq, %55, %0 : vector<16x64xi32>
    %cst_30 = arith.constant 1.000000e+00 : f32
    %cst_31 = arith.constant 0.000000e+00 : f32
    %57 = vector.broadcast %cst_30 : f32 to vector<16x64xf32>
    %58 = vector.broadcast %cst_31 : f32 to vector<16x64xf32>
    %59 = arith.select %56, %57, %58 : vector<16x64xi1>, vector<16x64xf32>
    %60 = arith.truncf %59 : vector<16x64xf32> to vector<16x64xbf16>
    %c0_32 = arith.constant 0 : index
    %c0_33 = arith.constant 0 : index
    %61 = vector.load %arg4[%c0_32, %c0_33] : memref<64x32xbf16, #tpu.memory_space<vmem>>, vector<64x32xbf16>
    %cst_34 = arith.constant dense<0.000000e+00> : vector<16x32xf32>
    %62 = tpu.matmul %60, %61, %cst_34 {dimension_numbers = #tpu.dot_dimension_numbers<[1], [0], [0], [1], [0, 0, 1, 1], [], []>} : vector<16x64xbf16>, vector<64x32xbf16>, vector<16x32xf32> -> vector<16x32xf32>
    %c0_35 = arith.constant 0 : index
    %c2_36 = arith.constant 2 : index
    %63 = vector.load %arg2[%c0_35, %c2_36] : memref<16x7xi32, #tpu.memory_space<vmem>>, vector<16x1xi32>
    %64 = arith.sitofp %63 : vector<16x1xi32> to vector<16x1xf32>
    %c0_37 = arith.constant 0 : index
    %c2_38 = arith.constant 2 : index
    %65 = vector.load %arg3[%c0_37, %c2_38] : memref<16x7xi32, #tpu.memory_space<vmem>>, vector<16x1xi32>
    %66 = arith.sitofp %65 : vector<16x1xi32> to vector<16x1xf32>
    %67 = vector.broadcast %64 : vector<16x1xf32> to vector<16x32xf32>
    %68 = vector.broadcast %1 : vector<1x32xf32> to vector<16x32xf32>
    %69 = arith.mulf %67, %68 : vector<16x32xf32>
    %70 = arith.addf %62, %69 : vector<16x32xf32>
    %71 = vector.broadcast %66 : vector<16x1xf32> to vector<16x32xf32>
    %72 = vector.broadcast %2 : vector<1x32xf32> to vector<16x32xf32>
    %73 = arith.mulf %71, %72 : vector<16x32xf32>
    %74 = arith.addf %70, %73 : vector<16x32xf32>
    %75 = arith.truncf %74 : vector<16x32xf32> to vector<16x32xbf16>
    %c64 = arith.constant 64 : index
    %c0_39 = arith.constant 0 : index
    %76 = vector.load %arg6[%c64, %c0_39] : memref<224x768xbf16, #tpu.memory_space<vmem>>, vector<32x768xbf16>
    %cst_40 = arith.constant dense<0.000000e+00> : vector<16x768xf32>
    %77 = tpu.matmul %75, %76, %cst_40 {dimension_numbers = #tpu.dot_dimension_numbers<[1], [0], [0], [1], [0, 0, 1, 1], [], []>} : vector<16x32xbf16>, vector<32x768xbf16>, vector<16x768xf32> -> vector<16x768xf32>
    %78 = arith.addf %53, %77 : vector<16x768xf32>
    %c0_41 = arith.constant 0 : index
    %c3 = arith.constant 3 : index
    %79 = vector.load %arg1[%c0_41, %c3] : memref<16x7xi32, #tpu.memory_space<vmem>>, vector<16x1xi32>
    %80 = vector.broadcast %79 : vector<16x1xi32> to vector<16x64xi32>
    %81 = arith.cmpi eq, %80, %0 : vector<16x64xi32>
    %cst_42 = arith.constant 1.000000e+00 : f32
    %cst_43 = arith.constant 0.000000e+00 : f32
    %82 = vector.broadcast %cst_42 : f32 to vector<16x64xf32>
    %83 = vector.broadcast %cst_43 : f32 to vector<16x64xf32>
    %84 = arith.select %81, %82, %83 : vector<16x64xi1>, vector<16x64xf32>
    %85 = arith.truncf %84 : vector<16x64xf32> to vector<16x64xbf16>
    %c0_44 = arith.constant 0 : index
    %c0_45 = arith.constant 0 : index
    %86 = vector.load %arg4[%c0_44, %c0_45] : memref<64x32xbf16, #tpu.memory_space<vmem>>, vector<64x32xbf16>
    %cst_46 = arith.constant dense<0.000000e+00> : vector<16x32xf32>
    %87 = tpu.matmul %85, %86, %cst_46 {dimension_numbers = #tpu.dot_dimension_numbers<[1], [0], [0], [1], [0, 0, 1, 1], [], []>} : vector<16x64xbf16>, vector<64x32xbf16>, vector<16x32xf32> -> vector<16x32xf32>
    %c0_47 = arith.constant 0 : index
    %c3_48 = arith.constant 3 : index
    %88 = vector.load %arg2[%c0_47, %c3_48] : memref<16x7xi32, #tpu.memory_space<vmem>>, vector<16x1xi32>
    %89 = arith.sitofp %88 : vector<16x1xi32> to vector<16x1xf32>
    %c0_49 = arith.constant 0 : index
    %c3_50 = arith.constant 3 : index
    %90 = vector.load %arg3[%c0_49, %c3_50] : memref<16x7xi32, #tpu.memory_space<vmem>>, vector<16x1xi32>
    %91 = arith.sitofp %90 : vector<16x1xi32> to vector<16x1xf32>
    %92 = vector.broadcast %89 : vector<16x1xf32> to vector<16x32xf32>
    %93 = vector.broadcast %1 : vector<1x32xf32> to vector<16x32xf32>
    %94 = arith.mulf %92, %93 : vector<16x32xf32>
    %95 = arith.addf %87, %94 : vector<16x32xf32>
    %96 = vector.broadcast %91 : vector<16x1xf32> to vector<16x32xf32>
    %97 = vector.broadcast %2 : vector<1x32xf32> to vector<16x32xf32>
    %98 = arith.mulf %96, %97 : vector<16x32xf32>
    %99 = arith.addf %95, %98 : vector<16x32xf32>
    %100 = arith.truncf %99 : vector<16x32xf32> to vector<16x32xbf16>
    %c96 = arith.constant 96 : index
    %c0_51 = arith.constant 0 : index
    %101 = vector.load %arg6[%c96, %c0_51] : memref<224x768xbf16, #tpu.memory_space<vmem>>, vector<32x768xbf16>
    %cst_52 = arith.constant dense<0.000000e+00> : vector<16x768xf32>
    %102 = tpu.matmul %100, %101, %cst_52 {dimension_numbers = #tpu.dot_dimension_numbers<[1], [0], [0], [1], [0, 0, 1, 1], [], []>} : vector<16x32xbf16>, vector<32x768xbf16>, vector<16x768xf32> -> vector<16x768xf32>
    %103 = arith.addf %78, %102 : vector<16x768xf32>
    %c0_53 = arith.constant 0 : index
    %c4 = arith.constant 4 : index
    %104 = vector.load %arg1[%c0_53, %c4] : memref<16x7xi32, #tpu.memory_space<vmem>>, vector<16x1xi32>
    %105 = vector.broadcast %104 : vector<16x1xi32> to vector<16x64xi32>
    %106 = arith.cmpi eq, %105, %0 : vector<16x64xi32>
    %cst_54 = arith.constant 1.000000e+00 : f32
    %cst_55 = arith.constant 0.000000e+00 : f32
    %107 = vector.broadcast %cst_54 : f32 to vector<16x64xf32>
    %108 = vector.broadcast %cst_55 : f32 to vector<16x64xf32>
    %109 = arith.select %106, %107, %108 : vector<16x64xi1>, vector<16x64xf32>
    %110 = arith.truncf %109 : vector<16x64xf32> to vector<16x64xbf16>
    %c0_56 = arith.constant 0 : index
    %c0_57 = arith.constant 0 : index
    %111 = vector.load %arg4[%c0_56, %c0_57] : memref<64x32xbf16, #tpu.memory_space<vmem>>, vector<64x32xbf16>
    %cst_58 = arith.constant dense<0.000000e+00> : vector<16x32xf32>
    %112 = tpu.matmul %110, %111, %cst_58 {dimension_numbers = #tpu.dot_dimension_numbers<[1], [0], [0], [1], [0, 0, 1, 1], [], []>} : vector<16x64xbf16>, vector<64x32xbf16>, vector<16x32xf32> -> vector<16x32xf32>
    %c0_59 = arith.constant 0 : index
    %c4_60 = arith.constant 4 : index
    %113 = vector.load %arg2[%c0_59, %c4_60] : memref<16x7xi32, #tpu.memory_space<vmem>>, vector<16x1xi32>
    %114 = arith.sitofp %113 : vector<16x1xi32> to vector<16x1xf32>
    %c0_61 = arith.constant 0 : index
    %c4_62 = arith.constant 4 : index
    %115 = vector.load %arg3[%c0_61, %c4_62] : memref<16x7xi32, #tpu.memory_space<vmem>>, vector<16x1xi32>
    %116 = arith.sitofp %115 : vector<16x1xi32> to vector<16x1xf32>
    %117 = vector.broadcast %114 : vector<16x1xf32> to vector<16x32xf32>
    %118 = vector.broadcast %1 : vector<1x32xf32> to vector<16x32xf32>
    %119 = arith.mulf %117, %118 : vector<16x32xf32>
    %120 = arith.addf %112, %119 : vector<16x32xf32>
    %121 = vector.broadcast %116 : vector<16x1xf32> to vector<16x32xf32>
    %122 = vector.broadcast %2 : vector<1x32xf32> to vector<16x32xf32>
    %123 = arith.mulf %121, %122 : vector<16x32xf32>
    %124 = arith.addf %120, %123 : vector<16x32xf32>
    %125 = arith.truncf %124 : vector<16x32xf32> to vector<16x32xbf16>
    %c128 = arith.constant 128 : index
    %c0_63 = arith.constant 0 : index
    %126 = vector.load %arg6[%c128, %c0_63] : memref<224x768xbf16, #tpu.memory_space<vmem>>, vector<32x768xbf16>
    %cst_64 = arith.constant dense<0.000000e+00> : vector<16x768xf32>
    %127 = tpu.matmul %125, %126, %cst_64 {dimension_numbers = #tpu.dot_dimension_numbers<[1], [0], [0], [1], [0, 0, 1, 1], [], []>} : vector<16x32xbf16>, vector<32x768xbf16>, vector<16x768xf32> -> vector<16x768xf32>
    %128 = arith.addf %103, %127 : vector<16x768xf32>
    %c0_65 = arith.constant 0 : index
    %c5 = arith.constant 5 : index
    %129 = vector.load %arg1[%c0_65, %c5] : memref<16x7xi32, #tpu.memory_space<vmem>>, vector<16x1xi32>
    %130 = vector.broadcast %129 : vector<16x1xi32> to vector<16x64xi32>
    %131 = arith.cmpi eq, %130, %0 : vector<16x64xi32>
    %cst_66 = arith.constant 1.000000e+00 : f32
    %cst_67 = arith.constant 0.000000e+00 : f32
    %132 = vector.broadcast %cst_66 : f32 to vector<16x64xf32>
    %133 = vector.broadcast %cst_67 : f32 to vector<16x64xf32>
    %134 = arith.select %131, %132, %133 : vector<16x64xi1>, vector<16x64xf32>
    %135 = arith.truncf %134 : vector<16x64xf32> to vector<16x64xbf16>
    %c0_68 = arith.constant 0 : index
    %c0_69 = arith.constant 0 : index
    %136 = vector.load %arg4[%c0_68, %c0_69] : memref<64x32xbf16, #tpu.memory_space<vmem>>, vector<64x32xbf16>
    %cst_70 = arith.constant dense<0.000000e+00> : vector<16x32xf32>
    %137 = tpu.matmul %135, %136, %cst_70 {dimension_numbers = #tpu.dot_dimension_numbers<[1], [0], [0], [1], [0, 0, 1, 1], [], []>} : vector<16x64xbf16>, vector<64x32xbf16>, vector<16x32xf32> -> vector<16x32xf32>
    %c0_71 = arith.constant 0 : index
    %c5_72 = arith.constant 5 : index
    %138 = vector.load %arg2[%c0_71, %c5_72] : memref<16x7xi32, #tpu.memory_space<vmem>>, vector<16x1xi32>
    %139 = arith.sitofp %138 : vector<16x1xi32> to vector<16x1xf32>
    %c0_73 = arith.constant 0 : index
    %c5_74 = arith.constant 5 : index
    %140 = vector.load %arg3[%c0_73, %c5_74] : memref<16x7xi32, #tpu.memory_space<vmem>>, vector<16x1xi32>
    %141 = arith.sitofp %140 : vector<16x1xi32> to vector<16x1xf32>
    %142 = vector.broadcast %139 : vector<16x1xf32> to vector<16x32xf32>
    %143 = vector.broadcast %1 : vector<1x32xf32> to vector<16x32xf32>
    %144 = arith.mulf %142, %143 : vector<16x32xf32>
    %145 = arith.addf %137, %144 : vector<16x32xf32>
    %146 = vector.broadcast %141 : vector<16x1xf32> to vector<16x32xf32>
    %147 = vector.broadcast %2 : vector<1x32xf32> to vector<16x32xf32>
    %148 = arith.mulf %146, %147 : vector<16x32xf32>
    %149 = arith.addf %145, %148 : vector<16x32xf32>
    %150 = arith.truncf %149 : vector<16x32xf32> to vector<16x32xbf16>
    %c160 = arith.constant 160 : index
    %c0_75 = arith.constant 0 : index
    %151 = vector.load %arg6[%c160, %c0_75] : memref<224x768xbf16, #tpu.memory_space<vmem>>, vector<32x768xbf16>
    %cst_76 = arith.constant dense<0.000000e+00> : vector<16x768xf32>
    %152 = tpu.matmul %150, %151, %cst_76 {dimension_numbers = #tpu.dot_dimension_numbers<[1], [0], [0], [1], [0, 0, 1, 1], [], []>} : vector<16x32xbf16>, vector<32x768xbf16>, vector<16x768xf32> -> vector<16x768xf32>
    %153 = arith.addf %128, %152 : vector<16x768xf32>
    %c0_77 = arith.constant 0 : index
    %c6 = arith.constant 6 : index
    %154 = vector.load %arg1[%c0_77, %c6] : memref<16x7xi32, #tpu.memory_space<vmem>>, vector<16x1xi32>
    %155 = vector.broadcast %154 : vector<16x1xi32> to vector<16x64xi32>
    %156 = arith.cmpi eq, %155, %0 : vector<16x64xi32>
    %cst_78 = arith.constant 1.000000e+00 : f32
    %cst_79 = arith.constant 0.000000e+00 : f32
    %157 = vector.broadcast %cst_78 : f32 to vector<16x64xf32>
    %158 = vector.broadcast %cst_79 : f32 to vector<16x64xf32>
    %159 = arith.select %156, %157, %158 : vector<16x64xi1>, vector<16x64xf32>
    %160 = arith.truncf %159 : vector<16x64xf32> to vector<16x64xbf16>
    %c0_80 = arith.constant 0 : index
    %c0_81 = arith.constant 0 : index
    %161 = vector.load %arg4[%c0_80, %c0_81] : memref<64x32xbf16, #tpu.memory_space<vmem>>, vector<64x32xbf16>
    %cst_82 = arith.constant dense<0.000000e+00> : vector<16x32xf32>
    %162 = tpu.matmul %160, %161, %cst_82 {dimension_numbers = #tpu.dot_dimension_numbers<[1], [0], [0], [1], [0, 0, 1, 1], [], []>} : vector<16x64xbf16>, vector<64x32xbf16>, vector<16x32xf32> -> vector<16x32xf32>
    %c0_83 = arith.constant 0 : index
    %c6_84 = arith.constant 6 : index
    %163 = vector.load %arg2[%c0_83, %c6_84] : memref<16x7xi32, #tpu.memory_space<vmem>>, vector<16x1xi32>
    %164 = arith.sitofp %163 : vector<16x1xi32> to vector<16x1xf32>
    %c0_85 = arith.constant 0 : index
    %c6_86 = arith.constant 6 : index
    %165 = vector.load %arg3[%c0_85, %c6_86] : memref<16x7xi32, #tpu.memory_space<vmem>>, vector<16x1xi32>
    %166 = arith.sitofp %165 : vector<16x1xi32> to vector<16x1xf32>
    %167 = vector.broadcast %164 : vector<16x1xf32> to vector<16x32xf32>
    %168 = vector.broadcast %1 : vector<1x32xf32> to vector<16x32xf32>
    %169 = arith.mulf %167, %168 : vector<16x32xf32>
    %170 = arith.addf %162, %169 : vector<16x32xf32>
    %171 = vector.broadcast %166 : vector<16x1xf32> to vector<16x32xf32>
    %172 = vector.broadcast %2 : vector<1x32xf32> to vector<16x32xf32>
    %173 = arith.mulf %171, %172 : vector<16x32xf32>
    %174 = arith.addf %170, %173 : vector<16x32xf32>
    %175 = arith.truncf %174 : vector<16x32xf32> to vector<16x32xbf16>
    %c192 = arith.constant 192 : index
    %c0_87 = arith.constant 0 : index
    %176 = vector.load %arg6[%c192, %c0_87] : memref<224x768xbf16, #tpu.memory_space<vmem>>, vector<32x768xbf16>
    %cst_88 = arith.constant dense<0.000000e+00> : vector<16x768xf32>
    %177 = tpu.matmul %175, %176, %cst_88 {dimension_numbers = #tpu.dot_dimension_numbers<[1], [0], [0], [1], [0, 0, 1, 1], [], []>} : vector<16x32xbf16>, vector<32x768xbf16>, vector<16x768xf32> -> vector<16x768xf32>
    %178 = arith.addf %153, %177 : vector<16x768xf32>
    %c0_89 = arith.constant 0 : index
    %c0_90 = arith.constant 0 : index
    %179 = vector.load %arg7[%c0_89, %c0_90] : memref<1x768xf32, #tpu.memory_space<vmem>>, vector<1x768xf32>
    %180 = vector.broadcast %179 : vector<1x768xf32> to vector<16x768xf32>
    %181 = arith.addf %178, %180 : vector<16x768xf32>
    %cst_91 = arith.constant 0.000000e+00 : f32
    %182 = vector.broadcast %cst_91 : f32 to vector<16x768xf32>
    %183 = arith.maximumf %181, %182 : vector<16x768xf32>
    %184 = vector.extract_strided_slice %183 {offsets = [0, 0], sizes = [16, 128], strides = [1, 1]} : vector<16x768xf32> to vector<16x128xf32>
    %185 = vector.extract_strided_slice %183 {offsets = [0, 128], sizes = [16, 128], strides = [1, 1]} : vector<16x768xf32> to vector<16x128xf32>
    %186 = arith.maximumf %184, %185 : vector<16x128xf32>
    %187 = vector.extract_strided_slice %183 {offsets = [0, 256], sizes = [16, 128], strides = [1, 1]} : vector<16x768xf32> to vector<16x128xf32>
    %188 = arith.maximumf %186, %187 : vector<16x128xf32>
    %189 = vector.extract_strided_slice %183 {offsets = [0, 384], sizes = [16, 128], strides = [1, 1]} : vector<16x768xf32> to vector<16x128xf32>
    %190 = arith.maximumf %188, %189 : vector<16x128xf32>
    %191 = vector.extract_strided_slice %183 {offsets = [0, 512], sizes = [16, 128], strides = [1, 1]} : vector<16x768xf32> to vector<16x128xf32>
    %192 = arith.maximumf %190, %191 : vector<16x128xf32>
    %193 = vector.extract_strided_slice %183 {offsets = [0, 640], sizes = [16, 128], strides = [1, 1]} : vector<16x768xf32> to vector<16x128xf32>
    %194 = arith.maximumf %192, %193 : vector<16x128xf32>
    %195 = arith.truncf %194 : vector<16x128xf32> to vector<16x128xbf16>
    %c0_92 = arith.constant 0 : index
    %c0_93 = arith.constant 0 : index
    %196 = vector.load %arg8[%c0_92, %c0_93] : memref<16x128xbf16, #tpu.memory_space<vmem>>, vector<16x128xbf16>
    tpu.vector_store %arg8[%c0_92, %c0_93], %195 {strides = array<i32>} : memref<16x128xbf16, #tpu.memory_space<vmem>>, vector<16x128xbf16>,
    return
  }
  func.func @transform_0(%arg0: i32) -> (i32, i32) {
    %c0_i32 = arith.constant 0 : i32
    %c0_i32_0 = arith.constant 0 : i32
    return %arg0, %c0_i32 : i32, i32
  }
  func.func @transform_1(%arg0: i32) -> (i32, i32) {
    %c0_i32 = arith.constant 0 : i32
    %c0_i32_0 = arith.constant 0 : i32
    return %arg0, %c0_i32 : i32, i32
  }
  func.func @transform_2(%arg0: i32) -> (i32, i32) {
    %c0_i32 = arith.constant 0 : i32
    %c0_i32_0 = arith.constant 0 : i32
    return %arg0, %c0_i32 : i32, i32
  }
  func.func @transform_3(%arg0: i32) -> (i32, i32) {
    %c0_i32 = arith.constant 0 : i32
    %c0_i32_0 = arith.constant 0 : i32
    %c0_i32_1 = arith.constant 0 : i32
    return %c0_i32, %c0_i32_0 : i32, i32
  }
  func.func @transform_4(%arg0: i32) -> (i32, i32) {
    %c0_i32 = arith.constant 0 : i32
    %c0_i32_0 = arith.constant 0 : i32
    %c0_i32_1 = arith.constant 0 : i32
    return %c0_i32, %c0_i32_0 : i32, i32
  }
  func.func @transform_5(%arg0: i32) -> (i32, i32) {
    %c0_i32 = arith.constant 0 : i32
    %c0_i32_0 = arith.constant 0 : i32
    %c0_i32_1 = arith.constant 0 : i32
    return %c0_i32, %c0_i32_0 : i32, i32
  }
  func.func @transform_6(%arg0: i32) -> (i32, i32) {
    %c0_i32 = arith.constant 0 : i32
    %c0_i32_0 = arith.constant 0 : i32
    %c0_i32_1 = arith.constant 0 : i32
    return %c0_i32, %c0_i32_0 : i32, i32
  }
  func.func @transform_7(%arg0: i32) -> (i32, i32) {
    %c0_i32 = arith.constant 0 : i32
    %c0_i32_0 = arith.constant 0 : i32
    return %arg0, %c0_i32 : i32, i32
  }
}

module attributes {stable_mosaic.version = 11 : i64} {
  func.func @fused_conv_kernel(%arg0: i32, %arg1: memref<16x7xi32, #tpu.memory_space<vmem>>, %arg2: memref<16x7xi32, #tpu.memory_space<vmem>>, %arg3: memref<16x7xi32, #tpu.memory_space<vmem>>, %arg4: memref<64x32xbf16, #tpu.memory_space<vmem>>, %arg5: memref<2x32xf32, #tpu.memory_space<vmem>>, %arg6: memref<224x768xbf16, #tpu.memory_space<vmem>>, %arg7: memref<1x768xf32, #tpu.memory_space<vmem>>, %arg8: memref<16x128xbf16, #tpu.memory_space<vmem>>) attributes {dimension_semantics = [#tpu.dimension_semantics<parallel>], iteration_bounds = array<i64: 2>, scalar_prefetch = 0 : i64, scratch_operands = 0 : i64, tpu.core_type = #tpu.core_type<tc>, window_params = [{transform_indices = @transform_0, window_bounds = array<i64: 16, 7>}, {transform_indices = @transform_1, window_bounds = array<i64: 16, 7>}, {transform_indices = @transform_2, window_bounds = array<i64: 16, 7>}, {pipeline_mode = #tpu.pipeline_mode<synchronous>, transform_indices = @transform_3, window_bounds = array<i64: 64, 32>}, {pipeline_mode = #tpu.pipeline_mode<synchronous>, transform_indices = @transform_4, window_bounds = array<i64: 2, 32>}, {pipeline_mode = #tpu.pipeline_mode<synchronous>, transform_indices = @transform_5, window_bounds = array<i64: 224, 768>}, {pipeline_mode = #tpu.pipeline_mode<synchronous>, transform_indices = @transform_6, window_bounds = array<i64: 1, 768>}, {transform_indices = @transform_7, window_bounds = array<i64: 16, 128>}]} {
    %0 = tpu.iota {dimensions = array<i32: 1>} : vector<16x64xi32>
    %c0 = arith.constant 0 : index
    %c0_0 = arith.constant 0 : index
    %1 = vector.load %arg5[%c0, %c0_0] : memref<2x32xf32, #tpu.memory_space<vmem>>, vector<1x32xf32>
    %c1 = arith.constant 1 : index
    %c0_1 = arith.constant 0 : index
    %2 = vector.load %arg5[%c1, %c0_1] : memref<2x32xf32, #tpu.memory_space<vmem>>, vector<1x32xf32>
    %cst = arith.constant 0.000000e+00 : f32
    %3 = vector.broadcast %cst : f32 to vector<16x768xf32>
    %c0_2 = arith.constant 0 : index
    %c0_3 = arith.constant 0 : index
    %4 = vector.load %arg1[%c0_2, %c0_3] : memref<16x7xi32, #tpu.memory_space<vmem>>, vector<16x1xi32>
    %5 = vector.broadcast %4 : vector<16x1xi32> to vector<16x64xi32>
    %6 = arith.cmpi eq, %5, %0 : vector<16x64xi32>
    %cst_4 = arith.constant 1.000000e+00 : f32
    %cst_5 = arith.constant 0.000000e+00 : f32
    %7 = vector.broadcast %cst_4 : f32 to vector<16x64xf32>
    %8 = vector.broadcast %cst_5 : f32 to vector<16x64xf32>
    %9 = arith.select %6, %7, %8 : vector<16x64xi1>, vector<16x64xf32>
    %10 = arith.truncf %9 : vector<16x64xf32> to vector<16x64xbf16>
    %c0_6 = arith.constant 0 : index
    %c0_7 = arith.constant 0 : index
    %11 = vector.load %arg4[%c0_6, %c0_7] : memref<64x32xbf16, #tpu.memory_space<vmem>>, vector<64x32xbf16>
    %cst_8 = arith.constant dense<0.000000e+00> : vector<16x32xf32>
    %12 = tpu.matmul %10, %11, %cst_8 {dimension_numbers = #tpu.dot_dimension_numbers<[1], [0], [0], [1], [0, 0, 1, 1], [], []>} : vector<16x64xbf16>, vector<64x32xbf16>, vector<16x32xf32> -> vector<16x32xf32>
    %c0_9 = arith.constant 0 : index
    %c0_10 = arith.constant 0 : index
    %13 = vector.load %arg2[%c0_9, %c0_10] : memref<16x7xi32, #tpu.memory_space<vmem>>, vector<16x1xi32>
    %14 = arith.sitofp %13 : vector<16x1xi32> to vector<16x1xf32>
    %c0_11 = arith.constant 0 : index
    %c0_12 = arith.constant 0 : index
    %15 = vector.load %arg3[%c0_11, %c0_12] : memref<16x7xi32, #tpu.memory_space<vmem>>, vector<16x1xi32>
    %16 = arith.sitofp %15 : vector<16x1xi32> to vector<16x1xf32>
    %17 = vector.broadcast %14 : vector<16x1xf32> to vector<16x32xf32>
    %18 = vector.broadcast %1 : vector<1x32xf32> to vector<16x32xf32>
    %19 = arith.mulf %17, %18 : vector<16x32xf32>
    %20 = arith.addf %12, %19 : vector<16x32xf32>
    %21 = vector.broadcast %16 : vector<16x1xf32> to vector<16x32xf32>
    %22 = vector.broadcast %2 : vector<1x32xf32> to vector<16x32xf32>
    %23 = arith.mulf %21, %22 : vector<16x32xf32>
    %24 = arith.addf %20, %23 : vector<16x32xf32>
    %25 = arith.truncf %24 : vector<16x32xf32> to vector<16x32xbf16>
    %c0_13 = arith.constant 0 : index
    %c0_14 = arith.constant 0 : index
    %26 = vector.load %arg6[%c0_13, %c0_14] : memref<224x768xbf16, #tpu.memory_space<vmem>>, vector<32x768xbf16>
    %cst_15 = arith.constant dense<0.000000e+00> : vector<16x768xf32>
    %27 = tpu.matmul %25, %26, %cst_15 {dimension_numbers = #tpu.dot_dimension_numbers<[1], [0], [0], [1], [0, 0, 1, 1], [], []>} : vector<16x32xbf16>, vector<32x768xbf16>, vector<16x768xf32> -> vector<16x768xf32>
    %28 = arith.addf %3, %27 : vector<16x768xf32>
    %c0_16 = arith.constant 0 : index
    %c1_17 = arith.constant 1 : index
    %29 = vector.load %arg1[%c0_16, %c1_17] : memref<16x7xi32, #tpu.memory_space<vmem>>, vector<16x1xi32>
    %30 = vector.broadcast %29 : vector<16x1xi32> to vector<16x64xi32>
    %31 = arith.cmpi eq, %30, %0 : vector<16x64xi32>
    %cst_18 = arith.constant 1.000000e+00 : f32
    %cst_19 = arith.constant 0.000000e+00 : f32
    %32 = vector.broadcast %cst_18 : f32 to vector<16x64xf32>
    %33 = vector.broadcast %cst_19 : f32 to vector<16x64xf32>
    %34 = arith.select %31, %32, %33 : vector<16x64xi1>, vector<16x64xf32>
    %35 = arith.truncf %34 : vector<16x64xf32> to vector<16x64xbf16>
    %c0_20 = arith.constant 0 : index
    %c0_21 = arith.constant 0 : index
    %36 = vector.load %arg4[%c0_20, %c0_21] : memref<64x32xbf16, #tpu.memory_space<vmem>>, vector<64x32xbf16>
    %cst_22 = arith.constant dense<0.000000e+00> : vector<16x32xf32>
    %37 = tpu.matmul %35, %36, %cst_22 {dimension_numbers = #tpu.dot_dimension_numbers<[1], [0], [0], [1], [0, 0, 1, 1], [], []>} : vector<16x64xbf16>, vector<64x32xbf16>, vector<16x32xf32> -> vector<16x32xf32>
    %c0_23 = arith.constant 0 : index
    %c1_24 = arith.constant 1 : index
    %38 = vector.load %arg2[%c0_23, %c1_24] : memref<16x7xi32, #tpu.memory_space<vmem>>, vector<16x1xi32>
    %39 = arith.sitofp %38 : vector<16x1xi32> to vector<16x1xf32>
    %c0_25 = arith.constant 0 : index
    %c1_26 = arith.constant 1 : index
    %40 = vector.load %arg3[%c0_25, %c1_26] : memref<16x7xi32, #tpu.memory_space<vmem>>, vector<16x1xi32>
    %41 = arith.sitofp %40 : vector<16x1xi32> to vector<16x1xf32>
    %42 = vector.broadcast %39 : vector<16x1xf32> to vector<16x32xf32>
    %43 = vector.broadcast %1 : vector<1x32xf32> to vector<16x32xf32>
    %44 = arith.mulf %42, %43 : vector<16x32xf32>
    %45 = arith.addf %37, %44 : vector<16x32xf32>
    %46 = vector.broadcast %41 : vector<16x1xf32> to vector<16x32xf32>
    %47 = vector.broadcast %2 : vector<1x32xf32> to vector<16x32xf32>
    %48 = arith.mulf %46, %47 : vector<16x32xf32>
    %49 = arith.addf %45, %48 : vector<16x32xf32>
    %50 = arith.truncf %49 : vector<16x32xf32> to vector<16x32xbf16>
    %c32 = arith.constant 32 : index
    %c0_27 = arith.constant 0 : index
    %51 = vector.load %arg6[%c32, %c0_27] : memref<224x768xbf16, #tpu.memory_space<vmem>>, vector<32x768xbf16>
    %cst_28 = arith.constant dense<0.000000e+00> : vector<16x768xf32>
    %52 = tpu.matmul %50, %51, %cst_28 {dimension_numbers = #tpu.dot_dimension_numbers<[1], [0], [0], [1], [0, 0, 1, 1], [], []>} : vector<16x32xbf16>, vector<32x768xbf16>, vector<16x768xf32> -> vector<16x768xf32>
    %53 = arith.addf %28, %52 : vector<16x768xf32>
    %c0_29 = arith.constant 0 : index
    %c2 = arith.constant 2 : index
    %54 = vector.load %arg1[%c0_29, %c2] : memref<16x7xi32, #tpu.memory_space<vmem>>, vector<16x1xi32>
    %55 = vector.broadcast %54 : vector<16x1xi32> to vector<16x64xi32>
    %56 = arith.cmpi eq, %55, %0 : vector<16x64xi32>
    %cst_30 = arith.constant 1.000000e+00 : f32
    %cst_31 = arith.constant 0.000000e+00 : f32
    %57 = vector.broadcast %cst_30 : f32 to vector<16x64xf32>
    %58 = vector.broadcast %cst_31 : f32 to vector<16x64xf32>
    %59 = arith.select %56, %57, %58 : vector<16x64xi1>, vector<16x64xf32>
    %60 = arith.truncf %59 : vector<16x64xf32> to vector<16x64xbf16>
    %c0_32 = arith.constant 0 : index
    %c0_33 = arith.constant 0 : index
    %61 = vector.load %arg4[%c0_32, %c0_33] : memref<64x32xbf16, #tpu.memory_space<vmem>>, vector<64x32xbf16>
    %cst_34 = arith.constant dense<0.000000e+00> : vector<16x32xf32>
    %62 = tpu.matmul %60, %61, %cst_34 {dimension_numbers = #tpu.dot_dimension_numbers<[1], [0], [0], [1], [0, 0, 1, 1], [], []>} : vector<16x64xbf16>, vector<64x32xbf16>, vector<16x32xf32> -> vector<16x32xf32>
    %c0_35 = arith.constant 0 : index
    %c2_36 = arith.constant 2 : index
    %63 = vector.load %arg2[%c0_35, %c2_36] : memref<16x7xi32, #tpu.memory_space<vmem>>, vector<16x1xi32>
    %64 = arith.sitofp %63 : vector<16x1xi32> to vector<16x1xf32>
    %c0_37 = arith.constant 0 : index
    %c2_38 = arith.constant 2 : index
    %65 = vector.load %arg3[%c0_37, %c2_38] : memref<16x7xi32, #tpu.memory_space<vmem>>, vector<16x1xi32>
    %66 = arith.sitofp %65 : vector<16x1xi32> to vector<16x1xf32>
    %67 = vector.broadcast %64 : vector<16x1xf32> to vector<16x32xf32>
    %68 = vector.broadcast %1 : vector<1x32xf32> to vector<16x32xf32>
    %69 = arith.mulf %67, %68 : vector<16x32xf32>
    %70 = arith.addf %62, %69 : vector<16x32xf32>
    %71 = vector.broadcast %66 : vector<16x1xf32> to vector<16x32xf32>
    %72 = vector.broadcast %2 : vector<1x32xf32> to vector<16x32xf32>
    %73 = arith.mulf %71, %72 : vector<16x32xf32>
    %74 = arith.addf %70, %73 : vector<16x32xf32>
    %75 = arith.truncf %74 : vector<16x32xf32> to vector<16x32xbf16>
    %c64 = arith.constant 64 : index
    %c0_39 = arith.constant 0 : index
    %76 = vector.load %arg6[%c64, %c0_39] : memref<224x768xbf16, #tpu.memory_space<vmem>>, vector<32x768xbf16>
    %cst_40 = arith.constant dense<0.000000e+00> : vector<16x768xf32>
    %77 = tpu.matmul %75, %76, %cst_40 {dimension_numbers = #tpu.dot_dimension_numbers<[1], [0], [0], [1], [0, 0, 1, 1], [], []>} : vector<16x32xbf16>, vector<32x768xbf16>, vector<16x768xf32> -> vector<16x768xf32>
    %78 = arith.addf %53, %77 : vector<16x768xf32>
    %c0_41 = arith.constant 0 : index
    %c3 = arith.constant 3 : index
    %79 = vector.load %arg1[%c0_41, %c3] : memref<16x7xi32, #tpu.memory_space<vmem>>, vector<16x1xi32>
    %80 = vector.broadcast %79 : vector<16x1xi32> to vector<16x64xi32>
    %81 = arith.cmpi eq, %80, %0 : vector<16x64xi32>
    %cst_42 = arith.constant 1.000000e+00 : f32
    %cst_43 = arith.constant 0.000000e+00 : f32
    %82 = vector.broadcast %cst_42 : f32 to vector<16x64xf32>
    %83 = vector.broadcast %cst_43 : f32 to vector<16x64xf32>
    %84 = arith.select %81, %82, %83 : vector<16x64xi1>, vector<16x64xf32>
    %85 = arith.truncf %84 : vector<16x64xf32> to vector<16x64xbf16>
    %c0_44 = arith.constant 0 : index
    %c0_45 = arith.constant 0 : index
    %86 = vector.load %arg4[%c0_44, %c0_45] : memref<64x32xbf16, #tpu.memory_space<vmem>>, vector<64x32xbf16>
    %cst_46 = arith.constant dense<0.000000e+00> : vector<16x32xf32>
    %87 = tpu.matmul %85, %86, %cst_46 {dimension_numbers = #tpu.dot_dimension_numbers<[1], [0], [0], [1], [0, 0, 1, 1], [], []>} : vector<16x64xbf16>, vector<64x32xbf16>, vector<16x32xf32> -> vector<16x32xf32>
    %c0_47 = arith.constant 0 : index
    %c3_48 = arith.constant 3 : index
    %88 = vector.load %arg2[%c0_47, %c3_48] : memref<16x7xi32, #tpu.memory_space<vmem>>, vector<16x1xi32>
    %89 = arith.sitofp %88 : vector<16x1xi32> to vector<16x1xf32>
    %c0_49 = arith.constant 0 : index
    %c3_50 = arith.constant 3 : index
    %90 = vector.load %arg3[%c0_49, %c3_50] : memref<16x7xi32, #tpu.memory_space<vmem>>, vector<16x1xi32>
    %91 = arith.sitofp %90 : vector<16x1xi32> to vector<16x1xf32>
    %92 = vector.broadcast %89 : vector<16x1xf32> to vector<16x32xf32>
    %93 = vector.broadcast %1 : vector<1x32xf32> to vector<16x32xf32>
    %94 = arith.mulf %92, %93 : vector<16x32xf32>
    %95 = arith.addf %87, %94 : vector<16x32xf32>
    %96 = vector.broadcast %91 : vector<16x1xf32> to vector<16x32xf32>
    %97 = vector.broadcast %2 : vector<1x32xf32> to vector<16x32xf32>
    %98 = arith.mulf %96, %97 : vector<16x32xf32>
    %99 = arith.addf %95, %98 : vector<16x32xf32>
    %100 = arith.truncf %99 : vector<16x32xf32> to vector<16x32xbf16>
    %c96 = arith.constant 96 : index
    %c0_51 = arith.constant 0 : index
    %101 = vector.load %arg6[%c96, %c0_51] : memref<224x768xbf16, #tpu.memory_space<vmem>>, vector<32x768xbf16>
    %cst_52 = arith.constant dense<0.000000e+00> : vector<16x768xf32>
    %102 = tpu.matmul %100, %101, %cst_52 {dimension_numbers = #tpu.dot_dimension_numbers<[1], [0], [0], [1], [0, 0, 1, 1], [], []>} : vector<16x32xbf16>, vector<32x768xbf16>, vector<16x768xf32> -> vector<16x768xf32>
    %103 = arith.addf %78, %102 : vector<16x768xf32>
    %c0_53 = arith.constant 0 : index
    %c4 = arith.constant 4 : index
    %104 = vector.load %arg1[%c0_53, %c4] : memref<16x7xi32, #tpu.memory_space<vmem>>, vector<16x1xi32>
    %105 = vector.broadcast %104 : vector<16x1xi32> to vector<16x64xi32>
    %106 = arith.cmpi eq, %105, %0 : vector<16x64xi32>
    %cst_54 = arith.constant 1.000000e+00 : f32
    %cst_55 = arith.constant 0.000000e+00 : f32
    %107 = vector.broadcast %cst_54 : f32 to vector<16x64xf32>
    %108 = vector.broadcast %cst_55 : f32 to vector<16x64xf32>
    %109 = arith.select %106, %107, %108 : vector<16x64xi1>, vector<16x64xf32>
    %110 = arith.truncf %109 : vector<16x64xf32> to vector<16x64xbf16>
    %c0_56 = arith.constant 0 : index
    %c0_57 = arith.constant 0 : index
    %111 = vector.load %arg4[%c0_56, %c0_57] : memref<64x32xbf16, #tpu.memory_space<vmem>>, vector<64x32xbf16>
    %cst_58 = arith.constant dense<0.000000e+00> : vector<16x32xf32>
    %112 = tpu.matmul %110, %111, %cst_58 {dimension_numbers = #tpu.dot_dimension_numbers<[1], [0], [0], [1], [0, 0, 1, 1], [], []>} : vector<16x64xbf16>, vector<64x32xbf16>, vector<16x32xf32> -> vector<16x32xf32>
    %c0_59 = arith.constant 0 : index
    %c4_60 = arith.constant 4 : index
    %113 = vector.load %arg2[%c0_59, %c4_60] : memref<16x7xi32, #tpu.memory_space<vmem>>, vector<16x1xi32>
    %114 = arith.sitofp %113 : vector<16x1xi32> to vector<16x1xf32>
    %c0_61 = arith.constant 0 : index
    %c4_62 = arith.constant 4 : index
    %115 = vector.load %arg3[%c0_61, %c4_62] : memref<16x7xi32, #tpu.memory_space<vmem>>, vector<16x1xi32>
    %116 = arith.sitofp %115 : vector<16x1xi32> to vector<16x1xf32>
    %117 = vector.broadcast %114 : vector<16x1xf32> to vector<16x32xf32>
    %118 = vector.broadcast %1 : vector<1x32xf32> to vector<16x32xf32>
    %119 = arith.mulf %117, %118 : vector<16x32xf32>
    %120 = arith.addf %112, %119 : vector<16x32xf32>
    %121 = vector.broadcast %116 : vector<16x1xf32> to vector<16x32xf32>
    %122 = vector.broadcast %2 : vector<1x32xf32> to vector<16x32xf32>
    %123 = arith.mulf %121, %122 : vector<16x32xf32>
    %124 = arith.addf %120, %123 : vector<16x32xf32>
    %125 = arith.truncf %124 : vector<16x32xf32> to vector<16x32xbf16>
    %c128 = arith.constant 128 : index
    %c0_63 = arith.constant 0 : index
    %126 = vector.load %arg6[%c128, %c0_63] : memref<224x768xbf16, #tpu.memory_space<vmem>>, vector<32x768xbf16>
    %cst_64 = arith.constant dense<0.000000e+00> : vector<16x768xf32>
    %127 = tpu.matmul %125, %126, %cst_64 {dimension_numbers = #tpu.dot_dimension_numbers<[1], [0], [0], [1], [0, 0, 1, 1], [], []>} : vector<16x32xbf16>, vector<32x768xbf16>, vector<16x768xf32> -> vector<16x768xf32>
    %128 = arith.addf %103, %127 : vector<16x768xf32>
    %c0_65 = arith.constant 0 : index
    %c5 = arith.constant 5 : index
    %129 = vector.load %arg1[%c0_65, %c5] : memref<16x7xi32, #tpu.memory_space<vmem>>, vector<16x1xi32>
    %130 = vector.broadcast %129 : vector<16x1xi32> to vector<16x64xi32>
    %131 = arith.cmpi eq, %130, %0 : vector<16x64xi32>
    %cst_66 = arith.constant 1.000000e+00 : f32
    %cst_67 = arith.constant 0.000000e+00 : f32
    %132 = vector.broadcast %cst_66 : f32 to vector<16x64xf32>
    %133 = vector.broadcast %cst_67 : f32 to vector<16x64xf32>
    %134 = arith.select %131, %132, %133 : vector<16x64xi1>, vector<16x64xf32>
    %135 = arith.truncf %134 : vector<16x64xf32> to vector<16x64xbf16>
    %c0_68 = arith.constant 0 : index
    %c0_69 = arith.constant 0 : index
    %136 = vector.load %arg4[%c0_68, %c0_69] : memref<64x32xbf16, #tpu.memory_space<vmem>>, vector<64x32xbf16>
    %cst_70 = arith.constant dense<0.000000e+00> : vector<16x32xf32>
    %137 = tpu.matmul %135, %136, %cst_70 {dimension_numbers = #tpu.dot_dimension_numbers<[1], [0], [0], [1], [0, 0, 1, 1], [], []>} : vector<16x64xbf16>, vector<64x32xbf16>, vector<16x32xf32> -> vector<16x32xf32>
    %c0_71 = arith.constant 0 : index
    %c5_72 = arith.constant 5 : index
    %138 = vector.load %arg2[%c0_71, %c5_72] : memref<16x7xi32, #tpu.memory_space<vmem>>, vector<16x1xi32>
    %139 = arith.sitofp %138 : vector<16x1xi32> to vector<16x1xf32>
    %c0_73 = arith.constant 0 : index
    %c5_74 = arith.constant 5 : index
    %140 = vector.load %arg3[%c0_73, %c5_74] : memref<16x7xi32, #tpu.memory_space<vmem>>, vector<16x1xi32>
    %141 = arith.sitofp %140 : vector<16x1xi32> to vector<16x1xf32>
    %142 = vector.broadcast %139 : vector<16x1xf32> to vector<16x32xf32>
    %143 = vector.broadcast %1 : vector<1x32xf32> to vector<16x32xf32>
    %144 = arith.mulf %142, %143 : vector<16x32xf32>
    %145 = arith.addf %137, %144 : vector<16x32xf32>
    %146 = vector.broadcast %141 : vector<16x1xf32> to vector<16x32xf32>
    %147 = vector.broadcast %2 : vector<1x32xf32> to vector<16x32xf32>
    %148 = arith.mulf %146, %147 : vector<16x32xf32>
    %149 = arith.addf %145, %148 : vector<16x32xf32>
    %150 = arith.truncf %149 : vector<16x32xf32> to vector<16x32xbf16>
    %c160 = arith.constant 160 : index
    %c0_75 = arith.constant 0 : index
    %151 = vector.load %arg6[%c160, %c0_75] : memref<224x768xbf16, #tpu.memory_space<vmem>>, vector<32x768xbf16>
    %cst_76 = arith.constant dense<0.000000e+00> : vector<16x768xf32>
    %152 = tpu.matmul %150, %151, %cst_76 {dimension_numbers = #tpu.dot_dimension_numbers<[1], [0], [0], [1], [0, 0, 1, 1], [], []>} : vector<16x32xbf16>, vector<32x768xbf16>, vector<16x768xf32> -> vector<16x768xf32>
    %153 = arith.addf %128, %152 : vector<16x768xf32>
    %c0_77 = arith.constant 0 : index
    %c6 = arith.constant 6 : index
    %154 = vector.load %arg1[%c0_77, %c6] : memref<16x7xi32, #tpu.memory_space<vmem>>, vector<16x1xi32>
    %155 = vector.broadcast %154 : vector<16x1xi32> to vector<16x64xi32>
    %156 = arith.cmpi eq, %155, %0 : vector<16x64xi32>
    %cst_78 = arith.constant 1.000000e+00 : f32
    %cst_79 = arith.constant 0.000000e+00 : f32
    %157 = vector.broadcast %cst_78 : f32 to vector<16x64xf32>
    %158 = vector.broadcast %cst_79 : f32 to vector<16x64xf32>
    %159 = arith.select %156, %157, %158 : vector<16x64xi1>, vector<16x64xf32>
    %160 = arith.truncf %159 : vector<16x64xf32> to vector<16x64xbf16>
    %c0_80 = arith.constant 0 : index
    %c0_81 = arith.constant 0 : index
    %161 = vector.load %arg4[%c0_80, %c0_81] : memref<64x32xbf16, #tpu.memory_space<vmem>>, vector<64x32xbf16>
    %cst_82 = arith.constant dense<0.000000e+00> : vector<16x32xf32>
    %162 = tpu.matmul %160, %161, %cst_82 {dimension_numbers = #tpu.dot_dimension_numbers<[1], [0], [0], [1], [0, 0, 1, 1], [], []>} : vector<16x64xbf16>, vector<64x32xbf16>, vector<16x32xf32> -> vector<16x32xf32>
    %c0_83 = arith.constant 0 : index
    %c6_84 = arith.constant 6 : index
    %163 = vector.load %arg2[%c0_83, %c6_84] : memref<16x7xi32, #tpu.memory_space<vmem>>, vector<16x1xi32>
    %164 = arith.sitofp %163 : vector<16x1xi32> to vector<16x1xf32>
    %c0_85 = arith.constant 0 : index
    %c6_86 = arith.constant 6 : index
    %165 = vector.load %arg3[%c0_85, %c6_86] : memref<16x7xi32, #tpu.memory_space<vmem>>, vector<16x1xi32>
    %166 = arith.sitofp %165 : vector<16x1xi32> to vector<16x1xf32>
    %167 = vector.broadcast %164 : vector<16x1xf32> to vector<16x32xf32>
    %168 = vector.broadcast %1 : vector<1x32xf32> to vector<16x32xf32>
    %169 = arith.mulf %167, %168 : vector<16x32xf32>
    %170 = arith.addf %162, %169 : vector<16x32xf32>
    %171 = vector.broadcast %166 : vector<16x1xf32> to vector<16x32xf32>
    %172 = vector.broadcast %2 : vector<1x32xf32> to vector<16x32xf32>
    %173 = arith.mulf %171, %172 : vector<16x32xf32>
    %174 = arith.addf %170, %173 : vector<16x32xf32>
    %175 = arith.truncf %174 : vector<16x32xf32> to vector<16x32xbf16>
    %c192 = arith.constant 192 : index
    %c0_87 = arith.constant 0 : index
    %176 = vector.load %arg6[%c192, %c0_87] : memref<224x768xbf16, #tpu.memory_space<vmem>>, vector<32x768xbf16>
    %cst_88 = arith.constant dense<0.000000e+00> : vector<16x768xf32>
    %177 = tpu.matmul %175, %176, %cst_88 {dimension_numbers = #tpu.dot_dimension_numbers<[1], [0], [0], [1], [0, 0, 1, 1], [], []>} : vector<16x32xbf16>, vector<32x768xbf16>, vector<16x768xf32> -> vector<16x768xf32>
    %178 = arith.addf %153, %177 : vector<16x768xf32>
    %c0_89 = arith.constant 0 : index
    %c0_90 = arith.constant 0 : index
    %179 = vector.load %arg7[%c0_89, %c0_90] : memref<1x768xf32, #tpu.memory_space<vmem>>, vector<1x768xf32>
    %180 = vector.broadcast %179 : vector<1x768xf32> to vector<16x768xf32>
    %181 = arith.addf %178, %180 : vector<16x768xf32>
    %cst_91 = arith.constant 0.000000e+00 : f32
    %182 = vector.broadcast %cst_91 : f32 to vector<16x768xf32>
    %183 = arith.maximumf %181, %182 : vector<16x768xf32>
    %184 = vector.extract_strided_slice %183 {offsets = [0, 0], sizes = [16, 128], strides = [1, 1]} : vector<16x768xf32> to vector<16x128xf32>
    %185 = vector.extract_strided_slice %183 {offsets = [0, 128], sizes = [16, 128], strides = [1, 1]} : vector<16x768xf32> to vector<16x128xf32>
    %186 = arith.maximumf %184, %185 : vector<16x128xf32>
    %187 = vector.extract_strided_slice %183 {offsets = [0, 256], sizes = [16, 128], strides = [1, 1]} : vector<16x768xf32> to vector<16x128xf32>
    %188 = arith.maximumf %186, %187 : vector<16x128xf32>
    %189 = vector.extract_strided_slice %183 {offsets = [0, 384], sizes = [16, 128], strides = [1, 1]} : vector<16x768xf32> to vector<16x128xf32>
    %190 = arith.maximumf %188, %189 : vector<16x128xf32>
    %191 = vector.extract_strided_slice %183 {offsets = [0, 512], sizes = [16, 128], strides = [1, 1]} : vector<16x768xf32> to vector<16x128xf32>
    %192 = arith.maximumf %190, %191 : vector<16x128xf32>
    %193 = vector.extract_strided_slice %183 {offsets = [0, 640], sizes = [16, 128], strides = [1, 1]} : vector<16x768xf32> to vector<16x128xf32>
    %194 = arith.maximumf %192, %193 : vector<16x128xf32>
    %195 = arith.truncf %194 : vector<16x128xf32> to vector<16x128xbf16>
    %c0_92 = arith.constant 0 : index
    %c0_93 = arith.constant 0 : index
    %196 = vector.load %arg8[%c0_92, %c0_93] : memref<16x128xbf16, #tpu.memory_space<vmem>>, vector<16x128xbf16>
    tpu.vector_store %arg8[%c0_92, %c0_93], %195 {strides = array<i32>} : memref<16x128xbf16, #tpu.memory_space<vmem>>, vector<16x128xbf16>,
    return
  }
  func.func @transform_0(%arg0: i32) -> (i32, i32) {
    %c0_i32 = arith.constant 0 : i32
    %c0_i32_0 = arith.constant 0 : i32
    return %arg0, %c0_i32 : i32, i32
  }
  func.func @transform_1(%arg0: i32) -> (i32, i32) {
    %c0_i32 = arith.constant 0 : i32
    %c0_i32_0 = arith.constant 0 : i32
    return %arg0, %c0_i32 : i32, i32
  }
  func.func @transform_2(%arg0: i32) -> (i32, i32) {
    %c0_i32 = arith.constant 0 : i32
    %c0_i32_0 = arith.constant 0 : i32
    return %arg0, %c0_i32 : i32, i32
  }
  func.func @transform_3(%arg0: i32) -> (i32, i32) {
    %c0_i32 = arith.constant 0 : i32
    %c0_i32_0 = arith.constant 0 : i32
    %c0_i32_1 = arith.constant 0 : i32
    return %c0_i32, %c0_i32_0 : i32, i32
  }
  func.func @transform_4(%arg0: i32) -> (i32, i32) {
    %c0_i32 = arith.constant 0 : i32
    %c0_i32_0 = arith.constant 0 : i32
    %c0_i32_1 = arith.constant 0 : i32
    return %c0_i32, %c0_i32_0 : i32, i32
  }
  func.func @transform_5(%arg0: i32) -> (i32, i32) {
    %c0_i32 = arith.constant 0 : i32
    %c0_i32_0 = arith.constant 0 : i32
    %c0_i32_1 = arith.constant 0 : i32
    return %c0_i32, %c0_i32_0 : i32, i32
  }
  func.func @transform_6(%arg0: i32) -> (i32, i32) {
    %c0_i32 = arith.constant 0 : i32
    %c0_i32_0 = arith.constant 0 : i32
    %c0_i32_1 = arith.constant 0 : i32
    return %c0_i32, %c0_i32_0 : i32, i32
  }
  func.func @transform_7(%arg0: i32) -> (i32, i32) {
    %c0_i32 = arith.constant 0 : i32
    %c0_i32_0 = arith.constant 0 : i32
    return %arg0, %c0_i32 : i32, i32
  }
}

</mosaic_0001>

<llo_original>
// kernel: conv_layer_pallas.1
$region0: #{conv_layer_pallas.1}
  #allocation0 [shape = 'u32[]', space=smem, size = 0x4, offset = 0x4, fixed_abs, tag = 'smem constant byte address 0x4 - core index']
  #allocation1 [shape = 'u32[144,128]{1,0:T(1,128)}', space=vmem, size = 0x12000, scoped, tag = 'internal scratch']
  %s0 = inlined_call_operand.vmem [shape: s32[32,7], index: 0, kind: input, shape index: {}]
  %s1 = inlined_call_operand.vmem [shape: s32[32,7], index: 1, kind: input, shape index: {}]
  %s2 = inlined_call_operand.vmem [shape: s32[32,7], index: 2, kind: input, shape index: {}]
  %s3 = inlined_call_operand.vmem [shape: bf16[64,32], index: 3, kind: input, shape index: {}]
  %s4 = inlined_call_operand.vmem [shape: f32[2,32], index: 4, kind: input, shape index: {}]
  %s5 = inlined_call_operand.hbm [shape: bf16[224,768], index: 5, kind: input, shape index: {}]
  %s6 = inlined_call_operand.vmem [shape: f32[1,768], index: 6, kind: input, shape index: {}]
  %s7 = inlined_call_operand.vmem [shape: bf16[32,128], index: 7, kind: output, shape index: {}]
  %s8 = sld [smem:[#allocation0]]
  $region65: #{conv_layer_pallas.1} parent=0
    _
  %s10 = ssub.s32 1, %s8
  %s11 = scalar_select 0, %s10, %s8
  $region1: #{conv_layer_pallas.1} parent=0
    #allocation2 [shape = 'u8[344064]{0}', space=vmem, size = 0x54000, scoped, tag = 'input window, operand 5, single buffered']
    #allocation3 [shape = 's32[2]{0}', space=sflag, size = 0x8, scoped, tag = 'scoped memory for conv_layer_pallas.1']
    %12 = vsyncpa [#allocation3], 0
    loop: start=0, step=1, limit=4
    $region2: #{conv_layer_pallas.1} parent=1 // loop_pre_header
      _
    $region3: #{conv_layer_pallas.1} parent=1 // loop_header
      %s14 = sphi 0, %s18
      %p15 = scmp.ge.s32.totalorder %s14, 4
      %s24 = sphi 0, %s26
      %s27 = sphi 0, %s24
      %s28 = sphi 0, %s27
      %s44 = sphi 0, %s28
      %s50 = sphi 0, %s52
      %s53 = sphi 0, %s50
      %s54 = sphi 0, %s53
      %s70 = sphi 0, %s54
      %s76 = sphi 0, %s78
      %s79 = sphi 0, %s76
      %s80 = sphi 0, %s79
      %s96 = sphi 0, %s80
      %s100 = sphi 0, %s100
      %s102 = sphi 0, %s100
      %s103 = sphi 0, %s102
      %s117 = sphi 0, %s103
      %s121 = sphi 0, %s121
      %s123 = sphi 0, %s121
      %s124 = sphi 0, %s123
      %s138 = sphi 0, %s124
      %s142 = sphi 0, %s142
      %s144 = sphi 0, %s142
      %s145 = sphi 0, %s144
      %s159 = sphi 0, %s145
      %s163 = sphi 0, %s163
      %s165 = sphi 0, %s163
      %s166 = sphi 0, %s165
      %s180 = sphi 0, %s166
      %s186 = sphi 0, %s188
      %s189 = sphi 0, %s186
      %s190 = sphi 0, %s189
      %s206 = sphi 0, %s190
    $region4: #{conv_layer_pallas.1} parent=1 // loop_header_branch
      %17 = sbr.rel (%p15) target = $region8
    $region5: #{conv_layer_pallas.1} parent=1 // loop_body
      %s19 = ssub.s32 %s14, 1
      %s20 = ssub.s32 %s14, 2
      %s21 = sadd.s32 %s14, 1
      %s22 = ssub.s32 %s14, %s21
      %p23 = scmp.eq.s32.totalorder %s22, 0
      %s25 = sadd.s32 %s24, 1
      %s26 = scalar_select %p23, %s24, %s25
      %p29 = pneg %p23
      %p30 = scmp.eq.s32.totalorder %s14, 1
      %p31 = por %p29, %p30
      %p32 = scmp.ne.s32.totalorder %s24, %s27
      %p33 = scmp.eq.s32.totalorder %s14, 0
      %p34 = por %p32, %p33
      %p35 = scmp.ne.s32.totalorder %s24, %s27
      %p36 = scmp.eq.s32.totalorder %s19, 1
      %p37 = por %p35, %p36
      %p38 = scmp.ne.s32.totalorder %s27, %s28
      %p39 = scmp.eq.s32.totalorder %s19, 0
      %p40 = por %p38, %p39
      %p41 = scmp.ne.s32.totalorder %s27, %s28
      %p42 = scmp.eq.s32.totalorder %s20, 1
      %p43 = por %p41, %p42
      %p45 = scmp.ne.s32.totalorder %s28, %s44
      %p46 = scmp.eq.s32.totalorder %s20, 0
      %p47 = por %p45, %p46
      %s48 = ssub.s32 %s14, %s21
      %p49 = scmp.eq.s32.totalorder %s48, 0
      %s51 = sadd.s32 %s50, 1
      %s52 = scalar_select %p49, %s50, %s51
      %p55 = pneg %p49
      %p56 = scmp.eq.s32.totalorder %s14, 1
      %p57 = por %p55, %p56
      %p58 = scmp.ne.s32.totalorder %s50, %s53
      %p59 = scmp.eq.s32.totalorder %s14, 0
      %p60 = por %p58, %p59
      %p61 = scmp.ne.s32.totalorder %s50, %s53
      %p62 = scmp.eq.s32.totalorder %s19, 1
      %p63 = por %p61, %p62
      %p64 = scmp.ne.s32.totalorder %s53, %s54
      %p65 = scmp.eq.s32.totalorder %s19, 0
      %p66 = por %p64, %p65
      %p67 = scmp.ne.s32.totalorder %s53, %s54
      %p68 = scmp.eq.s32.totalorder %s20, 1
      %p69 = por %p67, %p68
      %p71 = scmp.ne.s32.totalorder %s54, %s70
      %p72 = scmp.eq.s32.totalorder %s20, 0
      %p73 = por %p71, %p72
      %s74 = ssub.s32 %s14, %s21
      %p75 = scmp.eq.s32.totalorder %s74, 0
      %s77 = sadd.s32 %s76, 1
      %s78 = scalar_select %p75, %s76, %s77
      %p81 = pneg %p75
      %p82 = scmp.eq.s32.totalorder %s14, 1
      %p83 = por %p81, %p82
      %p84 = scmp.ne.s32.totalorder %s76, %s79
      %p85 = scmp.eq.s32.totalorder %s14, 0
      %p86 = por %p84, %p85
      %p87 = scmp.ne.s32.totalorder %s76, %s79
      %p88 = scmp.eq.s32.totalorder %s19, 1
      %p89 = por %p87, %p88
      %p90 = scmp.ne.s32.totalorder %s79, %s80
      %p91 = scmp.eq.s32.totalorder %s19, 0
      %p92 = por %p90, %p91
      %p93 = scmp.ne.s32.totalorder %s79, %s80
      %p94 = scmp.eq.s32.totalorder %s20, 1
      %p95 = por %p93, %p94
      %p97 = scmp.ne.s32.totalorder %s80, %s96
      %p98 = scmp.eq.s32.totalorder %s20, 0
      %p99 = por %p97, %p98
      %s101 = sadd.s32 %s100, 1
      %p104 = scmp.eq.s32.totalorder %s14, 1
      %p105 = scmp.ne.s32.totalorder %s100, %s102
      %p106 = scmp.eq.s32.totalorder %s14, 0
      %p107 = por %p105, %p106
      %p108 = scmp.ne.s32.totalorder %s100, %s102
      %p109 = scmp.eq.s32.totalorder %s19, 1
      %p110 = por %p108, %p109
      %p111 = scmp.ne.s32.totalorder %s102, %s103
      %p112 = scmp.eq.s32.totalorder %s19, 0
      %p113 = por %p111, %p112
      %p114 = scmp.ne.s32.totalorder %s102, %s103
      %p115 = scmp.eq.s32.totalorder %s20, 1
      %p116 = por %p114, %p115
      %p118 = scmp.ne.s32.totalorder %s103, %s117
      %p119 = scmp.eq.s32.totalorder %s20, 0
      %p120 = por %p118, %p119
      %s122 = sadd.s32 %s121, 1
      %p125 = scmp.eq.s32.totalorder %s14, 1
      %p126 = scmp.ne.s32.totalorder %s121, %s123
      %p127 = scmp.eq.s32.totalorder %s14, 0
      %p128 = por %p126, %p127
      %p129 = scmp.ne.s32.totalorder %s121, %s123
      %p130 = scmp.eq.s32.totalorder %s19, 1
      %p131 = por %p129, %p130
      %p132 = scmp.ne.s32.totalorder %s123, %s124
      %p133 = scmp.eq.s32.totalorder %s19, 0
      %p134 = por %p132, %p133
      %p135 = scmp.ne.s32.totalorder %s123, %s124
      %p136 = scmp.eq.s32.totalorder %s20, 1
      %p137 = por %p135, %p136
      %p139 = scmp.ne.s32.totalorder %s124, %s138
      %p140 = scmp.eq.s32.totalorder %s20, 0
      %p141 = por %p139, %p140
      %s143 = sadd.s32 %s142, 1
      %p146 = scmp.eq.s32.totalorder %s14, 1
      %p147 = scmp.ne.s32.totalorder %s142, %s144
      %p148 = scmp.eq.s32.totalorder %s14, 0
      %p149 = por %p147, %p148
      %p150 = scmp.ne.s32.totalorder %s142, %s144
      %p151 = scmp.eq.s32.totalorder %s19, 1
      %p152 = por %p150, %p151
      %p153 = scmp.ne.s32.totalorder %s144, %s145
      %p154 = scmp.eq.s32.totalorder %s19, 0
      %p155 = por %p153, %p154
      %p156 = scmp.ne.s32.totalorder %s144, %s145
      %p157 = scmp.eq.s32.totalorder %s20, 1
      %p158 = por %p156, %p157
      %p160 = scmp.ne.s32.totalorder %s145, %s159
      %p161 = scmp.eq.s32.totalorder %s20, 0
      %p162 = por %p160, %p161
      %s164 = sadd.s32 %s163, 1
      %p167 = scmp.eq.s32.totalorder %s14, 1
      %p168 = scmp.ne.s32.totalorder %s163, %s165
      %p169 = scmp.eq.s32.totalorder %s14, 0
      %p170 = por %p168, %p169
      %p171 = scmp.ne.s32.totalorder %s163, %s165
      %p172 = scmp.eq.s32.totalorder %s19, 1
      %p173 = por %p171, %p172
      %p174 = scmp.ne.s32.totalorder %s165, %s166
      %p175 = scmp.eq.s32.totalorder %s19, 0
      %p176 = por %p174, %p175
      %p177 = scmp.ne.s32.totalorder %s165, %s166
      %p178 = scmp.eq.s32.totalorder %s20, 1
      %p179 = por %p177, %p178
      %p181 = scmp.ne.s32.totalorder %s166, %s180
      %p182 = scmp.eq.s32.totalorder %s20, 0
      %p183 = por %p181, %p182
      %s184 = ssub.s32 %s14, %s21
      %p185 = scmp.eq.s32.totalorder %s184, 0
      %s187 = sadd.s32 %s186, 1
      %s188 = scalar_select %p185, %s186, %s187
      %p191 = pneg %p185
      %p192 = scmp.eq.s32.totalorder %s14, 1
      %p193 = por %p191, %p192
      %p194 = scmp.ne.s32.totalorder %s186, %s189
      %p195 = scmp.eq.s32.totalorder %s14, 0
      %p196 = por %p194, %p195
      %p197 = scmp.ne.s32.totalorder %s186, %s189
      %p198 = scmp.eq.s32.totalorder %s19, 1
      %p199 = por %p197, %p198
      %p200 = scmp.ne.s32.totalorder %s189, %s190
      %p201 = scmp.eq.s32.totalorder %s19, 0
      %p202 = por %p200, %p201
      %p203 = scmp.ne.s32.totalorder %s189, %s190
      %p204 = scmp.eq.s32.totalorder %s20, 1
      %p205 = por %p203, %p204
      %p207 = scmp.ne.s32.totalorder %s190, %s206
      %p208 = scmp.eq.s32.totalorder %s20, 0
      %p209 = por %p207, %p208
      %p210 = scmp.le.s32.totalorder 1, %s14
      %p211 = scmp.lt.s32.totalorder %s14, 3
      %p212 = pnand %p210, %p211
      %p213 = pneg %p212
      // Predicated region
      $region9: #{conv_layer_pallas.1} parent=5 // pred_check
        _
      $region10: #{conv_layer_pallas.1} parent=5 // pred_check_branch
        %215 = sbr.rel (%p212) target = $region12
      $region11: #{conv_layer_pallas.1} parent=5 // pred_region
        %s216 = ssub.s32 %s14, 1
        // Predicated region
        $region13: #{conv_layer_pallas.1} parent=11 // pred_check
          %p217 = pneg %p113
        $region14: #{conv_layer_pallas.1} parent=11 // pred_check_branch
          %219 = sbr.rel (%p217) target = $region16
        $region15: #{conv_layer_pallas.1} parent=11 // pred_region
          _
        $region16: #{conv_layer_pallas.1} parent=11 // pred_fallthru
          _
        // Predicated region
        $region17: #{conv_layer_pallas.1} parent=11 // pred_check
          %p220 = pneg %p134
        $region18: #{conv_layer_pallas.1} parent=11 // pred_check_branch
          %222 = sbr.rel (%p220) target = $region20
        $region19: #{conv_layer_pallas.1} parent=11 // pred_region
          _
        $region20: #{conv_layer_pallas.1} parent=11 // pred_fallthru
          _
        // Predicated region
        $region21: #{conv_layer_pallas.1} parent=11 // pred_check
          %p223 = pneg %p155
        $region22: #{conv_layer_pallas.1} parent=11 // pred_check_branch
          %225 = sbr.rel (%p223) target = $region24
        $region23: #{conv_layer_pallas.1} parent=11 // pred_region
          %s227 = ssub.s32 10752, 10752
          %228 = vsyncadd [#allocation3], %s227
          %s229 = sshll.u32 [#allocation2], 4
          %s230 = int_to_ptr.vmem [resolvable:$true] %s229
          %235 = dma.hbm_to_vmem [thread:$0]  %s5, 10752, %s230, [#allocation3], 384, 384, 24
        $region24: #{conv_layer_pallas.1} parent=11 // pred_fallthru
          _
        // Predicated region
        $region25: #{conv_layer_pallas.1} parent=11 // pred_check
          %p236 = pneg %p176
        $region26: #{conv_layer_pallas.1} parent=11 // pred_check_branch
          %238 = sbr.rel (%p236) target = $region28
        $region27: #{conv_layer_pallas.1} parent=11 // pred_region
          _
        $region28: #{conv_layer_pallas.1} parent=11 // pred_fallthru
          _
      $region12: #{conv_layer_pallas.1} parent=5 // pred_fallthru
        _
      %p239 = scmp.lt.s32.totalorder %s14, 2
      // Predicated region
      $region29: #{conv_layer_pallas.1} parent=5 // pred_check
        %p240 = pneg %p239
      $region30: #{conv_layer_pallas.1} parent=5 // pred_check_branch
        %242 = sbr.rel (%p240) target = $region32
      $region31: #{conv_layer_pallas.1} parent=5 // pred_region
        // Predicated region
        $region33: #{conv_layer_pallas.1} parent=31 // pred_check
          %p243 = pneg %p34
        $region34: #{conv_layer_pallas.1} parent=31 // pred_check_branch
          %245 = sbr.rel (%p243) target = $region36
        $region35: #{conv_layer_pallas.1} parent=31 // pred_region
          %s246 = smul.u32 2, %s14
          %p247 = scmp.lt.s32.totalorder %s246, 3
          %s248 = scalar_select %p247, %s246, 3
          %s249 = smul.addr %s248, 8
          %s250 = scalar_lea.vmem %s0, %s249
          %s251 = smul.u32 2, %s14
        $region36: #{conv_layer_pallas.1} parent=31 // pred_fallthru
          _
        // Predicated region
        $region37: #{conv_layer_pallas.1} parent=31 // pred_check
          %p252 = pneg %p60
        $region38: #{conv_layer_pallas.1} parent=31 // pred_check_branch
          %254 = sbr.rel (%p252) target = $region40
        $region39: #{conv_layer_pallas.1} parent=31 // pred_region
          %s255 = smul.u32 2, %s14
          %p256 = scmp.lt.s32.totalorder %s255, 3
          %s257 = scalar_select %p256, %s255, 3
          %s258 = smul.addr %s257, 8
          %s259 = scalar_lea.vmem %s1, %s258
          %s260 = smul.u32 2, %s14
        $region40: #{conv_layer_pallas.1} parent=31 // pred_fallthru
          _
        // Predicated region
        $region41: #{conv_layer_pallas.1} parent=31 // pred_check
          %p261 = pneg %p86
        $region42: #{conv_layer_pallas.1} parent=31 // pred_check_branch
          %263 = sbr.rel (%p261) target = $region44
        $region43: #{conv_layer_pallas.1} parent=31 // pred_region
          %s264 = smul.u32 2, %s14
          %p265 = scmp.lt.s32.totalorder %s264, 3
          %s266 = scalar_select %p265, %s264, 3
          %s267 = smul.addr %s266, 8
          %s268 = scalar_lea.vmem %s2, %s267
          %s269 = smul.u32 2, %s14
        $region44: #{conv_layer_pallas.1} parent=31 // pred_fallthru
          _
      $region32: #{conv_layer_pallas.1} parent=5 // pred_fallthru
        _
      %p270 = scmp.le.s32.totalorder 1, %s14
      %p271 = scmp.lt.s32.totalorder %s14, 3
      %p272 = pnand %p270, %p271
      %p273 = pneg %p272
      // Predicated region
      $region45: #{conv_layer_pallas.1} parent=5 // pred_check
        _
      $region46: #{conv_layer_pallas.1} parent=5 // pred_check_branch
        %275 = sbr.rel (%p272) target = $region48
      $region47: #{conv_layer_pallas.1} parent=5 // pred_region
        %s276 = ssub.s32 %s14, 1
        // Predicated region
        $region49: #{conv_layer_pallas.1} parent=47 // pred_check
          %p277 = pneg %p155
        $region50: #{conv_layer_pallas.1} parent=47 // pred_check_branch
          %279 = sbr.rel (%p277) target = $region52
        $region51: #{conv_layer_pallas.1} parent=47 // pred_region
          %280 = dma.done [#allocation3], 10752
        $region52: #{conv_layer_pallas.1} parent=47 // pred_fallthru
          _
        %s281 = smul.u32 2, %s19
        %p282 = scmp.lt.s32.totalorder %s281, 3
        %s283 = scalar_select %p282, %s281, 3
        %s284 = smul.addr %s283, 8
        %s285 = scalar_lea.vmem %s0, %s284
        %p286 = pneg %p40
        %p287 = pneg %p37
        %s288 = smul.u32 2, %s19
        %p289 = scmp.lt.s32.totalorder %s288, 3
        %s290 = scalar_select %p289, %s288, 3
        %s291 = smul.addr %s290, 8
        %s292 = scalar_lea.vmem %s1, %s291
        %p293 = pneg %p66
        %p294 = pneg %p63
        %s295 = smul.u32 2, %s19
        %p296 = scmp.lt.s32.totalorder %s295, 3
        %s297 = scalar_select %p296, %s295, 3
        %s298 = smul.addr %s297, 8
        %s299 = scalar_lea.vmem %s2, %s298
        %p300 = pneg %p92
        %p301 = pneg %p89
        %p302 = pneg %p113
        %p303 = pneg %p110
        %p304 = pneg %p134
        %p305 = pneg %p131
        %p306 = pneg %p155
        %p307 = pneg %p152
        %p308 = pneg %p176
        %p309 = pneg %p173
        %p310 = pneg %p202
        %p311 = pneg %p199
        %s312 = smul.u32 2, %s19
        %p313 = scmp.lt.s32.totalorder %s312, 3
        %s314 = scalar_select %p313, %s312, 3
        %s315 = smul.addr %s314, 4
        %s316 = scalar_lea.vmem %s7, %s315
        %s317 = smul.u32 2, %s19
        %p318 = scmp.lt.s32.totalorder %s317, 3
        %s319 = scalar_select %p318, %s317, 3
        %s320 = smul.addr %s319, 8
        %s321 = scalar_lea.vmem %s0, %s320
        %s322 = smul.u32 2, %s19
        %s323 = smul.u32 2, %s19
        %p324 = scmp.lt.s32.totalorder %s323, 3
        %s325 = scalar_select %p324, %s323, 3
        %s326 = smul.addr %s325, 8
        %s327 = scalar_lea.vmem %s1, %s326
        %s328 = smul.u32 2, %s19
        %s329 = smul.u32 2, %s19
        %p330 = scmp.lt.s32.totalorder %s329, 3
        %s331 = scalar_select %p330, %s329, 3
        %s332 = smul.addr %s331, 8
        %s333 = scalar_lea.vmem %s2, %s332
        %s334 = smul.u32 2, %s19
        %s335 = smul.u32 2, %s19
        %p336 = scmp.lt.s32.totalorder %s335, 3
        %s337 = scalar_select %p336, %s335, 3
        %s338 = smul.addr %s337, 4
        %s339 = scalar_lea.vmem %s7, %s338
        %s340 = smul.u32 2, %s19
        %v342 = vlaneseq
        %v343 = vand.u32 %v342, 127
        %v344 = vld [vmem:[%s4] sm:$0x1]
        %v345 = vld [vmem:[%s4 + $0x1] sm:$0x1]
        %v346 = vld [vmem:[%s321] sm:$0xff]
        %v347 = vld [vmem:[%s321 + $0x8] sm:$0xff]
        %348 = vset.pattern.permute.xlu0 0
        %349 = vperm.xlu0 %348, %v346
        %v350 = vpop.permute.xlu0 %349
        %351 = vset.pattern.permute.xlu0 0
        %352 = vperm.xlu0 %351, %v347
        %v353 = vpop.permute.xlu0 %352
        %vm354 = vcmp.eq.s32.totalorder %v350, %v343
        %vm355 = vcmp.eq.s32.totalorder %v353, %v343
        %v356 = vsel %vm354, 1.0, 0.0
        %v357 = vsel %vm355, 1.0, 0.0
        %v358 = vpack.c.bf16 %v357, %v356
        %v359 = vld [vmem:[%s3] sm:$0xf]
        %v360 = vld [vmem:[%s3 + $0x4] sm:$0xf]
        %v361 = vld [vmem:[%s3 + $0x8] sm:$0xf]
        %v362 = vld [vmem:[%s3 + $0xc] sm:$0xf]
        %v363 = vld [vmem:[%s3 + $0x10] sm:$0xf]
        %v364 = vld [vmem:[%s3 + $0x14] sm:$0xf]
        %v365 = vld [vmem:[%s3 + $0x18] sm:$0xf]
        %v366 = vld [vmem:[%s3 + $0x1c] sm:$0xf]
        %v367 = vld [vmem:[%s327] sm:$0xff]
        %v368 = vld [vmem:[%s327 + $0x8] sm:$0xff]
        %v369 = vcvt.s32.f32 %v367
        %v370 = vcvt.s32.f32 %v368
        %v371 = vld [vmem:[%s333] sm:$0xff]
        %v372 = vld [vmem:[%s333 + $0x8] sm:$0xff]
        %v373 = vcvt.s32.f32 %v371
        %v374 = vcvt.s32.f32 %v372
        %376 = vset.pattern.permute.xlu0 0
        %377 = vperm.xlu0 %376, %v369
        %v378 = vpop.permute.xlu0 %377
        %381 = vset.pattern.permute.xlu0 0
        %382 = vperm.xlu0 %381, %v370
        %v383 = vpop.permute.xlu0 %382
        %v385 = vlaneseq
        %v386 = vshrl.u32 %v385, 7
        %v387 = vsub.s32 0, %v386
        %v388 = vrot.slane %v344, %v387
        %v389 = vmul.f32 %v378, %v388
        %v390 = vmul.f32 %v383, %v388
        %v399 = vunpack.c.l.b16 %v359
        %v400 = vunpack.c.l.b16 %v360
        %v401 = vunpack.c.l.b16 %v361
        %v402 = vunpack.c.l.b16 %v362
        %v403 = vunpack.c.l.b16 %v363
        %v404 = vunpack.c.l.b16 %v364
        %v405 = vunpack.c.l.b16 %v365
        %v406 = vunpack.c.l.b16 %v366
        %v407 = vpack.c.b16 %v400, %v399
        %v408 = vpack.c.b16 %v402, %v401
        %v409 = vpack.c.b16 %v404, %v403
        %v410 = vpack.c.b16 %v406, %v405
        %vm415 = vcmask 523264
        %v417 = vsel %vm415, %v358, 0
        %419 = vmatprep.subr.bf16.mxu0 0
        %420 = vmatpush1.bf16.msra.mxu0 %v407
        %421 = vmatprep.subr.bf16.mxu0 0
        %422 = vmatpush1.bf16.msra.mxu0 %v408
        %423 = vmatprep.subr.bf16.mxu0 0
        %424 = vmatpush1.bf16.msra.mxu0 %v409
        %425 = vmatprep.subr.bf16.mxu0 0
        %426 = vmatpush1.bf16.msra.mxu0 %v410
        %427 = vmatprep.subr.bf16.mxu0 0
        %428 = vmatpush1.bf16.msra.mxu0 0
        %429 = vmatprep.subr.bf16.mxu0 0
        %430 = vmatpush1.bf16.msra.mxu0 0
        %431 = vmatprep.subr.bf16.mxu0 0
        %432 = vmatpush1.bf16.msra.mxu0 0
        %433 = vmatprep.subr.bf16.mxu0 0
        %434 = vmatpush1.bf16.msra.mxu0 0
        %435 = vmatprep.subr.bf16.mxu0 0
        %436 = vmatpush1.bf16.msra.mxu0 0
        %437 = vmatprep.subr.bf16.mxu0 0
        %438 = vmatpush1.bf16.msra.mxu0 0
        %439 = vmatprep.subr.bf16.mxu0 0
        %440 = vmatpush1.bf16.msra.mxu0 0
        %441 = vmatprep.subr.bf16.mxu0 0
        %442 = vmatpush1.bf16.msra.mxu0 0
        %443 = vmatprep.subr.bf16.mxu0 0
        %444 = vmatpush1.bf16.msra.mxu0 0
        %445 = vmatprep.subr.bf16.mxu0 0
        %446 = vmatpush1.bf16.msra.mxu0 0
        %447 = vmatprep.subr.bf16.mxu0 0
        %448 = vmatpush1.bf16.msra.mxu0 0
        %449 = vmatprep.subr.bf16.mxu0 0
        %450 = vmatpush1.bf16.msra.mxu0 0
        %451 = vmatprep.mubr.bf16.mxu0 0
        %452 = vmatmul.mubr.bf16.gmra.mrb[0].mxu0 %v417
        %v453 = vpop.f32.mrb[0].mxu0
        %v454 = vadd.f32 %v389, %v453
        %v455 = vpop.f32.mrb[0].mxu0
        %v456 = vpop.f32.mrb[0].mxu0
        %v457 = vadd.f32 %v390, %v456
        %v458 = vpop.f32.mrb[0].mxu0
        %459 = vdwg.mxu0
        %461 = vset.pattern.permute.xlu0 0
        %462 = vperm.xlu0 %461, %v373
        %v463 = vpop.permute.xlu0 %462
        %466 = vset.pattern.permute.xlu0 0
        %467 = vperm.xlu0 %466, %v374
        %v468 = vpop.permute.xlu0 %467
        %v470 = vlaneseq
        %v471 = vshrl.u32 %v470, 7
        %v472 = vsub.s32 0, %v471
        %v473 = vrot.slane %v345, %v472
        %v474 = vmul.f32 %v463, %v473
        %v475 = vmul.f32 %v468, %v473
        %v476 = vadd.f32 %v454, %v474
        %v477 = vadd.f32 %v457, %v475
        %v478 = vpack.c.bf16 %v477, %v476
        %v479 = vld [vmem:[#allocation2] sm:$0xff]
        %v480 = vld [vmem:[#allocation2 + $0x8] sm:$0xff]
        %v481 = vld [vmem:[#allocation2 + $0x10] sm:$0xff]
        %v482 = vld [vmem:[#allocation2 + $0x18] sm:$0xff]
        %v483 = vld [vmem:[#allocation2 + $0x20] sm:$0xff]
        %v484 = vld [vmem:[#allocation2 + $0x28] sm:$0xff]
        %v485 = vld [vmem:[#allocation2 + $0x30] sm:$0xff]
        %v486 = vld [vmem:[#allocation2 + $0x38] sm:$0xff]
        %v487 = vld [vmem:[#allocation2 + $0x40] sm:$0xff]
        %v488 = vld [vmem:[#allocation2 + $0x48] sm:$0xff]
        %v489 = vld [vmem:[#allocation2 + $0x50] sm:$0xff]
        %v490 = vld [vmem:[#allocation2 + $0x58] sm:$0xff]
        %491 = vset.pattern.permute.xlu0 1
        %492 = vperm.xlu0 %491, %v346
        %v493 = vpop.permute.xlu0 %492
        %494 = vset.pattern.permute.xlu0 1
        %495 = vperm.xlu0 %494, %v347
        %v496 = vpop.permute.xlu0 %495
        %vm497 = vcmp.eq.s32.totalorder %v493, %v343
        %vm498 = vcmp.eq.s32.totalorder %v496, %v343
        %v499 = vsel %vm497, 1.0, 0.0
        %v500 = vsel %vm498, 1.0, 0.0
        %v501 = vpack.c.bf16 %v500, %v499
        %502 = vset.pattern.permute.xlu0 1
        %503 = vperm.xlu0 %502, %v369
        %v504 = vpop.permute.xlu0 %503
        %506 = vset.pattern.permute.xlu0 1
        %507 = vperm.xlu0 %506, %v370
        %v508 = vpop.permute.xlu0 %507
        %v510 = vmul.f32 %v504, %v388
        %v511 = vmul.f32 %v508, %v388
        %v513 = vsel %vm415, %v501, 0
        %515 = vmatprep.subr.bf16.mxu0 0
        %516 = vmatpush1.bf16.msra.mxu0 %v407
        %517 = vmatprep.subr.bf16.mxu0 0
        %518 = vmatpush1.bf16.msra.mxu0 %v408
        %519 = vmatprep.subr.bf16.mxu0 0
        %520 = vmatpush1.bf16.msra.mxu0 %v409
        %521 = vmatprep.subr.bf16.mxu0 0
        %522 = vmatpush1.bf16.msra.mxu0 %v410
        %523 = vmatprep.subr.bf16.mxu0 0
        %524 = vmatpush1.bf16.msra.mxu0 0
        %525 = vmatprep.subr.bf16.mxu0 0
        %526 = vmatpush1.bf16.msra.mxu0 0
        %527 = vmatprep.subr.bf16.mxu0 0
        %528 = vmatpush1.bf16.msra.mxu0 0
        %529 = vmatprep.subr.bf16.mxu0 0
        %530 = vmatpush1.bf16.msra.mxu0 0
        %531 = vmatprep.subr.bf16.mxu0 0
        %532 = vmatpush1.bf16.msra.mxu0 0
        %533 = vmatprep.subr.bf16.mxu0 0
        %534 = vmatpush1.bf16.msra.mxu0 0
        %535 = vmatprep.subr.bf16.mxu0 0
        %536 = vmatpush1.bf16.msra.mxu0 0
        %537 = vmatprep.subr.bf16.mxu0 0
        %538 = vmatpush1.bf16.msra.mxu0 0
        %539 = vmatprep.subr.bf16.mxu0 0
        %540 = vmatpush1.bf16.msra.mxu0 0
        %541 = vmatprep.subr.bf16.mxu0 0
        %542 = vmatpush1.bf16.msra.mxu0 0
        %543 = vmatprep.subr.bf16.mxu0 0
        %544 = vmatpush1.bf16.msra.mxu0 0
        %545 = vmatprep.subr.bf16.mxu0 0
        %546 = vmatpush1.bf16.msra.mxu0 0
        %547 = vmatprep.mubr.bf16.mxu0 0
        %548 = vmatmul.mubr.bf16.gmra.mrb[0].mxu0 %v513
        %v549 = vpop.f32.mrb[0].mxu0
        %v550 = vadd.f32 %v510, %v549
        %v551 = vpop.f32.mrb[0].mxu0
        %v552 = vpop.f32.mrb[0].mxu0
        %v553 = vadd.f32 %v511, %v552
        %v554 = vpop.f32.mrb[0].mxu0
        %555 = vdwg.mxu0
        %556 = vset.pattern.permute.xlu0 1
        %557 = vperm.xlu0 %556, %v373
        %v558 = vpop.permute.xlu0 %557
        %560 = vset.pattern.permute.xlu0 1
        %561 = vperm.xlu0 %560, %v374
        %v562 = vpop.permute.xlu0 %561
        %v564 = vmul.f32 %v558, %v473
        %v565 = vmul.f32 %v562, %v473
        %v566 = vadd.f32 %v550, %v564
        %v567 = vadd.f32 %v553, %v565
        %v568 = vpack.c.bf16 %v567, %v566
        %v569 = vld [vmem:[#allocation2 + $0x60] sm:$0xff]
        %v570 = vld [vmem:[#allocation2 + $0x68] sm:$0xff]
        %v571 = vld [vmem:[#allocation2 + $0x70] sm:$0xff]
        %v572 = vld [vmem:[#allocation2 + $0x78] sm:$0xff]
        %v573 = vld [vmem:[#allocation2 + $0x80] sm:$0xff]
        %v574 = vld [vmem:[#allocation2 + $0x88] sm:$0xff]
        %v575 = vld [vmem:[#allocation2 + $0x90] sm:$0xff]
        %v576 = vld [vmem:[#allocation2 + $0x98] sm:$0xff]
        %v577 = vld [vmem:[#allocation2 + $0xa0] sm:$0xff]
        %v578 = vld [vmem:[#allocation2 + $0xa8] sm:$0xff]
        %v579 = vld [vmem:[#allocation2 + $0xb0] sm:$0xff]
        %v580 = vld [vmem:[#allocation2 + $0xb8] sm:$0xff]
        %v593 = vunpack.c.l.b16 %v569
        %v594 = vunpack.c.h.b16 %v569
        %v595 = vunpack.c.l.b16 %v570
        %v596 = vunpack.c.h.b16 %v570
        %v597 = vunpack.c.l.b16 %v571
        %v598 = vunpack.c.h.b16 %v571
        %v599 = vunpack.c.l.b16 %v572
        %v600 = vunpack.c.h.b16 %v572
        %v601 = vunpack.c.l.b16 %v573
        %v602 = vunpack.c.h.b16 %v573
        %v603 = vunpack.c.l.b16 %v574
        %v604 = vunpack.c.h.b16 %v574
        %v605 = vunpack.c.l.b16 %v575
        %v606 = vunpack.c.h.b16 %v575
        %v607 = vunpack.c.l.b16 %v576
        %v608 = vunpack.c.h.b16 %v576
        %v609 = vunpack.c.l.b16 %v577
        %v610 = vunpack.c.h.b16 %v577
        %v611 = vunpack.c.l.b16 %v578
        %v612 = vunpack.c.h.b16 %v578
        %v613 = vunpack.c.l.b16 %v579
        %v614 = vunpack.c.h.b16 %v579
        %v615 = vunpack.c.l.b16 %v580
        %v616 = vunpack.c.h.b16 %v580
        %v617 = vpack.c.b16 %v599, %v593
        %v618 = vpack.c.b16 %v600, %v594
        %v619 = vpack.c.b16 %v601, %v595
        %v620 = vpack.c.b16 %v602, %v596
        %v621 = vpack.c.b16 %v603, %v597
        %v622 = vpack.c.b16 %v604, %v598
        %v623 = vpack.c.b16 %v611, %v605
        %v624 = vpack.c.b16 %v612, %v606
        %v625 = vpack.c.b16 %v613, %v607
        %v626 = vpack.c.b16 %v614, %v608
        %v627 = vpack.c.b16 %v615, %v609
        %v628 = vpack.c.b16 %v616, %v610
        %vm641 = vcmask 261120
        %v643 = vsel %vm641, %v568, 0
        %645 = vmatprep.subr.bf16.mxu0 %v618
        %646 = vmatpush1.bf16.msra.mxu0 %v617
        %647 = vmatprep.subr.bf16.mxu0 %v624
        %648 = vmatpush1.bf16.msra.mxu0 %v623
        %649 = vmatprep.subr.bf16.mxu0 0
        %650 = vmatpush1.bf16.msra.mxu0 0
        %651 = vmatprep.subr.bf16.mxu0 0
        %652 = vmatpush1.bf16.msra.mxu0 0
        %653 = vmatprep.subr.bf16.mxu0 0
        %654 = vmatpush1.bf16.msra.mxu0 0
        %655 = vmatprep.subr.bf16.mxu0 0
        %656 = vmatpush1.bf16.msra.mxu0 0
        %657 = vmatprep.subr.bf16.mxu0 0
        %658 = vmatpush1.bf16.msra.mxu0 0
        %659 = vmatprep.subr.bf16.mxu0 0
        %660 = vmatpush1.bf16.msra.mxu0 0
        %661 = vmatprep.subr.bf16.mxu0 0
        %662 = vmatpush1.bf16.msra.mxu0 0
        %663 = vmatprep.subr.bf16.mxu0 0
        %664 = vmatpush1.bf16.msra.mxu0 0
        %665 = vmatprep.subr.bf16.mxu0 0
        %666 = vmatpush1.bf16.msra.mxu0 0
        %667 = vmatprep.subr.bf16.mxu0 0
        %668 = vmatpush1.bf16.msra.mxu0 0
        %669 = vmatprep.subr.bf16.mxu0 0
        %670 = vmatpush1.bf16.msra.mxu0 0
        %671 = vmatprep.subr.bf16.mxu0 0
        %672 = vmatpush1.bf16.msra.mxu0 0
        %673 = vmatprep.subr.bf16.mxu0 0
        %674 = vmatpush1.bf16.msra.mxu0 0
        %675 = vmatprep.subr.bf16.mxu0 0
        %676 = vmatpush1.bf16.msra.mxu0 0
        %677 = vmatprep.mubr.bf16.mxu0 0
        %678 = vmatmul.mubr.bf16.gmra.mrb[0].mxu0 %v643
        %v679 = vpop.f32.mrb[0].mxu0
        %v680 = vadd.f32 0.0, %v679
        %v681 = vpop.f32.mrb[0].mxu0
        %v682 = vadd.f32 0.0, %v681
        %v683 = vpop.f32.mrb[0].mxu0
        %v684 = vadd.f32 0.0, %v683
        %v685 = vpop.f32.mrb[0].mxu0
        %v686 = vadd.f32 0.0, %v685
        %687 = vdwg.mxu0
        %688 = vmatprep.subr.bf16.mxu0 %v620
        %689 = vmatpush1.bf16.msra.mxu0 %v619
        %690 = vmatprep.subr.bf16.mxu0 %v626
        %691 = vmatpush1.bf16.msra.mxu0 %v625
        %692 = vmatprep.subr.bf16.mxu0 0
        %693 = vmatpush1.bf16.msra.mxu0 0
        %694 = vmatprep.subr.bf16.mxu0 0
        %695 = vmatpush1.bf16.msra.mxu0 0
        %696 = vmatprep.subr.bf16.mxu0 0
        %697 = vmatpush1.bf16.msra.mxu0 0
        %698 = vmatprep.subr.bf16.mxu0 0
        %699 = vmatpush1.bf16.msra.mxu0 0
        %700 = vmatprep.subr.bf16.mxu0 0
        %701 = vmatpush1.bf16.msra.mxu0 0
        %702 = vmatprep.subr.bf16.mxu0 0
        %703 = vmatpush1.bf16.msra.mxu0 0
        %704 = vmatprep.subr.bf16.mxu0 0
        %705 = vmatpush1.bf16.msra.mxu0 0
        %706 = vmatprep.subr.bf16.mxu0 0
        %707 = vmatpush1.bf16.msra.mxu0 0
        %708 = vmatprep.subr.bf16.mxu0 0
        %709 = vmatpush1.bf16.msra.mxu0 0
        %710 = vmatprep.subr.bf16.mxu0 0
        %711 = vmatpush1.bf16.msra.mxu0 0
        %712 = vmatprep.subr.bf16.mxu0 0
        %713 = vmatpush1.bf16.msra.mxu0 0
        %714 = vmatprep.subr.bf16.mxu0 0
        %715 = vmatpush1.bf16.msra.mxu0 0
        %716 = vmatprep.subr.bf16.mxu0 0
        %717 = vmatpush1.bf16.msra.mxu0 0
        %718 = vmatprep.subr.bf16.mxu0 0
        %719 = vmatpush1.bf16.msra.mxu0 0
        %720 = vmatprep.mubr.bf16.mxu0 0
        %721 = vmatmul.mubr.bf16.gmra.mrb[0].mxu0 %v643
        %v722 = vpop.f32.mrb[0].mxu0
        %v723 = vadd.f32 0.0, %v722
        %v724 = vpop.f32.mrb[0].mxu0
        %v725 = vadd.f32 0.0, %v724
        %v726 = vpop.f32.mrb[0].mxu0
        %v727 = vadd.f32 0.0, %v726
        %v728 = vpop.f32.mrb[0].mxu0
        %v729 = vadd.f32 0.0, %v728
        %730 = vdwg.mxu0
        %731 = vmatprep.subr.bf16.mxu0 %v622
        %732 = vmatpush1.bf16.msra.mxu0 %v621
        %733 = vmatprep.subr.bf16.mxu0 %v628
        %734 = vmatpush1.bf16.msra.mxu0 %v627
        %735 = vmatprep.subr.bf16.mxu0 0
        %736 = vmatpush1.bf16.msra.mxu0 0
        %737 = vmatprep.subr.bf16.mxu0 0
        %738 = vmatpush1.bf16.msra.mxu0 0
        %739 = vmatprep.subr.bf16.mxu0 0
        %740 = vmatpush1.bf16.msra.mxu0 0
        %741 = vmatprep.subr.bf16.mxu0 0
        %742 = vmatpush1.bf16.msra.mxu0 0
        %743 = vmatprep.subr.bf16.mxu0 0
        %744 = vmatpush1.bf16.msra.mxu0 0
        %745 = vmatprep.subr.bf16.mxu0 0
        %746 = vmatpush1.bf16.msra.mxu0 0
        %747 = vmatprep.subr.bf16.mxu0 0
        %748 = vmatpush1.bf16.msra.mxu0 0
        %749 = vmatprep.subr.bf16.mxu0 0
        %750 = vmatpush1.bf16.msra.mxu0 0
        %751 = vmatprep.subr.bf16.mxu0 0
        %752 = vmatpush1.bf16.msra.mxu0 0
        %753 = vmatprep.subr.bf16.mxu0 0
        %754 = vmatpush1.bf16.msra.mxu0 0
        %755 = vmatprep.subr.bf16.mxu0 0
        %756 = vmatpush1.bf16.msra.mxu0 0
        %757 = vmatprep.subr.bf16.mxu0 0
        %758 = vmatpush1.bf16.msra.mxu0 0
        %759 = vmatprep.subr.bf16.mxu0 0
        %760 = vmatpush1.bf16.msra.mxu0 0
        %761 = vmatprep.subr.bf16.mxu0 0
        %762 = vmatpush1.bf16.msra.mxu0 0
        %763 = vmatprep.mubr.bf16.mxu0 0
        %764 = vmatmul.mubr.bf16.gmra.mrb[0].mxu0 %v643
        %v765 = vpop.f32.mrb[0].mxu0
        %v766 = vadd.f32 0.0, %v765
        %v767 = vpop.f32.mrb[0].mxu0
        %v768 = vadd.f32 0.0, %v767
        %v769 = vpop.f32.mrb[0].mxu0
        %v770 = vadd.f32 0.0, %v769
        %v771 = vpop.f32.mrb[0].mxu0
        %v772 = vadd.f32 0.0, %v771
        %773 = vdwg.mxu0
        %v786 = vunpack.c.l.b16 %v479
        %v787 = vunpack.c.h.b16 %v479
        %v788 = vunpack.c.l.b16 %v480
        %v789 = vunpack.c.h.b16 %v480
        %v790 = vunpack.c.l.b16 %v481
        %v791 = vunpack.c.h.b16 %v481
        %v792 = vunpack.c.l.b16 %v482
        %v793 = vunpack.c.h.b16 %v482
        %v794 = vunpack.c.l.b16 %v483
        %v795 = vunpack.c.h.b16 %v483
        %v796 = vunpack.c.l.b16 %v484
        %v797 = vunpack.c.h.b16 %v484
        %v798 = vunpack.c.l.b16 %v485
        %v799 = vunpack.c.h.b16 %v485
        %v800 = vunpack.c.l.b16 %v486
        %v801 = vunpack.c.h.b16 %v486
        %v802 = vunpack.c.l.b16 %v487
        %v803 = vunpack.c.h.b16 %v487
        %v804 = vunpack.c.l.b16 %v488
        %v805 = vunpack.c.h.b16 %v488
        %v806 = vunpack.c.l.b16 %v489
        %v807 = vunpack.c.h.b16 %v489
        %v808 = vunpack.c.l.b16 %v490
        %v809 = vunpack.c.h.b16 %v490
        %v810 = vpack.c.b16 %v792, %v786
        %v811 = vpack.c.b16 %v793, %v787
        %v812 = vpack.c.b16 %v794, %v788
        %v813 = vpack.c.b16 %v795, %v789
        %v814 = vpack.c.b16 %v796, %v790
        %v815 = vpack.c.b16 %v797, %v791
        %v816 = vpack.c.b16 %v804, %v798
        %v817 = vpack.c.b16 %v805, %v799
        %v818 = vpack.c.b16 %v806, %v800
        %v819 = vpack.c.b16 %v807, %v801
        %v820 = vpack.c.b16 %v808, %v802
        %v821 = vpack.c.b16 %v809, %v803
        %v835 = vsel %vm641, %v478, 0
        %837 = vmatprep.subr.bf16.mxu0 %v811
        %838 = vmatpush1.bf16.msra.mxu0 %v810
        %839 = vmatprep.subr.bf16.mxu0 %v817
        %840 = vmatpush1.bf16.msra.mxu0 %v816
        %841 = vmatprep.subr.bf16.mxu0 0
        %842 = vmatpush1.bf16.msra.mxu0 0
        %843 = vmatprep.subr.bf16.mxu0 0
        %844 = vmatpush1.bf16.msra.mxu0 0
        %845 = vmatprep.subr.bf16.mxu0 0
        %846 = vmatpush1.bf16.msra.mxu0 0
        %847 = vmatprep.subr.bf16.mxu0 0
        %848 = vmatpush1.bf16.msra.mxu0 0
        %849 = vmatprep.subr.bf16.mxu0 0
        %850 = vmatpush1.bf16.msra.mxu0 0
        %851 = vmatprep.subr.bf16.mxu0 0
        %852 = vmatpush1.bf16.msra.mxu0 0
        %853 = vmatprep.subr.bf16.mxu0 0
        %854 = vmatpush1.bf16.msra.mxu0 0
        %855 = vmatprep.subr.bf16.mxu0 0
        %856 = vmatpush1.bf16.msra.mxu0 0
        %857 = vmatprep.subr.bf16.mxu0 0
        %858 = vmatpush1.bf16.msra.mxu0 0
        %859 = vmatprep.subr.bf16.mxu0 0
        %860 = vmatpush1.bf16.msra.mxu0 0
        %861 = vmatprep.subr.bf16.mxu0 0
        %862 = vmatpush1.bf16.msra.mxu0 0
        %863 = vmatprep.subr.bf16.mxu0 0
        %864 = vmatpush1.bf16.msra.mxu0 0
        %865 = vmatprep.subr.bf16.mxu0 0
        %866 = vmatpush1.bf16.msra.mxu0 0
        %867 = vmatprep.subr.bf16.mxu0 0
        %868 = vmatpush1.bf16.msra.mxu0 0
        %869 = vmatprep.mubr.bf16.mxu0 0
        %870 = vmatmul.mubr.bf16.gmra.mrb[0].mxu0 %v835
        %v871 = vpop.f32.mrb[0].mxu0
        %v872 = vadd.f32 %v680, %v871
        %v873 = vpop.f32.mrb[0].mxu0
        %v874 = vadd.f32 %v682, %v873
        %v875 = vpop.f32.mrb[0].mxu0
        %v876 = vadd.f32 %v684, %v875
        %v877 = vpop.f32.mrb[0].mxu0
        %v878 = vadd.f32 %v686, %v877
        %879 = vdwg.mxu0
        %880 = vmatprep.subr.bf16.mxu0 %v813
        %881 = vmatpush1.bf16.msra.mxu0 %v812
        %882 = vmatprep.subr.bf16.mxu0 %v819
        %883 = vmatpush1.bf16.msra.mxu0 %v818
        %884 = vmatprep.subr.bf16.mxu0 0
        %885 = vmatpush1.bf16.msra.mxu0 0
        %886 = vmatprep.subr.bf16.mxu0 0
        %887 = vmatpush1.bf16.msra.mxu0 0
        %888 = vmatprep.subr.bf16.mxu0 0
        %889 = vmatpush1.bf16.msra.mxu0 0
        %890 = vmatprep.subr.bf16.mxu0 0
        %891 = vmatpush1.bf16.msra.mxu0 0
        %892 = vmatprep.subr.bf16.mxu0 0
        %893 = vmatpush1.bf16.msra.mxu0 0
        %894 = vmatprep.subr.bf16.mxu0 0
        %895 = vmatpush1.bf16.msra.mxu0 0
        %896 = vmatprep.subr.bf16.mxu0 0
        %897 = vmatpush1.bf16.msra.mxu0 0
        %898 = vmatprep.subr.bf16.mxu0 0
        %899 = vmatpush1.bf16.msra.mxu0 0
        %900 = vmatprep.subr.bf16.mxu0 0
        %901 = vmatpush1.bf16.msra.mxu0 0
        %902 = vmatprep.subr.bf16.mxu0 0
        %903 = vmatpush1.bf16.msra.mxu0 0
        %904 = vmatprep.subr.bf16.mxu0 0
        %905 = vmatpush1.bf16.msra.mxu0 0
        %906 = vmatprep.subr.bf16.mxu0 0
        %907 = vmatpush1.bf16.msra.mxu0 0
        %908 = vmatprep.subr.bf16.mxu0 0
        %909 = vmatpush1.bf16.msra.mxu0 0
        %910 = vmatprep.subr.bf16.mxu0 0
        %911 = vmatpush1.bf16.msra.mxu0 0
        %912 = vmatprep.mubr.bf16.mxu0 0
        %913 = vmatmul.mubr.bf16.gmra.mrb[0].mxu0 %v835
        %v914 = vpop.f32.mrb[0].mxu0
        %v915 = vadd.f32 %v723, %v914
        %v916 = vpop.f32.mrb[0].mxu0
        %v917 = vadd.f32 %v725, %v916
        %v918 = vpop.f32.mrb[0].mxu0
        %v919 = vadd.f32 %v727, %v918
        %v920 = vpop.f32.mrb[0].mxu0
        %v921 = vadd.f32 %v729, %v920
        %922 = vdwg.mxu0
        %923 = vmatprep.subr.bf16.mxu0 %v815
        %924 = vmatpush1.bf16.msra.mxu0 %v814
        %925 = vmatprep.subr.bf16.mxu0 %v821
        %926 = vmatpush1.bf16.msra.mxu0 %v820
        %927 = vmatprep.subr.bf16.mxu0 0
        %928 = vmatpush1.bf16.msra.mxu0 0
        %929 = vmatprep.subr.bf16.mxu0 0
        %930 = vmatpush1.bf16.msra.mxu0 0
        %931 = vmatprep.subr.bf16.mxu0 0
        %932 = vmatpush1.bf16.msra.mxu0 0
        %933 = vmatprep.subr.bf16.mxu0 0
        %934 = vmatpush1.bf16.msra.mxu0 0
        %935 = vmatprep.subr.bf16.mxu0 0
        %936 = vmatpush1.bf16.msra.mxu0 0
        %937 = vmatprep.subr.bf16.mxu0 0
        %938 = vmatpush1.bf16.msra.mxu0 0
        %939 = vmatprep.subr.bf16.mxu0 0
        %940 = vmatpush1.bf16.msra.mxu0 0
        %941 = vmatprep.subr.bf16.mxu0 0
        %942 = vmatpush1.bf16.msra.mxu0 0
        %943 = vmatprep.subr.bf16.mxu0 0
        %944 = vmatpush1.bf16.msra.mxu0 0
        %945 = vmatprep.subr.bf16.mxu0 0
        %946 = vmatpush1.bf16.msra.mxu0 0
        %947 = vmatprep.subr.bf16.mxu0 0
        %948 = vmatpush1.bf16.msra.mxu0 0
        %949 = vmatprep.subr.bf16.mxu0 0
        %950 = vmatpush1.bf16.msra.mxu0 0
        %951 = vmatprep.subr.bf16.mxu0 0
        %952 = vmatpush1.bf16.msra.mxu0 0
        %953 = vmatprep.subr.bf16.mxu0 0
        %954 = vmatpush1.bf16.msra.mxu0 0
        %955 = vmatprep.mubr.bf16.mxu0 0
        %956 = vmatmul.mubr.bf16.gmra.mrb[0].mxu0 %v835
        %v957 = vpop.f32.mrb[0].mxu0
        %v958 = vadd.f32 %v766, %v957
        %v959 = vpop.f32.mrb[0].mxu0
        %v960 = vadd.f32 %v768, %v959
        %v961 = vpop.f32.mrb[0].mxu0
        %v962 = vadd.f32 %v770, %v961
        %v963 = vpop.f32.mrb[0].mxu0
        %v964 = vadd.f32 %v772, %v963
        %965 = vdwg.mxu0
        %966 = vset.pattern.permute.xlu0 2
        %967 = vperm.xlu0 %966, %v346
        %v968 = vpop.permute.xlu0 %967
        %969 = vset.pattern.permute.xlu0 2
        %970 = vperm.xlu0 %969, %v347
        %v971 = vpop.permute.xlu0 %970
        %vm972 = vcmp.eq.s32.totalorder %v968, %v343
        %vm973 = vcmp.eq.s32.totalorder %v971, %v343
        %v974 = vsel %vm972, 1.0, 0.0
        %v975 = vsel %vm973, 1.0, 0.0
        %v976 = vpack.c.bf16 %v975, %v974
        %977 = vset.pattern.permute.xlu0 2
        %978 = vperm.xlu0 %977, %v369
        %v979 = vpop.permute.xlu0 %978
        %981 = vset.pattern.permute.xlu0 2
        %982 = vperm.xlu0 %981, %v370
        %v983 = vpop.permute.xlu0 %982
        %v985 = vmul.f32 %v979, %v388
        %v986 = vmul.f32 %v983, %v388
        %v988 = vsel %vm415, %v976, 0
        %990 = vmatprep.subr.bf16.mxu0 0
        %991 = vmatpush1.bf16.msra.mxu0 %v407
        %992 = vmatprep.subr.bf16.mxu0 0
        %993 = vmatpush1.bf16.msra.mxu0 %v408
        %994 = vmatprep.subr.bf16.mxu0 0
        %995 = vmatpush1.bf16.msra.mxu0 %v409
        %996 = vmatprep.subr.bf16.mxu0 0
        %997 = vmatpush1.bf16.msra.mxu0 %v410
        %998 = vmatprep.subr.bf16.mxu0 0
        %999 = vmatpush1.bf16.msra.mxu0 0
        %1000 = vmatprep.subr.bf16.mxu0 0
        %1001 = vmatpush1.bf16.msra.mxu0 0
        %1002 = vmatprep.subr.bf16.mxu0 0
        %1003 = vmatpush1.bf16.msra.mxu0 0
        %1004 = vmatprep.subr.bf16.mxu0 0
        %1005 = vmatpush1.bf16.msra.mxu0 0
        %1006 = vmatprep.subr.bf16.mxu0 0
        %1007 = vmatpush1.bf16.msra.mxu0 0
        %1008 = vmatprep.subr.bf16.mxu0 0
        %1009 = vmatpush1.bf16.msra.mxu0 0
        %1010 = vmatprep.subr.bf16.mxu0 0
        %1011 = vmatpush1.bf16.msra.mxu0 0
        %1012 = vmatprep.subr.bf16.mxu0 0
        %1013 = vmatpush1.bf16.msra.mxu0 0
        %1014 = vmatprep.subr.bf16.mxu0 0
        %1015 = vmatpush1.bf16.msra.mxu0 0
        %1016 = vmatprep.subr.bf16.mxu0 0
        %1017 = vmatpush1.bf16.msra.mxu0 0
        %1018 = vmatprep.subr.bf16.mxu0 0
        %1019 = vmatpush1.bf16.msra.mxu0 0
        %1020 = vmatprep.subr.bf16.mxu0 0
        %1021 = vmatpush1.bf16.msra.mxu0 0
        %1022 = vmatprep.mubr.bf16.mxu0 0
        %1023 = vmatmul.mubr.bf16.gmra.mrb[0].mxu0 %v988
        %v1024 = vpop.f32.mrb[0].mxu0
        %v1025 = vadd.f32 %v985, %v1024
        %v1026 = vpop.f32.mrb[0].mxu0
        %v1027 = vpop.f32.mrb[0].mxu0
        %v1028 = vadd.f32 %v986, %v1027
        %v1029 = vpop.f32.mrb[0].mxu0
        %1030 = vdwg.mxu0
        %1031 = vset.pattern.permute.xlu0 2
        %1032 = vperm.xlu0 %1031, %v373
        %v1033 = vpop.permute.xlu0 %1032
        %1035 = vset.pattern.permute.xlu0 2
        %1036 = vperm.xlu0 %1035, %v374
        %v1037 = vpop.permute.xlu0 %1036
        %v1039 = vmul.f32 %v1033, %v473
        %v1040 = vmul.f32 %v1037, %v473
        %v1041 = vadd.f32 %v1025, %v1039
        %v1042 = vadd.f32 %v1028, %v1040
        %v1043 = vpack.c.bf16 %v1042, %v1041
        %v1044 = vld [vmem:[#allocation2 + $0xc0] sm:$0xff]
        %v1045 = vld [vmem:[#allocation2 + $0xc8] sm:$0xff]
        %v1046 = vld [vmem:[#allocation2 + $0xd0] sm:$0xff]
        %v1047 = vld [vmem:[#allocation2 + $0xd8] sm:$0xff]
        %v1048 = vld [vmem:[#allocation2 + $0xe0] sm:$0xff]
        %v1049 = vld [vmem:[#allocation2 + $0xe8] sm:$0xff]
        %v1050 = vld [vmem:[#allocation2 + $0xf0] sm:$0xff]
        %v1051 = vld [vmem:[#allocation2 + $0xf8] sm:$0xff]
        %v1052 = vld [vmem:[#allocation2 + $0x100] sm:$0xff]
        %v1053 = vld [vmem:[#allocation2 + $0x108] sm:$0xff]
        %v1054 = vld [vmem:[#allocation2 + $0x110] sm:$0xff]
        %v1055 = vld [vmem:[#allocation2 + $0x118] sm:$0xff]
        %v1068 = vunpack.c.l.b16 %v1044
        %v1069 = vunpack.c.h.b16 %v1044
        %v1070 = vunpack.c.l.b16 %v1045
        %v1071 = vunpack.c.h.b16 %v1045
        %v1072 = vunpack.c.l.b16 %v1046
        %v1073 = vunpack.c.h.b16 %v1046
        %v1074 = vunpack.c.l.b16 %v1047
        %v1075 = vunpack.c.h.b16 %v1047
        %v1076 = vunpack.c.l.b16 %v1048
        %v1077 = vunpack.c.h.b16 %v1048
        %v1078 = vunpack.c.l.b16 %v1049
        %v1079 = vunpack.c.h.b16 %v1049
        %v1080 = vunpack.c.l.b16 %v1050
        %v1081 = vunpack.c.h.b16 %v1050
        %v1082 = vunpack.c.l.b16 %v1051
        %v1083 = vunpack.c.h.b16 %v1051
        %v1084 = vunpack.c.l.b16 %v1052
        %v1085 = vunpack.c.h.b16 %v1052
        %v1086 = vunpack.c.l.b16 %v1053
        %v1087 = vunpack.c.h.b16 %v1053
        %v1088 = vunpack.c.l.b16 %v1054
        %v1089 = vunpack.c.h.b16 %v1054
        %v1090 = vunpack.c.l.b16 %v1055
        %v1091 = vunpack.c.h.b16 %v1055
        %v1092 = vpack.c.b16 %v1074, %v1068
        %v1093 = vpack.c.b16 %v1075, %v1069
        %v1094 = vpack.c.b16 %v1076, %v1070
        %v1095 = vpack.c.b16 %v1077, %v1071
        %v1096 = vpack.c.b16 %v1078, %v1072
        %v1097 = vpack.c.b16 %v1079, %v1073
        %v1098 = vpack.c.b16 %v1086, %v1080
        %v1099 = vpack.c.b16 %v1087, %v1081
        %v1100 = vpack.c.b16 %v1088, %v1082
        %v1101 = vpack.c.b16 %v1089, %v1083
        %v1102 = vpack.c.b16 %v1090, %v1084
        %v1103 = vpack.c.b16 %v1091, %v1085
        %v1117 = vsel %vm641, %v1043, 0
        %1119 = vmatprep.subr.bf16.mxu0 %v1093
        %1120 = vmatpush1.bf16.msra.mxu0 %v1092
        %1121 = vmatprep.subr.bf16.mxu0 %v1099
        %1122 = vmatpush1.bf16.msra.mxu0 %v1098
        %1123 = vmatprep.subr.bf16.mxu0 0
        %1124 = vmatpush1.bf16.msra.mxu0 0
        %1125 = vmatprep.subr.bf16.mxu0 0
        %1126 = vmatpush1.bf16.msra.mxu0 0
        %1127 = vmatprep.subr.bf16.mxu0 0
        %1128 = vmatpush1.bf16.msra.mxu0 0
        %1129 = vmatprep.subr.bf16.mxu0 0
        %1130 = vmatpush1.bf16.msra.mxu0 0
        %1131 = vmatprep.subr.bf16.mxu0 0
        %1132 = vmatpush1.bf16.msra.mxu0 0
        %1133 = vmatprep.subr.bf16.mxu0 0
        %1134 = vmatpush1.bf16.msra.mxu0 0
        %1135 = vmatprep.subr.bf16.mxu0 0
        %1136 = vmatpush1.bf16.msra.mxu0 0
        %1137 = vmatprep.subr.bf16.mxu0 0
        %1138 = vmatpush1.bf16.msra.mxu0 0
        %1139 = vmatprep.subr.bf16.mxu0 0
        %1140 = vmatpush1.bf16.msra.mxu0 0
        %1141 = vmatprep.subr.bf16.mxu0 0
        %1142 = vmatpush1.bf16.msra.mxu0 0
        %1143 = vmatprep.subr.bf16.mxu0 0
        %1144 = vmatpush1.bf16.msra.mxu0 0
        %1145 = vmatprep.subr.bf16.mxu0 0
        %1146 = vmatpush1.bf16.msra.mxu0 0
        %1147 = vmatprep.subr.bf16.mxu0 0
        %1148 = vmatpush1.bf16.msra.mxu0 0
        %1149 = vmatprep.subr.bf16.mxu0 0
        %1150 = vmatpush1.bf16.msra.mxu0 0
        %1151 = vmatprep.mubr.bf16.mxu0 0
        %1152 = vmatmul.mubr.bf16.gmra.mrb[0].mxu0 %v1117
        %v1153 = vpop.f32.mrb[0].mxu0
        %v1154 = vadd.f32 0.0, %v1153
        %v1155 = vpop.f32.mrb[0].mxu0
        %v1156 = vadd.f32 0.0, %v1155
        %v1157 = vpop.f32.mrb[0].mxu0
        %v1158 = vadd.f32 0.0, %v1157
        %v1159 = vpop.f32.mrb[0].mxu0
        %v1160 = vadd.f32 0.0, %v1159
        %1161 = vdwg.mxu0
        %1162 = vmatprep.subr.bf16.mxu0 %v1095
        %1163 = vmatpush1.bf16.msra.mxu0 %v1094
        %1164 = vmatprep.subr.bf16.mxu0 %v1101
        %1165 = vmatpush1.bf16.msra.mxu0 %v1100
        %1166 = vmatprep.subr.bf16.mxu0 0
        %1167 = vmatpush1.bf16.msra.mxu0 0
        %1168 = vmatprep.subr.bf16.mxu0 0
        %1169 = vmatpush1.bf16.msra.mxu0 0
        %1170 = vmatprep.subr.bf16.mxu0 0
        %1171 = vmatpush1.bf16.msra.mxu0 0
        %1172 = vmatprep.subr.bf16.mxu0 0
        %1173 = vmatpush1.bf16.msra.mxu0 0
        %1174 = vmatprep.subr.bf16.mxu0 0
        %1175 = vmatpush1.bf16.msra.mxu0 0
        %1176 = vmatprep.subr.bf16.mxu0 0
        %1177 = vmatpush1.bf16.msra.mxu0 0
        %1178 = vmatprep.subr.bf16.mxu0 0
        %1179 = vmatpush1.bf16.msra.mxu0 0
        %1180 = vmatprep.subr.bf16.mxu0 0
        %1181 = vmatpush1.bf16.msra.mxu0 0
        %1182 = vmatprep.subr.bf16.mxu0 0
        %1183 = vmatpush1.bf16.msra.mxu0 0
        %1184 = vmatprep.subr.bf16.mxu0 0
        %1185 = vmatpush1.bf16.msra.mxu0 0
        %1186 = vmatprep.subr.bf16.mxu0 0
        %1187 = vmatpush1.bf16.msra.mxu0 0
        %1188 = vmatprep.subr.bf16.mxu0 0
        %1189 = vmatpush1.bf16.msra.mxu0 0
        %1190 = vmatprep.subr.bf16.mxu0 0
        %1191 = vmatpush1.bf16.msra.mxu0 0
        %1192 = vmatprep.subr.bf16.mxu0 0
        %1193 = vmatpush1.bf16.msra.mxu0 0
        %1194 = vmatprep.mubr.bf16.mxu0 0
        %1195 = vmatmul.mubr.bf16.gmra.mrb[0].mxu0 %v1117
        %v1196 = vpop.f32.mrb[0].mxu0
        %v1197 = vadd.f32 0.0, %v1196
        %v1198 = vpop.f32.mrb[0].mxu0
        %v1199 = vadd.f32 0.0, %v1198
        %v1200 = vpop.f32.mrb[0].mxu0
        %v1201 = vadd.f32 0.0, %v1200
        %v1202 = vpop.f32.mrb[0].mxu0
        %v1203 = vadd.f32 0.0, %v1202
        %1204 = vdwg.mxu0
        %1205 = vmatprep.subr.bf16.mxu0 %v1097
        %1206 = vmatpush1.bf16.msra.mxu0 %v1096
        %1207 = vmatprep.subr.bf16.mxu0 %v1103
        %1208 = vmatpush1.bf16.msra.mxu0 %v1102
        %1209 = vmatprep.subr.bf16.mxu0 0
        %1210 = vmatpush1.bf16.msra.mxu0 0
        %1211 = vmatprep.subr.bf16.mxu0 0
        %1212 = vmatpush1.bf16.msra.mxu0 0
        %1213 = vmatprep.subr.bf16.mxu0 0
        %1214 = vmatpush1.bf16.msra.mxu0 0
        %1215 = vmatprep.subr.bf16.mxu0 0
        %1216 = vmatpush1.bf16.msra.mxu0 0
        %1217 = vmatprep.subr.bf16.mxu0 0
        %1218 = vmatpush1.bf16.msra.mxu0 0
        %1219 = vmatprep.subr.bf16.mxu0 0
        %1220 = vmatpush1.bf16.msra.mxu0 0
        %1221 = vmatprep.subr.bf16.mxu0 0
        %1222 = vmatpush1.bf16.msra.mxu0 0
        %1223 = vmatprep.subr.bf16.mxu0 0
        %1224 = vmatpush1.bf16.msra.mxu0 0
        %1225 = vmatprep.subr.bf16.mxu0 0
        %1226 = vmatpush1.bf16.msra.mxu0 0
        %1227 = vmatprep.subr.bf16.mxu0 0
        %1228 = vmatpush1.bf16.msra.mxu0 0
        %1229 = vmatprep.subr.bf16.mxu0 0
        %1230 = vmatpush1.bf16.msra.mxu0 0
        %1231 = vmatprep.subr.bf16.mxu0 0
        %1232 = vmatpush1.bf16.msra.mxu0 0
        %1233 = vmatprep.subr.bf16.mxu0 0
        %1234 = vmatpush1.bf16.msra.mxu0 0
        %1235 = vmatprep.subr.bf16.mxu0 0
        %1236 = vmatpush1.bf16.msra.mxu0 0
        %1237 = vmatprep.mubr.bf16.mxu0 0
        %1238 = vmatmul.mubr.bf16.gmra.mrb[0].mxu0 %v1117
        %v1239 = vpop.f32.mrb[0].mxu0
        %v1240 = vadd.f32 0.0, %v1239
        %v1241 = vpop.f32.mrb[0].mxu0
        %v1242 = vadd.f32 0.0, %v1241
        %v1243 = vpop.f32.mrb[0].mxu0
        %v1244 = vadd.f32 0.0, %v1243
        %v1245 = vpop.f32.mrb[0].mxu0
        %v1246 = vadd.f32 0.0, %v1245
        %1247 = vdwg.mxu0
        %v1248 = vadd.f32 %v872, %v1154
        %v1249 = vadd.f32 %v874, %v1156
        %v1250 = vadd.f32 %v915, %v1197
        %v1251 = vadd.f32 %v917, %v1199
        %v1252 = vadd.f32 %v958, %v1240
        %v1253 = vadd.f32 %v960, %v1242
        %v1254 = vadd.f32 %v876, %v1158
        %v1255 = vadd.f32 %v878, %v1160
        %v1256 = vadd.f32 %v919, %v1201
        %v1257 = vadd.f32 %v921, %v1203
        %v1258 = vadd.f32 %v962, %v1244
        %v1259 = vadd.f32 %v964, %v1246
        %1260 = vset.pattern.permute.xlu0 3
        %1261 = vperm.xlu0 %1260, %v346
        %v1262 = vpop.permute.xlu0 %1261
        %1263 = vset.pattern.permute.xlu0 3
        %1264 = vperm.xlu0 %1263, %v347
        %v1265 = vpop.permute.xlu0 %1264
        %vm1266 = vcmp.eq.s32.totalorder %v1262, %v343
        %vm1267 = vcmp.eq.s32.totalorder %v1265, %v343
        %v1268 = vsel %vm1266, 1.0, 0.0
        %v1269 = vsel %vm1267, 1.0, 0.0
        %v1270 = vpack.c.bf16 %v1269, %v1268
        %1271 = vset.pattern.permute.xlu0 3
        %1272 = vperm.xlu0 %1271, %v369
        %v1273 = vpop.permute.xlu0 %1272
        %1275 = vset.pattern.permute.xlu0 3
        %1276 = vperm.xlu0 %1275, %v370
        %v1277 = vpop.permute.xlu0 %1276
        %v1279 = vmul.f32 %v1273, %v388
        %v1280 = vmul.f32 %v1277, %v388
        %v1282 = vsel %vm415, %v1270, 0
        %1284 = vmatprep.subr.bf16.mxu0 0
        %1285 = vmatpush1.bf16.msra.mxu0 %v407
        %1286 = vmatprep.subr.bf16.mxu0 0
        %1287 = vmatpush1.bf16.msra.mxu0 %v408
        %1288 = vmatprep.subr.bf16.mxu0 0
        %1289 = vmatpush1.bf16.msra.mxu0 %v409
        %1290 = vmatprep.subr.bf16.mxu0 0
        %1291 = vmatpush1.bf16.msra.mxu0 %v410
        %1292 = vmatprep.subr.bf16.mxu0 0
        %1293 = vmatpush1.bf16.msra.mxu0 0
        %1294 = vmatprep.subr.bf16.mxu0 0
        %1295 = vmatpush1.bf16.msra.mxu0 0
        %1296 = vmatprep.subr.bf16.mxu0 0
        %1297 = vmatpush1.bf16.msra.mxu0 0
        %1298 = vmatprep.subr.bf16.mxu0 0
        %1299 = vmatpush1.bf16.msra.mxu0 0
        %1300 = vmatprep.subr.bf16.mxu0 0
        %1301 = vmatpush1.bf16.msra.mxu0 0
        %1302 = vmatprep.subr.bf16.mxu0 0
        %1303 = vmatpush1.bf16.msra.mxu0 0
        %1304 = vmatprep.subr.bf16.mxu0 0
        %1305 = vmatpush1.bf16.msra.mxu0 0
        %1306 = vmatprep.subr.bf16.mxu0 0
        %1307 = vmatpush1.bf16.msra.mxu0 0
        %1308 = vmatprep.subr.bf16.mxu0 0
        %1309 = vmatpush1.bf16.msra.mxu0 0
        %1310 = vmatprep.subr.bf16.mxu0 0
        %1311 = vmatpush1.bf16.msra.mxu0 0
        %1312 = vmatprep.subr.bf16.mxu0 0
        %1313 = vmatpush1.bf16.msra.mxu0 0
        %1314 = vmatprep.subr.bf16.mxu0 0
        %1315 = vmatpush1.bf16.msra.mxu0 0
        %1316 = vmatprep.mubr.bf16.mxu0 0
        %1317 = vmatmul.mubr.bf16.gmra.mrb[0].mxu0 %v1282
        %v1318 = vpop.f32.mrb[0].mxu0
        %v1319 = vadd.f32 %v1279, %v1318
        %v1320 = vpop.f32.mrb[0].mxu0
        %v1321 = vpop.f32.mrb[0].mxu0
        %v1322 = vadd.f32 %v1280, %v1321
        %v1323 = vpop.f32.mrb[0].mxu0
        %1324 = vdwg.mxu0
        %1325 = vset.pattern.permute.xlu0 3
        %1326 = vperm.xlu0 %1325, %v373
        %v1327 = vpop.permute.xlu0 %1326
        %1329 = vset.pattern.permute.xlu0 3
        %1330 = vperm.xlu0 %1329, %v374
        %v1331 = vpop.permute.xlu0 %1330
        %v1333 = vmul.f32 %v1327, %v473
        %v1334 = vmul.f32 %v1331, %v473
        %v1335 = vadd.f32 %v1319, %v1333
        %v1336 = vadd.f32 %v1322, %v1334
        %v1337 = vpack.c.bf16 %v1336, %v1335
        %v1338 = vld [vmem:[#allocation2 + $0x120] sm:$0xff]
        %v1339 = vld [vmem:[#allocation2 + $0x128] sm:$0xff]
        %v1340 = vld [vmem:[#allocation2 + $0x130] sm:$0xff]
        %v1341 = vld [vmem:[#allocation2 + $0x138] sm:$0xff]
        %v1342 = vld [vmem:[#allocation2 + $0x140] sm:$0xff]
        %v1343 = vld [vmem:[#allocation2 + $0x148] sm:$0xff]
        %v1344 = vld [vmem:[#allocation2 + $0x150] sm:$0xff]
        %v1345 = vld [vmem:[#allocation2 + $0x158] sm:$0xff]
        %v1346 = vld [vmem:[#allocation2 + $0x160] sm:$0xff]
        %v1347 = vld [vmem:[#allocation2 + $0x168] sm:$0xff]
        %v1348 = vld [vmem:[#allocation2 + $0x170] sm:$0xff]
        %v1349 = vld [vmem:[#allocation2 + $0x178] sm:$0xff]
        %v1362 = vunpack.c.l.b16 %v1338
        %v1363 = vunpack.c.h.b16 %v1338
        %v1364 = vunpack.c.l.b16 %v1339
        %v1365 = vunpack.c.h.b16 %v1339
        %v1366 = vunpack.c.l.b16 %v1340
        %v1367 = vunpack.c.h.b16 %v1340
        %v1368 = vunpack.c.l.b16 %v1341
        %v1369 = vunpack.c.h.b16 %v1341
        %v1370 = vunpack.c.l.b16 %v1342
        %v1371 = vunpack.c.h.b16 %v1342
        %v1372 = vunpack.c.l.b16 %v1343
        %v1373 = vunpack.c.h.b16 %v1343
        %v1374 = vunpack.c.l.b16 %v1344
        %v1375 = vunpack.c.h.b16 %v1344
        %v1376 = vunpack.c.l.b16 %v1345
        %v1377 = vunpack.c.h.b16 %v1345
        %v1378 = vunpack.c.l.b16 %v1346
        %v1379 = vunpack.c.h.b16 %v1346
        %v1380 = vunpack.c.l.b16 %v1347
        %v1381 = vunpack.c.h.b16 %v1347
        %v1382 = vunpack.c.l.b16 %v1348
        %v1383 = vunpack.c.h.b16 %v1348
        %v1384 = vunpack.c.l.b16 %v1349
        %v1385 = vunpack.c.h.b16 %v1349
        %v1386 = vpack.c.b16 %v1368, %v1362
        %v1387 = vpack.c.b16 %v1369, %v1363
        %v1388 = vpack.c.b16 %v1370, %v1364
        %v1389 = vpack.c.b16 %v1371, %v1365
        %v1390 = vpack.c.b16 %v1372, %v1366
        %v1391 = vpack.c.b16 %v1373, %v1367
        %v1392 = vpack.c.b16 %v1380, %v1374
        %v1393 = vpack.c.b16 %v1381, %v1375
        %v1394 = vpack.c.b16 %v1382, %v1376
        %v1395 = vpack.c.b16 %v1383, %v1377
        %v1396 = vpack.c.b16 %v1384, %v1378
        %v1397 = vpack.c.b16 %v1385, %v1379
        %v1411 = vsel %vm641, %v1337, 0
        %1413 = vmatprep.subr.bf16.mxu0 %v1387
        %1414 = vmatpush1.bf16.msra.mxu0 %v1386
        %1415 = vmatprep.subr.bf16.mxu0 %v1393
        %1416 = vmatpush1.bf16.msra.mxu0 %v1392
        %1417 = vmatprep.subr.bf16.mxu0 0
        %1418 = vmatpush1.bf16.msra.mxu0 0
        %1419 = vmatprep.subr.bf16.mxu0 0
        %1420 = vmatpush1.bf16.msra.mxu0 0
        %1421 = vmatprep.subr.bf16.mxu0 0
        %1422 = vmatpush1.bf16.msra.mxu0 0
        %1423 = vmatprep.subr.bf16.mxu0 0
        %1424 = vmatpush1.bf16.msra.mxu0 0
        %1425 = vmatprep.subr.bf16.mxu0 0
        %1426 = vmatpush1.bf16.msra.mxu0 0
        %1427 = vmatprep.subr.bf16.mxu0 0
        %1428 = vmatpush1.bf16.msra.mxu0 0
        %1429 = vmatprep.subr.bf16.mxu0 0
        %1430 = vmatpush1.bf16.msra.mxu0 0
        %1431 = vmatprep.subr.bf16.mxu0 0
        %1432 = vmatpush1.bf16.msra.mxu0 0
        %1433 = vmatprep.subr.bf16.mxu0 0
        %1434 = vmatpush1.bf16.msra.mxu0 0
        %1435 = vmatprep.subr.bf16.mxu0 0
        %1436 = vmatpush1.bf16.msra.mxu0 0
        %1437 = vmatprep.subr.bf16.mxu0 0
        %1438 = vmatpush1.bf16.msra.mxu0 0
        %1439 = vmatprep.subr.bf16.mxu0 0
        %1440 = vmatpush1.bf16.msra.mxu0 0
        %1441 = vmatprep.subr.bf16.mxu0 0
        %1442 = vmatpush1.bf16.msra.mxu0 0
        %1443 = vmatprep.subr.bf16.mxu0 0
        %1444 = vmatpush1.bf16.msra.mxu0 0
        %1445 = vmatprep.mubr.bf16.mxu0 0
        %1446 = vmatmul.mubr.bf16.gmra.mrb[0].mxu0 %v1411
        %v1447 = vpop.f32.mrb[0].mxu0
        %v1448 = vadd.f32 0.0, %v1447
        %v1449 = vpop.f32.mrb[0].mxu0
        %v1450 = vadd.f32 0.0, %v1449
        %v1451 = vpop.f32.mrb[0].mxu0
        %v1452 = vadd.f32 0.0, %v1451
        %v1453 = vpop.f32.mrb[0].mxu0
        %v1454 = vadd.f32 0.0, %v1453
        %1455 = vdwg.mxu0
        %1456 = vmatprep.subr.bf16.mxu0 %v1389
        %1457 = vmatpush1.bf16.msra.mxu0 %v1388
        %1458 = vmatprep.subr.bf16.mxu0 %v1395
        %1459 = vmatpush1.bf16.msra.mxu0 %v1394
        %1460 = vmatprep.subr.bf16.mxu0 0
        %1461 = vmatpush1.bf16.msra.mxu0 0
        %1462 = vmatprep.subr.bf16.mxu0 0
        %1463 = vmatpush1.bf16.msra.mxu0 0
        %1464 = vmatprep.subr.bf16.mxu0 0
        %1465 = vmatpush1.bf16.msra.mxu0 0
        %1466 = vmatprep.subr.bf16.mxu0 0
        %1467 = vmatpush1.bf16.msra.mxu0 0
        %1468 = vmatprep.subr.bf16.mxu0 0
        %1469 = vmatpush1.bf16.msra.mxu0 0
        %1470 = vmatprep.subr.bf16.mxu0 0
        %1471 = vmatpush1.bf16.msra.mxu0 0
        %1472 = vmatprep.subr.bf16.mxu0 0
        %1473 = vmatpush1.bf16.msra.mxu0 0
        %1474 = vmatprep.subr.bf16.mxu0 0
        %1475 = vmatpush1.bf16.msra.mxu0 0
        %1476 = vmatprep.subr.bf16.mxu0 0
        %1477 = vmatpush1.bf16.msra.mxu0 0
        %1478 = vmatprep.subr.bf16.mxu0 0
        %1479 = vmatpush1.bf16.msra.mxu0 0
        %1480 = vmatprep.subr.bf16.mxu0 0
        %1481 = vmatpush1.bf16.msra.mxu0 0
        %1482 = vmatprep.subr.bf16.mxu0 0
        %1483 = vmatpush1.bf16.msra.mxu0 0
        %1484 = vmatprep.subr.bf16.mxu0 0
        %1485 = vmatpush1.bf16.msra.mxu0 0
        %1486 = vmatprep.subr.bf16.mxu0 0
        %1487 = vmatpush1.bf16.msra.mxu0 0
        %1488 = vmatprep.mubr.bf16.mxu0 0
        %1489 = vmatmul.mubr.bf16.gmra.mrb[0].mxu0 %v1411
        %v1490 = vpop.f32.mrb[0].mxu0
        %v1491 = vadd.f32 0.0, %v1490
        %v1492 = vpop.f32.mrb[0].mxu0
        %v1493 = vadd.f32 0.0, %v1492
        %v1494 = vpop.f32.mrb[0].mxu0
        %v1495 = vadd.f32 0.0, %v1494
        %v1496 = vpop.f32.mrb[0].mxu0
        %v1497 = vadd.f32 0.0, %v1496
        %1498 = vdwg.mxu0
        %1499 = vmatprep.subr.bf16.mxu0 %v1391
        %1500 = vmatpush1.bf16.msra.mxu0 %v1390
        %1501 = vmatprep.subr.bf16.mxu0 %v1397
        %1502 = vmatpush1.bf16.msra.mxu0 %v1396
        %1503 = vmatprep.subr.bf16.mxu0 0
        %1504 = vmatpush1.bf16.msra.mxu0 0
        %1505 = vmatprep.subr.bf16.mxu0 0
        %1506 = vmatpush1.bf16.msra.mxu0 0
        %1507 = vmatprep.subr.bf16.mxu0 0
        %1508 = vmatpush1.bf16.msra.mxu0 0
        %1509 = vmatprep.subr.bf16.mxu0 0
        %1510 = vmatpush1.bf16.msra.mxu0 0
        %1511 = vmatprep.subr.bf16.mxu0 0
        %1512 = vmatpush1.bf16.msra.mxu0 0
        %1513 = vmatprep.subr.bf16.mxu0 0
        %1514 = vmatpush1.bf16.msra.mxu0 0
        %1515 = vmatprep.subr.bf16.mxu0 0
        %1516 = vmatpush1.bf16.msra.mxu0 0
        %1517 = vmatprep.subr.bf16.mxu0 0
        %1518 = vmatpush1.bf16.msra.mxu0 0
        %1519 = vmatprep.subr.bf16.mxu0 0
        %1520 = vmatpush1.bf16.msra.mxu0 0
        %1521 = vmatprep.subr.bf16.mxu0 0
        %1522 = vmatpush1.bf16.msra.mxu0 0
        %1523 = vmatprep.subr.bf16.mxu0 0
        %1524 = vmatpush1.bf16.msra.mxu0 0
        %1525 = vmatprep.subr.bf16.mxu0 0
        %1526 = vmatpush1.bf16.msra.mxu0 0
        %1527 = vmatprep.subr.bf16.mxu0 0
        %1528 = vmatpush1.bf16.msra.mxu0 0
        %1529 = vmatprep.subr.bf16.mxu0 0
        %1530 = vmatpush1.bf16.msra.mxu0 0
        %1531 = vmatprep.mubr.bf16.mxu0 0
        %1532 = vmatmul.mubr.bf16.gmra.mrb[0].mxu0 %v1411
        %v1533 = vpop.f32.mrb[0].mxu0
        %v1534 = vadd.f32 0.0, %v1533
        %v1535 = vpop.f32.mrb[0].mxu0
        %v1536 = vadd.f32 0.0, %v1535
        %v1537 = vpop.f32.mrb[0].mxu0
        %v1538 = vadd.f32 0.0, %v1537
        %v1539 = vpop.f32.mrb[0].mxu0
        %v1540 = vadd.f32 0.0, %v1539
        %1541 = vdwg.mxu0
        %v1542 = vadd.f32 %v1248, %v1448
        %v1543 = vadd.f32 %v1249, %v1450
        %v1544 = vadd.f32 %v1250, %v1491
        %v1545 = vadd.f32 %v1251, %v1493
        %v1546 = vadd.f32 %v1252, %v1534
        %v1547 = vadd.f32 %v1253, %v1536
        %v1548 = vadd.f32 %v1254, %v1452
        %v1549 = vadd.f32 %v1255, %v1454
        %v1550 = vadd.f32 %v1256, %v1495
        %v1551 = vadd.f32 %v1257, %v1497
        %v1552 = vadd.f32 %v1258, %v1538
        %v1553 = vadd.f32 %v1259, %v1540
        %1554 = vset.pattern.permute.xlu0 4
        %1555 = vperm.xlu0 %1554, %v346
        %v1556 = vpop.permute.xlu0 %1555
        %1557 = vset.pattern.permute.xlu0 4
        %1558 = vperm.xlu0 %1557, %v347
        %v1559 = vpop.permute.xlu0 %1558
        %vm1560 = vcmp.eq.s32.totalorder %v1556, %v343
        %vm1561 = vcmp.eq.s32.totalorder %v1559, %v343
        %v1562 = vsel %vm1560, 1.0, 0.0
        %v1563 = vsel %vm1561, 1.0, 0.0
        %v1564 = vpack.c.bf16 %v1563, %v1562
        %1565 = vset.pattern.permute.xlu0 4
        %1566 = vperm.xlu0 %1565, %v369
        %v1567 = vpop.permute.xlu0 %1566
        %1569 = vset.pattern.permute.xlu0 4
        %1570 = vperm.xlu0 %1569, %v370
        %v1571 = vpop.permute.xlu0 %1570
        %v1573 = vmul.f32 %v1567, %v388
        %v1574 = vmul.f32 %v1571, %v388
        %v1576 = vsel %vm415, %v1564, 0
        %1578 = vmatprep.subr.bf16.mxu0 0
        %1579 = vmatpush1.bf16.msra.mxu0 %v407
        %1580 = vmatprep.subr.bf16.mxu0 0
        %1581 = vmatpush1.bf16.msra.mxu0 %v408
        %1582 = vmatprep.subr.bf16.mxu0 0
        %1583 = vmatpush1.bf16.msra.mxu0 %v409
        %1584 = vmatprep.subr.bf16.mxu0 0
        %1585 = vmatpush1.bf16.msra.mxu0 %v410
        %1586 = vmatprep.subr.bf16.mxu0 0
        %1587 = vmatpush1.bf16.msra.mxu0 0
        %1588 = vmatprep.subr.bf16.mxu0 0
        %1589 = vmatpush1.bf16.msra.mxu0 0
        %1590 = vmatprep.subr.bf16.mxu0 0
        %1591 = vmatpush1.bf16.msra.mxu0 0
        %1592 = vmatprep.subr.bf16.mxu0 0
        %1593 = vmatpush1.bf16.msra.mxu0 0
        %1594 = vmatprep.subr.bf16.mxu0 0
        %1595 = vmatpush1.bf16.msra.mxu0 0
        %1596 = vmatprep.subr.bf16.mxu0 0
        %1597 = vmatpush1.bf16.msra.mxu0 0
        %1598 = vmatprep.subr.bf16.mxu0 0
        %1599 = vmatpush1.bf16.msra.mxu0 0
        %1600 = vmatprep.subr.bf16.mxu0 0
        %1601 = vmatpush1.bf16.msra.mxu0 0
        %1602 = vmatprep.subr.bf16.mxu0 0
        %1603 = vmatpush1.bf16.msra.mxu0 0
        %1604 = vmatprep.subr.bf16.mxu0 0
        %1605 = vmatpush1.bf16.msra.mxu0 0
        %1606 = vmatprep.subr.bf16.mxu0 0
        %1607 = vmatpush1.bf16.msra.mxu0 0
        %1608 = vmatprep.subr.bf16.mxu0 0
        %1609 = vmatpush1.bf16.msra.mxu0 0
        %1610 = vmatprep.mubr.bf16.mxu0 0
        %1611 = vmatmul.mubr.bf16.gmra.mrb[0].mxu0 %v1576
        %v1612 = vpop.f32.mrb[0].mxu0
        %v1613 = vadd.f32 %v1573, %v1612
        %v1614 = vpop.f32.mrb[0].mxu0
        %v1615 = vpop.f32.mrb[0].mxu0
        %v1616 = vadd.f32 %v1574, %v1615
        %v1617 = vpop.f32.mrb[0].mxu0
        %1618 = vdwg.mxu0
        %1619 = vset.pattern.permute.xlu0 4
        %1620 = vperm.xlu0 %1619, %v373
        %v1621 = vpop.permute.xlu0 %1620
        %1623 = vset.pattern.permute.xlu0 4
        %1624 = vperm.xlu0 %1623, %v374
        %v1625 = vpop.permute.xlu0 %1624
        %v1627 = vmul.f32 %v1621, %v473
        %v1628 = vmul.f32 %v1625, %v473
        %v1629 = vadd.f32 %v1613, %v1627
        %v1630 = vadd.f32 %v1616, %v1628
        %v1631 = vpack.c.bf16 %v1630, %v1629
        %v1632 = vld [vmem:[#allocation2 + $0x180] sm:$0xff]
        %v1633 = vld [vmem:[#allocation2 + $0x188] sm:$0xff]
        %v1634 = vld [vmem:[#allocation2 + $0x190] sm:$0xff]
        %v1635 = vld [vmem:[#allocation2 + $0x198] sm:$0xff]
        %v1636 = vld [vmem:[#allocation2 + $0x1a0] sm:$0xff]
        %v1637 = vld [vmem:[#allocation2 + $0x1a8] sm:$0xff]
        %v1638 = vld [vmem:[#allocation2 + $0x1b0] sm:$0xff]
        %v1639 = vld [vmem:[#allocation2 + $0x1b8] sm:$0xff]
        %v1640 = vld [vmem:[#allocation2 + $0x1c0] sm:$0xff]
        %v1641 = vld [vmem:[#allocation2 + $0x1c8] sm:$0xff]
        %v1642 = vld [vmem:[#allocation2 + $0x1d0] sm:$0xff]
        %v1643 = vld [vmem:[#allocation2 + $0x1d8] sm:$0xff]
        %v1656 = vunpack.c.l.b16 %v1632
        %v1657 = vunpack.c.h.b16 %v1632
        %v1658 = vunpack.c.l.b16 %v1633
        %v1659 = vunpack.c.h.b16 %v1633
        %v1660 = vunpack.c.l.b16 %v1634
        %v1661 = vunpack.c.h.b16 %v1634
        %v1662 = vunpack.c.l.b16 %v1635
        %v1663 = vunpack.c.h.b16 %v1635
        %v1664 = vunpack.c.l.b16 %v1636
        %v1665 = vunpack.c.h.b16 %v1636
        %v1666 = vunpack.c.l.b16 %v1637
        %v1667 = vunpack.c.h.b16 %v1637
        %v1668 = vunpack.c.l.b16 %v1638
        %v1669 = vunpack.c.h.b16 %v1638
        %v1670 = vunpack.c.l.b16 %v1639
        %v1671 = vunpack.c.h.b16 %v1639
        %v1672 = vunpack.c.l.b16 %v1640
        %v1673 = vunpack.c.h.b16 %v1640
        %v1674 = vunpack.c.l.b16 %v1641
        %v1675 = vunpack.c.h.b16 %v1641
        %v1676 = vunpack.c.l.b16 %v1642
        %v1677 = vunpack.c.h.b16 %v1642
        %v1678 = vunpack.c.l.b16 %v1643
        %v1679 = vunpack.c.h.b16 %v1643
        %v1680 = vpack.c.b16 %v1662, %v1656
        %v1681 = vpack.c.b16 %v1663, %v1657
        %v1682 = vpack.c.b16 %v1664, %v1658
        %v1683 = vpack.c.b16 %v1665, %v1659
        %v1684 = vpack.c.b16 %v1666, %v1660
        %v1685 = vpack.c.b16 %v1667, %v1661
        %v1686 = vpack.c.b16 %v1674, %v1668
        %v1687 = vpack.c.b16 %v1675, %v1669
        %v1688 = vpack.c.b16 %v1676, %v1670
        %v1689 = vpack.c.b16 %v1677, %v1671
        %v1690 = vpack.c.b16 %v1678, %v1672
        %v1691 = vpack.c.b16 %v1679, %v1673
        %v1705 = vsel %vm641, %v1631, 0
        %1707 = vmatprep.subr.bf16.mxu0 %v1681
        %1708 = vmatpush1.bf16.msra.mxu0 %v1680
        %1709 = vmatprep.subr.bf16.mxu0 %v1687
        %1710 = vmatpush1.bf16.msra.mxu0 %v1686
        %1711 = vmatprep.subr.bf16.mxu0 0
        %1712 = vmatpush1.bf16.msra.mxu0 0
        %1713 = vmatprep.subr.bf16.mxu0 0
        %1714 = vmatpush1.bf16.msra.mxu0 0
        %1715 = vmatprep.subr.bf16.mxu0 0
        %1716 = vmatpush1.bf16.msra.mxu0 0
        %1717 = vmatprep.subr.bf16.mxu0 0
        %1718 = vmatpush1.bf16.msra.mxu0 0
        %1719 = vmatprep.subr.bf16.mxu0 0
        %1720 = vmatpush1.bf16.msra.mxu0 0
        %1721 = vmatprep.subr.bf16.mxu0 0
        %1722 = vmatpush1.bf16.msra.mxu0 0
        %1723 = vmatprep.subr.bf16.mxu0 0
        %1724 = vmatpush1.bf16.msra.mxu0 0
        %1725 = vmatprep.subr.bf16.mxu0 0
        %1726 = vmatpush1.bf16.msra.mxu0 0
        %1727 = vmatprep.subr.bf16.mxu0 0
        %1728 = vmatpush1.bf16.msra.mxu0 0
        %1729 = vmatprep.subr.bf16.mxu0 0
        %1730 = vmatpush1.bf16.msra.mxu0 0
        %1731 = vmatprep.subr.bf16.mxu0 0
        %1732 = vmatpush1.bf16.msra.mxu0 0
        %1733 = vmatprep.subr.bf16.mxu0 0
        %1734 = vmatpush1.bf16.msra.mxu0 0
        %1735 = vmatprep.subr.bf16.mxu0 0
        %1736 = vmatpush1.bf16.msra.mxu0 0
        %1737 = vmatprep.subr.bf16.mxu0 0
        %1738 = vmatpush1.bf16.msra.mxu0 0
        %1739 = vmatprep.mubr.bf16.mxu0 0
        %1740 = vmatmul.mubr.bf16.gmra.mrb[0].mxu0 %v1705
        %v1741 = vpop.f32.mrb[0].mxu0
        %v1742 = vadd.f32 0.0, %v1741
        %v1743 = vpop.f32.mrb[0].mxu0
        %v1744 = vadd.f32 0.0, %v1743
        %v1745 = vpop.f32.mrb[0].mxu0
        %v1746 = vadd.f32 0.0, %v1745
        %v1747 = vpop.f32.mrb[0].mxu0
        %v1748 = vadd.f32 0.0, %v1747
        %1749 = vdwg.mxu0
        %1750 = vmatprep.subr.bf16.mxu0 %v1683
        %1751 = vmatpush1.bf16.msra.mxu0 %v1682
        %1752 = vmatprep.subr.bf16.mxu0 %v1689
        %1753 = vmatpush1.bf16.msra.mxu0 %v1688
        %1754 = vmatprep.subr.bf16.mxu0 0
        %1755 = vmatpush1.bf16.msra.mxu0 0
        %1756 = vmatprep.subr.bf16.mxu0 0
        %1757 = vmatpush1.bf16.msra.mxu0 0
        %1758 = vmatprep.subr.bf16.mxu0 0
        %1759 = vmatpush1.bf16.msra.mxu0 0
        %1760 = vmatprep.subr.bf16.mxu0 0
        %1761 = vmatpush1.bf16.msra.mxu0 0
        %1762 = vmatprep.subr.bf16.mxu0 0
        %1763 = vmatpush1.bf16.msra.mxu0 0
        %1764 = vmatprep.subr.bf16.mxu0 0
        %1765 = vmatpush1.bf16.msra.mxu0 0
        %1766 = vmatprep.subr.bf16.mxu0 0
        %1767 = vmatpush1.bf16.msra.mxu0 0
        %1768 = vmatprep.subr.bf16.mxu0 0
        %1769 = vmatpush1.bf16.msra.mxu0 0
        %1770 = vmatprep.subr.bf16.mxu0 0
        %1771 = vmatpush1.bf16.msra.mxu0 0
        %1772 = vmatprep.subr.bf16.mxu0 0
        %1773 = vmatpush1.bf16.msra.mxu0 0
        %1774 = vmatprep.subr.bf16.mxu0 0
        %1775 = vmatpush1.bf16.msra.mxu0 0
        %1776 = vmatprep.subr.bf16.mxu0 0
        %1777 = vmatpush1.bf16.msra.mxu0 0
        %1778 = vmatprep.subr.bf16.mxu0 0
        %1779 = vmatpush1.bf16.msra.mxu0 0
        %1780 = vmatprep.subr.bf16.mxu0 0
        %1781 = vmatpush1.bf16.msra.mxu0 0
        %1782 = vmatprep.mubr.bf16.mxu0 0
        %1783 = vmatmul.mubr.bf16.gmra.mrb[0].mxu0 %v1705
        %v1784 = vpop.f32.mrb[0].mxu0
        %v1785 = vadd.f32 0.0, %v1784
        %v1786 = vpop.f32.mrb[0].mxu0
        %v1787 = vadd.f32 0.0, %v1786
        %v1788 = vpop.f32.mrb[0].mxu0
        %v1789 = vadd.f32 0.0, %v1788
        %v1790 = vpop.f32.mrb[0].mxu0
        %v1791 = vadd.f32 0.0, %v1790
        %1792 = vdwg.mxu0
        %1793 = vmatprep.subr.bf16.mxu0 %v1685
        %1794 = vmatpush1.bf16.msra.mxu0 %v1684
        %1795 = vmatprep.subr.bf16.mxu0 %v1691
        %1796 = vmatpush1.bf16.msra.mxu0 %v1690
        %1797 = vmatprep.subr.bf16.mxu0 0
        %1798 = vmatpush1.bf16.msra.mxu0 0
        %1799 = vmatprep.subr.bf16.mxu0 0
        %1800 = vmatpush1.bf16.msra.mxu0 0
        %1801 = vmatprep.subr.bf16.mxu0 0
        %1802 = vmatpush1.bf16.msra.mxu0 0
        %1803 = vmatprep.subr.bf16.mxu0 0
        %1804 = vmatpush1.bf16.msra.mxu0 0
        %1805 = vmatprep.subr.bf16.mxu0 0
        %1806 = vmatpush1.bf16.msra.mxu0 0
        %1807 = vmatprep.subr.bf16.mxu0 0
        %1808 = vmatpush1.bf16.msra.mxu0 0
        %1809 = vmatprep.subr.bf16.mxu0 0
        %1810 = vmatpush1.bf16.msra.mxu0 0
        %1811 = vmatprep.subr.bf16.mxu0 0
        %1812 = vmatpush1.bf16.msra.mxu0 0
        %1813 = vmatprep.subr.bf16.mxu0 0
        %1814 = vmatpush1.bf16.msra.mxu0 0
        %1815 = vmatprep.subr.bf16.mxu0 0
        %1816 = vmatpush1.bf16.msra.mxu0 0
        %1817 = vmatprep.subr.bf16.mxu0 0
        %1818 = vmatpush1.bf16.msra.mxu0 0
        %1819 = vmatprep.subr.bf16.mxu0 0
        %1820 = vmatpush1.bf16.msra.mxu0 0
        %1821 = vmatprep.subr.bf16.mxu0 0
        %1822 = vmatpush1.bf16.msra.mxu0 0
        %1823 = vmatprep.subr.bf16.mxu0 0
        %1824 = vmatpush1.bf16.msra.mxu0 0
        %1825 = vmatprep.mubr.bf16.mxu0 0
        %1826 = vmatmul.mubr.bf16.gmra.mrb[0].mxu0 %v1705
        %v1827 = vpop.f32.mrb[0].mxu0
        %v1828 = vadd.f32 0.0, %v1827
        %v1829 = vpop.f32.mrb[0].mxu0
        %v1830 = vadd.f32 0.0, %v1829
        %v1831 = vpop.f32.mrb[0].mxu0
        %v1832 = vadd.f32 0.0, %v1831
        %v1833 = vpop.f32.mrb[0].mxu0
        %v1834 = vadd.f32 0.0, %v1833
        %1835 = vdwg.mxu0
        %v1836 = vadd.f32 %v1542, %v1742
        %v1837 = vadd.f32 %v1543, %v1744
        %v1838 = vadd.f32 %v1544, %v1785
        %v1839 = vadd.f32 %v1545, %v1787
        %v1840 = vadd.f32 %v1546, %v1828
        %v1841 = vadd.f32 %v1547, %v1830
        %v1842 = vadd.f32 %v1548, %v1746
        %v1843 = vadd.f32 %v1549, %v1748
        %v1844 = vadd.f32 %v1550, %v1789
        %v1845 = vadd.f32 %v1551, %v1791
        %v1846 = vadd.f32 %v1552, %v1832
        %v1847 = vadd.f32 %v1553, %v1834
        %1848 = vset.pattern.permute.xlu0 5
        %1849 = vperm.xlu0 %1848, %v346
        %v1850 = vpop.permute.xlu0 %1849
        %1851 = vset.pattern.permute.xlu0 5
        %1852 = vperm.xlu0 %1851, %v347
        %v1853 = vpop.permute.xlu0 %1852
        %vm1854 = vcmp.eq.s32.totalorder %v1850, %v343
        %vm1855 = vcmp.eq.s32.totalorder %v1853, %v343
        %v1856 = vsel %vm1854, 1.0, 0.0
        %v1857 = vsel %vm1855, 1.0, 0.0
        %v1858 = vpack.c.bf16 %v1857, %v1856
        %1859 = vset.pattern.permute.xlu0 5
        %1860 = vperm.xlu0 %1859, %v369
        %v1861 = vpop.permute.xlu0 %1860
        %1863 = vset.pattern.permute.xlu0 5
        %1864 = vperm.xlu0 %1863, %v370
        %v1865 = vpop.permute.xlu0 %1864
        %v1867 = vmul.f32 %v1861, %v388
        %v1868 = vmul.f32 %v1865, %v388
        %v1870 = vsel %vm415, %v1858, 0
        %1872 = vmatprep.subr.bf16.mxu0 0
        %1873 = vmatpush1.bf16.msra.mxu0 %v407
        %1874 = vmatprep.subr.bf16.mxu0 0
        %1875 = vmatpush1.bf16.msra.mxu0 %v408
        %1876 = vmatprep.subr.bf16.mxu0 0
        %1877 = vmatpush1.bf16.msra.mxu0 %v409
        %1878 = vmatprep.subr.bf16.mxu0 0
        %1879 = vmatpush1.bf16.msra.mxu0 %v410
        %1880 = vmatprep.subr.bf16.mxu0 0
        %1881 = vmatpush1.bf16.msra.mxu0 0
        %1882 = vmatprep.subr.bf16.mxu0 0
        %1883 = vmatpush1.bf16.msra.mxu0 0
        %1884 = vmatprep.subr.bf16.mxu0 0
        %1885 = vmatpush1.bf16.msra.mxu0 0
        %1886 = vmatprep.subr.bf16.mxu0 0
        %1887 = vmatpush1.bf16.msra.mxu0 0
        %1888 = vmatprep.subr.bf16.mxu0 0
        %1889 = vmatpush1.bf16.msra.mxu0 0
        %1890 = vmatprep.subr.bf16.mxu0 0
        %1891 = vmatpush1.bf16.msra.mxu0 0
        %1892 = vmatprep.subr.bf16.mxu0 0
        %1893 = vmatpush1.bf16.msra.mxu0 0
        %1894 = vmatprep.subr.bf16.mxu0 0
        %1895 = vmatpush1.bf16.msra.mxu0 0
        %1896 = vmatprep.subr.bf16.mxu0 0
        %1897 = vmatpush1.bf16.msra.mxu0 0
        %1898 = vmatprep.subr.bf16.mxu0 0
        %1899 = vmatpush1.bf16.msra.mxu0 0
        %1900 = vmatprep.subr.bf16.mxu0 0
        %1901 = vmatpush1.bf16.msra.mxu0 0
        %1902 = vmatprep.subr.bf16.mxu0 0
        %1903 = vmatpush1.bf16.msra.mxu0 0
        %1904 = vmatprep.mubr.bf16.mxu0 0
        %1905 = vmatmul.mubr.bf16.gmra.mrb[0].mxu0 %v1870
        %v1906 = vpop.f32.mrb[0].mxu0
        %v1907 = vadd.f32 %v1867, %v1906
        %v1908 = vpop.f32.mrb[0].mxu0
        %v1909 = vpop.f32.mrb[0].mxu0
        %v1910 = vadd.f32 %v1868, %v1909
        %v1911 = vpop.f32.mrb[0].mxu0
        %1912 = vdwg.mxu0
        %1913 = vset.pattern.permute.xlu0 5
        %1914 = vperm.xlu0 %1913, %v373
        %v1915 = vpop.permute.xlu0 %1914
        %1917 = vset.pattern.permute.xlu0 5
        %1918 = vperm.xlu0 %1917, %v374
        %v1919 = vpop.permute.xlu0 %1918
        %v1921 = vmul.f32 %v1915, %v473
        %v1922 = vmul.f32 %v1919, %v473
        %v1923 = vadd.f32 %v1907, %v1921
        %v1924 = vadd.f32 %v1910, %v1922
        %v1925 = vpack.c.bf16 %v1924, %v1923
        %v1926 = vld [vmem:[#allocation2 + $0x1e0] sm:$0xff]
        %v1927 = vld [vmem:[#allocation2 + $0x1e8] sm:$0xff]
        %v1928 = vld [vmem:[#allocation2 + $0x1f0] sm:$0xff]
        %v1929 = vld [vmem:[#allocation2 + $0x1f8] sm:$0xff]
        %v1930 = vld [vmem:[#allocation2 + $0x200] sm:$0xff]
        %v1931 = vld [vmem:[#allocation2 + $0x208] sm:$0xff]
        %v1932 = vld [vmem:[#allocation2 + $0x210] sm:$0xff]
        %v1933 = vld [vmem:[#allocation2 + $0x218] sm:$0xff]
        %v1934 = vld [vmem:[#allocation2 + $0x220] sm:$0xff]
        %v1935 = vld [vmem:[#allocation2 + $0x228] sm:$0xff]
        %v1936 = vld [vmem:[#allocation2 + $0x230] sm:$0xff]
        %v1937 = vld [vmem:[#allocation2 + $0x238] sm:$0xff]
        %v1950 = vunpack.c.l.b16 %v1926
        %v1951 = vunpack.c.h.b16 %v1926
        %v1952 = vunpack.c.l.b16 %v1927
        %v1953 = vunpack.c.h.b16 %v1927
        %v1954 = vunpack.c.l.b16 %v1928
        %v1955 = vunpack.c.h.b16 %v1928
        %v1956 = vunpack.c.l.b16 %v1929
        %v1957 = vunpack.c.h.b16 %v1929
        %v1958 = vunpack.c.l.b16 %v1930
        %v1959 = vunpack.c.h.b16 %v1930
        %v1960 = vunpack.c.l.b16 %v1931
        %v1961 = vunpack.c.h.b16 %v1931
        %v1962 = vunpack.c.l.b16 %v1932
        %v1963 = vunpack.c.h.b16 %v1932
        %v1964 = vunpack.c.l.b16 %v1933
        %v1965 = vunpack.c.h.b16 %v1933
        %v1966 = vunpack.c.l.b16 %v1934
        %v1967 = vunpack.c.h.b16 %v1934
        %v1968 = vunpack.c.l.b16 %v1935
        %v1969 = vunpack.c.h.b16 %v1935
        %v1970 = vunpack.c.l.b16 %v1936
        %v1971 = vunpack.c.h.b16 %v1936
        %v1972 = vunpack.c.l.b16 %v1937
        %v1973 = vunpack.c.h.b16 %v1937
        %v1974 = vpack.c.b16 %v1956, %v1950
        %v1975 = vpack.c.b16 %v1957, %v1951
        %v1976 = vpack.c.b16 %v1958, %v1952
        %v1977 = vpack.c.b16 %v1959, %v1953
        %v1978 = vpack.c.b16 %v1960, %v1954
        %v1979 = vpack.c.b16 %v1961, %v1955
        %v1980 = vpack.c.b16 %v1968, %v1962
        %v1981 = vpack.c.b16 %v1969, %v1963
        %v1982 = vpack.c.b16 %v1970, %v1964
        %v1983 = vpack.c.b16 %v1971, %v1965
        %v1984 = vpack.c.b16 %v1972, %v1966
        %v1985 = vpack.c.b16 %v1973, %v1967
        %v1999 = vsel %vm641, %v1925, 0
        %2001 = vmatprep.subr.bf16.mxu0 %v1975
        %2002 = vmatpush1.bf16.msra.mxu0 %v1974
        %2003 = vmatprep.subr.bf16.mxu0 %v1981
        %2004 = vmatpush1.bf16.msra.mxu0 %v1980
        %2005 = vmatprep.subr.bf16.mxu0 0
        %2006 = vmatpush1.bf16.msra.mxu0 0
        %2007 = vmatprep.subr.bf16.mxu0 0
        %2008 = vmatpush1.bf16.msra.mxu0 0
        %2009 = vmatprep.subr.bf16.mxu0 0
        %2010 = vmatpush1.bf16.msra.mxu0 0
        %2011 = vmatprep.subr.bf16.mxu0 0
        %2012 = vmatpush1.bf16.msra.mxu0 0
        %2013 = vmatprep.subr.bf16.mxu0 0
        %2014 = vmatpush1.bf16.msra.mxu0 0
        %2015 = vmatprep.subr.bf16.mxu0 0
        %2016 = vmatpush1.bf16.msra.mxu0 0
        %2017 = vmatprep.subr.bf16.mxu0 0
        %2018 = vmatpush1.bf16.msra.mxu0 0
        %2019 = vmatprep.subr.bf16.mxu0 0
        %2020 = vmatpush1.bf16.msra.mxu0 0
        %2021 = vmatprep.subr.bf16.mxu0 0
        %2022 = vmatpush1.bf16.msra.mxu0 0
        %2023 = vmatprep.subr.bf16.mxu0 0
        %2024 = vmatpush1.bf16.msra.mxu0 0
        %2025 = vmatprep.subr.bf16.mxu0 0
        %2026 = vmatpush1.bf16.msra.mxu0 0
        %2027 = vmatprep.subr.bf16.mxu0 0
        %2028 = vmatpush1.bf16.msra.mxu0 0
        %2029 = vmatprep.subr.bf16.mxu0 0
        %2030 = vmatpush1.bf16.msra.mxu0 0
        %2031 = vmatprep.subr.bf16.mxu0 0
        %2032 = vmatpush1.bf16.msra.mxu0 0
        %2033 = vmatprep.mubr.bf16.mxu0 0
        %2034 = vmatmul.mubr.bf16.gmra.mrb[0].mxu0 %v1999
        %v2035 = vpop.f32.mrb[0].mxu0
        %v2036 = vadd.f32 0.0, %v2035
        %v2037 = vpop.f32.mrb[0].mxu0
        %v2038 = vadd.f32 0.0, %v2037
        %v2039 = vpop.f32.mrb[0].mxu0
        %v2040 = vadd.f32 0.0, %v2039
        %v2041 = vpop.f32.mrb[0].mxu0
        %v2042 = vadd.f32 0.0, %v2041
        %2043 = vdwg.mxu0
        %2044 = vmatprep.subr.bf16.mxu0 %v1977
        %2045 = vmatpush1.bf16.msra.mxu0 %v1976
        %2046 = vmatprep.subr.bf16.mxu0 %v1983
        %2047 = vmatpush1.bf16.msra.mxu0 %v1982
        %2048 = vmatprep.subr.bf16.mxu0 0
        %2049 = vmatpush1.bf16.msra.mxu0 0
        %2050 = vmatprep.subr.bf16.mxu0 0
        %2051 = vmatpush1.bf16.msra.mxu0 0
        %2052 = vmatprep.subr.bf16.mxu0 0
        %2053 = vmatpush1.bf16.msra.mxu0 0
        %2054 = vmatprep.subr.bf16.mxu0 0
        %2055 = vmatpush1.bf16.msra.mxu0 0
        %2056 = vmatprep.subr.bf16.mxu0 0
        %2057 = vmatpush1.bf16.msra.mxu0 0
        %2058 = vmatprep.subr.bf16.mxu0 0
        %2059 = vmatpush1.bf16.msra.mxu0 0
        %2060 = vmatprep.subr.bf16.mxu0 0
        %2061 = vmatpush1.bf16.msra.mxu0 0
        %2062 = vmatprep.subr.bf16.mxu0 0
        %2063 = vmatpush1.bf16.msra.mxu0 0
        %2064 = vmatprep.subr.bf16.mxu0 0
        %2065 = vmatpush1.bf16.msra.mxu0 0
        %2066 = vmatprep.subr.bf16.mxu0 0
        %2067 = vmatpush1.bf16.msra.mxu0 0
        %2068 = vmatprep.subr.bf16.mxu0 0
        %2069 = vmatpush1.bf16.msra.mxu0 0
        %2070 = vmatprep.subr.bf16.mxu0 0
        %2071 = vmatpush1.bf16.msra.mxu0 0
        %2072 = vmatprep.subr.bf16.mxu0 0
        %2073 = vmatpush1.bf16.msra.mxu0 0
        %2074 = vmatprep.subr.bf16.mxu0 0
        %2075 = vmatpush1.bf16.msra.mxu0 0
        %2076 = vmatprep.mubr.bf16.mxu0 0
        %2077 = vmatmul.mubr.bf16.gmra.mrb[0].mxu0 %v1999
        %v2078 = vpop.f32.mrb[0].mxu0
        %v2079 = vadd.f32 0.0, %v2078
        %v2080 = vpop.f32.mrb[0].mxu0
        %v2081 = vadd.f32 0.0, %v2080
        %v2082 = vpop.f32.mrb[0].mxu0
        %v2083 = vadd.f32 0.0, %v2082
        %v2084 = vpop.f32.mrb[0].mxu0
        %v2085 = vadd.f32 0.0, %v2084
        %2086 = vdwg.mxu0
        %2087 = vmatprep.subr.bf16.mxu0 %v1979
        %2088 = vmatpush1.bf16.msra.mxu0 %v1978
        %2089 = vmatprep.subr.bf16.mxu0 %v1985
        %2090 = vmatpush1.bf16.msra.mxu0 %v1984
        %2091 = vmatprep.subr.bf16.mxu0 0
        %2092 = vmatpush1.bf16.msra.mxu0 0
        %2093 = vmatprep.subr.bf16.mxu0 0
        %2094 = vmatpush1.bf16.msra.mxu0 0
        %2095 = vmatprep.subr.bf16.mxu0 0
        %2096 = vmatpush1.bf16.msra.mxu0 0
        %2097 = vmatprep.subr.bf16.mxu0 0
        %2098 = vmatpush1.bf16.msra.mxu0 0
        %2099 = vmatprep.subr.bf16.mxu0 0
        %2100 = vmatpush1.bf16.msra.mxu0 0
        %2101 = vmatprep.subr.bf16.mxu0 0
        %2102 = vmatpush1.bf16.msra.mxu0 0
        %2103 = vmatprep.subr.bf16.mxu0 0
        %2104 = vmatpush1.bf16.msra.mxu0 0
        %2105 = vmatprep.subr.bf16.mxu0 0
        %2106 = vmatpush1.bf16.msra.mxu0 0
        %2107 = vmatprep.subr.bf16.mxu0 0
        %2108 = vmatpush1.bf16.msra.mxu0 0
        %2109 = vmatprep.subr.bf16.mxu0 0
        %2110 = vmatpush1.bf16.msra.mxu0 0
        %2111 = vmatprep.subr.bf16.mxu0 0
        %2112 = vmatpush1.bf16.msra.mxu0 0
        %2113 = vmatprep.subr.bf16.mxu0 0
        %2114 = vmatpush1.bf16.msra.mxu0 0
        %2115 = vmatprep.subr.bf16.mxu0 0
        %2116 = vmatpush1.bf16.msra.mxu0 0
        %2117 = vmatprep.subr.bf16.mxu0 0
        %2118 = vmatpush1.bf16.msra.mxu0 0
        %2119 = vmatprep.mubr.bf16.mxu0 0
        %2120 = vmatmul.mubr.bf16.gmra.mrb[0].mxu0 %v1999
        %v2121 = vpop.f32.mrb[0].mxu0
        %v2122 = vadd.f32 0.0, %v2121
        %v2123 = vpop.f32.mrb[0].mxu0
        %v2124 = vadd.f32 0.0, %v2123
        %v2125 = vpop.f32.mrb[0].mxu0
        %v2126 = vadd.f32 0.0, %v2125
        %v2127 = vpop.f32.mrb[0].mxu0
        %v2128 = vadd.f32 0.0, %v2127
        %2129 = vdwg.mxu0
        %v2130 = vadd.f32 %v1836, %v2036
        %v2131 = vadd.f32 %v1837, %v2038
        %v2132 = vadd.f32 %v1838, %v2079
        %v2133 = vadd.f32 %v1839, %v2081
        %v2134 = vadd.f32 %v1840, %v2122
        %v2135 = vadd.f32 %v1841, %v2124
        %v2136 = vadd.f32 %v1842, %v2040
        %v2137 = vadd.f32 %v1843, %v2042
        %v2138 = vadd.f32 %v1844, %v2083
        %v2139 = vadd.f32 %v1845, %v2085
        %v2140 = vadd.f32 %v1846, %v2126
        %v2141 = vadd.f32 %v1847, %v2128
        %2142 = vset.pattern.permute.xlu0 6
        %2143 = vperm.xlu0 %2142, %v346
        %v2144 = vpop.permute.xlu0 %2143
        %2145 = vset.pattern.permute.xlu0 6
        %2146 = vperm.xlu0 %2145, %v347
        %v2147 = vpop.permute.xlu0 %2146
        %vm2148 = vcmp.eq.s32.totalorder %v2144, %v343
        %vm2149 = vcmp.eq.s32.totalorder %v2147, %v343
        %v2150 = vsel %vm2148, 1.0, 0.0
        %v2151 = vsel %vm2149, 1.0, 0.0
        %v2152 = vpack.c.bf16 %v2151, %v2150
        %2153 = vset.pattern.permute.xlu0 6
        %2154 = vperm.xlu0 %2153, %v369
        %v2155 = vpop.permute.xlu0 %2154
        %2157 = vset.pattern.permute.xlu0 6
        %2158 = vperm.xlu0 %2157, %v370
        %v2159 = vpop.permute.xlu0 %2158
        %v2161 = vmul.f32 %v2155, %v388
        %v2162 = vmul.f32 %v2159, %v388
        %v2164 = vsel %vm415, %v2152, 0
        %2166 = vmatprep.subr.bf16.mxu0 0
        %2167 = vmatpush1.bf16.msra.mxu0 %v407
        %2168 = vmatprep.subr.bf16.mxu0 0
        %2169 = vmatpush1.bf16.msra.mxu0 %v408
        %2170 = vmatprep.subr.bf16.mxu0 0
        %2171 = vmatpush1.bf16.msra.mxu0 %v409
        %2172 = vmatprep.subr.bf16.mxu0 0
        %2173 = vmatpush1.bf16.msra.mxu0 %v410
        %2174 = vmatprep.subr.bf16.mxu0 0
        %2175 = vmatpush1.bf16.msra.mxu0 0
        %2176 = vmatprep.subr.bf16.mxu0 0
        %2177 = vmatpush1.bf16.msra.mxu0 0
        %2178 = vmatprep.subr.bf16.mxu0 0
        %2179 = vmatpush1.bf16.msra.mxu0 0
        %2180 = vmatprep.subr.bf16.mxu0 0
        %2181 = vmatpush1.bf16.msra.mxu0 0
        %2182 = vmatprep.subr.bf16.mxu0 0
        %2183 = vmatpush1.bf16.msra.mxu0 0
        %2184 = vmatprep.subr.bf16.mxu0 0
        %2185 = vmatpush1.bf16.msra.mxu0 0
        %2186 = vmatprep.subr.bf16.mxu0 0
        %2187 = vmatpush1.bf16.msra.mxu0 0
        %2188 = vmatprep.subr.bf16.mxu0 0
        %2189 = vmatpush1.bf16.msra.mxu0 0
        %2190 = vmatprep.subr.bf16.mxu0 0
        %2191 = vmatpush1.bf16.msra.mxu0 0
        %2192 = vmatprep.subr.bf16.mxu0 0
        %2193 = vmatpush1.bf16.msra.mxu0 0
        %2194 = vmatprep.subr.bf16.mxu0 0
        %2195 = vmatpush1.bf16.msra.mxu0 0
        %2196 = vmatprep.subr.bf16.mxu0 0
        %2197 = vmatpush1.bf16.msra.mxu0 0
        %2198 = vmatprep.mubr.bf16.mxu0 0
        %2199 = vmatmul.mubr.bf16.gmra.mrb[0].mxu0 %v2164
        %v2200 = vpop.f32.mrb[0].mxu0
        %v2201 = vadd.f32 %v2161, %v2200
        %v2202 = vpop.f32.mrb[0].mxu0
        %v2203 = vpop.f32.mrb[0].mxu0
        %v2204 = vadd.f32 %v2162, %v2203
        %v2205 = vpop.f32.mrb[0].mxu0
        %2206 = vdwg.mxu0
        %2207 = vset.pattern.permute.xlu0 6
        %2208 = vperm.xlu0 %2207, %v373
        %v2209 = vpop.permute.xlu0 %2208
        %2211 = vset.pattern.permute.xlu0 6
        %2212 = vperm.xlu0 %2211, %v374
        %v2213 = vpop.permute.xlu0 %2212
        %v2215 = vmul.f32 %v2209, %v473
        %v2216 = vmul.f32 %v2213, %v473
        %v2217 = vadd.f32 %v2201, %v2215
        %v2218 = vadd.f32 %v2204, %v2216
        %v2219 = vpack.c.bf16 %v2218, %v2217
        %v2220 = vld [vmem:[#allocation2 + $0x240] sm:$0xff]
        %v2221 = vld [vmem:[#allocation2 + $0x248] sm:$0xff]
        %v2222 = vld [vmem:[#allocation2 + $0x250] sm:$0xff]
        %v2223 = vld [vmem:[#allocation2 + $0x258] sm:$0xff]
        %v2224 = vld [vmem:[#allocation2 + $0x260] sm:$0xff]
        %v2225 = vld [vmem:[#allocation2 + $0x268] sm:$0xff]
        %v2226 = vld [vmem:[#allocation2 + $0x270] sm:$0xff]
        %v2227 = vld [vmem:[#allocation2 + $0x278] sm:$0xff]
        %v2228 = vld [vmem:[#allocation2 + $0x280] sm:$0xff]
        %v2229 = vld [vmem:[#allocation2 + $0x288] sm:$0xff]
        %v2230 = vld [vmem:[#allocation2 + $0x290] sm:$0xff]
        %v2231 = vld [vmem:[#allocation2 + $0x298] sm:$0xff]
        %v2244 = vunpack.c.l.b16 %v2220
        %v2245 = vunpack.c.h.b16 %v2220
        %v2246 = vunpack.c.l.b16 %v2221
        %v2247 = vunpack.c.h.b16 %v2221
        %v2248 = vunpack.c.l.b16 %v2222
        %v2249 = vunpack.c.h.b16 %v2222
        %v2250 = vunpack.c.l.b16 %v2223
        %v2251 = vunpack.c.h.b16 %v2223
        %v2252 = vunpack.c.l.b16 %v2224
        %v2253 = vunpack.c.h.b16 %v2224
        %v2254 = vunpack.c.l.b16 %v2225
        %v2255 = vunpack.c.h.b16 %v2225
        %v2256 = vunpack.c.l.b16 %v2226
        %v2257 = vunpack.c.h.b16 %v2226
        %v2258 = vunpack.c.l.b16 %v2227
        %v2259 = vunpack.c.h.b16 %v2227
        %v2260 = vunpack.c.l.b16 %v2228
        %v2261 = vunpack.c.h.b16 %v2228
        %v2262 = vunpack.c.l.b16 %v2229
        %v2263 = vunpack.c.h.b16 %v2229
        %v2264 = vunpack.c.l.b16 %v2230
        %v2265 = vunpack.c.h.b16 %v2230
        %v2266 = vunpack.c.l.b16 %v2231
        %v2267 = vunpack.c.h.b16 %v2231
        %v2268 = vpack.c.b16 %v2250, %v2244
        %v2269 = vpack.c.b16 %v2251, %v2245
        %v2270 = vpack.c.b16 %v2252, %v2246
        %v2271 = vpack.c.b16 %v2253, %v2247
        %v2272 = vpack.c.b16 %v2254, %v2248
        %v2273 = vpack.c.b16 %v2255, %v2249
        %v2274 = vpack.c.b16 %v2262, %v2256
        %v2275 = vpack.c.b16 %v2263, %v2257
        %v2276 = vpack.c.b16 %v2264, %v2258
        %v2277 = vpack.c.b16 %v2265, %v2259
        %v2278 = vpack.c.b16 %v2266, %v2260
        %v2279 = vpack.c.b16 %v2267, %v2261
        %v2293 = vsel %vm641, %v2219, 0
        %2295 = vmatprep.subr.bf16.mxu0 %v2269
        %2296 = vmatpush1.bf16.msra.mxu0 %v2268
        %2297 = vmatprep.subr.bf16.mxu0 %v2275
        %2298 = vmatpush1.bf16.msra.mxu0 %v2274
        %2299 = vmatprep.subr.bf16.mxu0 0
        %2300 = vmatpush1.bf16.msra.mxu0 0
        %2301 = vmatprep.subr.bf16.mxu0 0
        %2302 = vmatpush1.bf16.msra.mxu0 0
        %2303 = vmatprep.subr.bf16.mxu0 0
        %2304 = vmatpush1.bf16.msra.mxu0 0
        %2305 = vmatprep.subr.bf16.mxu0 0
        %2306 = vmatpush1.bf16.msra.mxu0 0
        %2307 = vmatprep.subr.bf16.mxu0 0
        %2308 = vmatpush1.bf16.msra.mxu0 0
        %2309 = vmatprep.subr.bf16.mxu0 0
        %2310 = vmatpush1.bf16.msra.mxu0 0
        %2311 = vmatprep.subr.bf16.mxu0 0
        %2312 = vmatpush1.bf16.msra.mxu0 0
        %2313 = vmatprep.subr.bf16.mxu0 0
        %2314 = vmatpush1.bf16.msra.mxu0 0
        %2315 = vmatprep.subr.bf16.mxu0 0
        %2316 = vmatpush1.bf16.msra.mxu0 0
        %2317 = vmatprep.subr.bf16.mxu0 0
        %2318 = vmatpush1.bf16.msra.mxu0 0
        %2319 = vmatprep.subr.bf16.mxu0 0
        %2320 = vmatpush1.bf16.msra.mxu0 0
        %2321 = vmatprep.subr.bf16.mxu0 0
        %2322 = vmatpush1.bf16.msra.mxu0 0
        %2323 = vmatprep.subr.bf16.mxu0 0
        %2324 = vmatpush1.bf16.msra.mxu0 0
        %2325 = vmatprep.subr.bf16.mxu0 0
        %2326 = vmatpush1.bf16.msra.mxu0 0
        %2327 = vmatprep.mubr.bf16.mxu0 0
        %2328 = vmatmul.mubr.bf16.gmra.mrb[0].mxu0 %v2293
        %v2329 = vpop.f32.mrb[0].mxu0
        %v2330 = vadd.f32 0.0, %v2329
        %v2331 = vpop.f32.mrb[0].mxu0
        %v2332 = vadd.f32 0.0, %v2331
        %v2333 = vpop.f32.mrb[0].mxu0
        %v2334 = vadd.f32 0.0, %v2333
        %v2335 = vpop.f32.mrb[0].mxu0
        %v2336 = vadd.f32 0.0, %v2335
        %2337 = vdwg.mxu0
        %2338 = vmatprep.subr.bf16.mxu0 %v2271
        %2339 = vmatpush1.bf16.msra.mxu0 %v2270
        %2340 = vmatprep.subr.bf16.mxu0 %v2277
        %2341 = vmatpush1.bf16.msra.mxu0 %v2276
        %2342 = vmatprep.subr.bf16.mxu0 0
        %2343 = vmatpush1.bf16.msra.mxu0 0
        %2344 = vmatprep.subr.bf16.mxu0 0
        %2345 = vmatpush1.bf16.msra.mxu0 0
        %2346 = vmatprep.subr.bf16.mxu0 0
        %2347 = vmatpush1.bf16.msra.mxu0 0
        %2348 = vmatprep.subr.bf16.mxu0 0
        %2349 = vmatpush1.bf16.msra.mxu0 0
        %2350 = vmatprep.subr.bf16.mxu0 0
        %2351 = vmatpush1.bf16.msra.mxu0 0
        %2352 = vmatprep.subr.bf16.mxu0 0
        %2353 = vmatpush1.bf16.msra.mxu0 0
        %2354 = vmatprep.subr.bf16.mxu0 0
        %2355 = vmatpush1.bf16.msra.mxu0 0
        %2356 = vmatprep.subr.bf16.mxu0 0
        %2357 = vmatpush1.bf16.msra.mxu0 0
        %2358 = vmatprep.subr.bf16.mxu0 0
        %2359 = vmatpush1.bf16.msra.mxu0 0
        %2360 = vmatprep.subr.bf16.mxu0 0
        %2361 = vmatpush1.bf16.msra.mxu0 0
        %2362 = vmatprep.subr.bf16.mxu0 0
        %2363 = vmatpush1.bf16.msra.mxu0 0
        %2364 = vmatprep.subr.bf16.mxu0 0
        %2365 = vmatpush1.bf16.msra.mxu0 0
        %2366 = vmatprep.subr.bf16.mxu0 0
        %2367 = vmatpush1.bf16.msra.mxu0 0
        %2368 = vmatprep.subr.bf16.mxu0 0
        %2369 = vmatpush1.bf16.msra.mxu0 0
        %2370 = vmatprep.mubr.bf16.mxu0 0
        %2371 = vmatmul.mubr.bf16.gmra.mrb[0].mxu0 %v2293
        %v2372 = vpop.f32.mrb[0].mxu0
        %v2373 = vadd.f32 0.0, %v2372
        %v2374 = vpop.f32.mrb[0].mxu0
        %v2375 = vadd.f32 0.0, %v2374
        %v2376 = vpop.f32.mrb[0].mxu0
        %v2377 = vadd.f32 0.0, %v2376
        %v2378 = vpop.f32.mrb[0].mxu0
        %v2379 = vadd.f32 0.0, %v2378
        %2380 = vdwg.mxu0
        %2381 = vmatprep.subr.bf16.mxu0 %v2273
        %2382 = vmatpush1.bf16.msra.mxu0 %v2272
        %2383 = vmatprep.subr.bf16.mxu0 %v2279
        %2384 = vmatpush1.bf16.msra.mxu0 %v2278
        %2385 = vmatprep.subr.bf16.mxu0 0
        %2386 = vmatpush1.bf16.msra.mxu0 0
        %2387 = vmatprep.subr.bf16.mxu0 0
        %2388 = vmatpush1.bf16.msra.mxu0 0
        %2389 = vmatprep.subr.bf16.mxu0 0
        %2390 = vmatpush1.bf16.msra.mxu0 0
        %2391 = vmatprep.subr.bf16.mxu0 0
        %2392 = vmatpush1.bf16.msra.mxu0 0
        %2393 = vmatprep.subr.bf16.mxu0 0
        %2394 = vmatpush1.bf16.msra.mxu0 0
        %2395 = vmatprep.subr.bf16.mxu0 0
        %2396 = vmatpush1.bf16.msra.mxu0 0
        %2397 = vmatprep.subr.bf16.mxu0 0
        %2398 = vmatpush1.bf16.msra.mxu0 0
        %2399 = vmatprep.subr.bf16.mxu0 0
        %2400 = vmatpush1.bf16.msra.mxu0 0
        %2401 = vmatprep.subr.bf16.mxu0 0
        %2402 = vmatpush1.bf16.msra.mxu0 0
        %2403 = vmatprep.subr.bf16.mxu0 0
        %2404 = vmatpush1.bf16.msra.mxu0 0
        %2405 = vmatprep.subr.bf16.mxu0 0
        %2406 = vmatpush1.bf16.msra.mxu0 0
        %2407 = vmatprep.subr.bf16.mxu0 0
        %2408 = vmatpush1.bf16.msra.mxu0 0
        %2409 = vmatprep.subr.bf16.mxu0 0
        %2410 = vmatpush1.bf16.msra.mxu0 0
        %2411 = vmatprep.subr.bf16.mxu0 0
        %2412 = vmatpush1.bf16.msra.mxu0 0
        %2413 = vmatprep.mubr.bf16.mxu0 0
        %2414 = vmatmul.mubr.bf16.gmra.mrb[0].mxu0 %v2293
        %v2415 = vpop.f32.mrb[0].mxu0
        %v2416 = vadd.f32 0.0, %v2415
        %v2417 = vpop.f32.mrb[0].mxu0
        %v2418 = vadd.f32 0.0, %v2417
        %v2419 = vpop.f32.mrb[0].mxu0
        %v2420 = vadd.f32 0.0, %v2419
        %v2421 = vpop.f32.mrb[0].mxu0
        %v2422 = vadd.f32 0.0, %v2421
        %2423 = vdwg.mxu0
        %v2424 = vadd.f32 %v2130, %v2330
        %v2425 = vadd.f32 %v2131, %v2332
        %v2426 = vadd.f32 %v2132, %v2373
        %v2427 = vadd.f32 %v2133, %v2375
        %v2428 = vadd.f32 %v2134, %v2416
        %v2429 = vadd.f32 %v2135, %v2418
        %v2430 = vadd.f32 %v2136, %v2334
        %v2431 = vadd.f32 %v2137, %v2336
        %v2432 = vadd.f32 %v2138, %v2377
        %v2433 = vadd.f32 %v2139, %v2379
        %v2434 = vadd.f32 %v2140, %v2420
        %v2435 = vadd.f32 %v2141, %v2422
        %v2436 = vld [vmem:[%s6] sm:$0x3f]
        %v2438 = vlaneseq
        %v2439 = vshrl.u32 %v2438, 7
        %v2440 = vsub.s32 0, %v2439
        %v2441 = vrot.slane %v2436, %v2440
        %v2442 = vlaneseq
        %v2443 = vshrl.u32 %v2442, 7
        %v2444 = vsub.s32 1, %v2443
        %v2445 = vrot.slane %v2436, %v2444
        %v2446 = vlaneseq
        %v2447 = vshrl.u32 %v2446, 7
        %v2448 = vsub.s32 2, %v2447
        %v2449 = vrot.slane %v2436, %v2448
        %v2450 = vlaneseq
        %v2451 = vshrl.u32 %v2450, 7
        %v2452 = vsub.s32 3, %v2451
        %v2453 = vrot.slane %v2436, %v2452
        %v2454 = vlaneseq
        %v2455 = vshrl.u32 %v2454, 7
        %v2456 = vsub.s32 4, %v2455
        %v2457 = vrot.slane %v2436, %v2456
        %v2458 = vlaneseq
        %v2459 = vshrl.u32 %v2458, 7
        %v2460 = vsub.s32 5, %v2459
        %v2461 = vrot.slane %v2436, %v2460
        %v2468 = vadd.f32 %v2424, %v2441
        %v2469 = vadd.f32 %v2425, %v2445
        %v2470 = vadd.f32 %v2426, %v2449
        %v2471 = vadd.f32 %v2427, %v2453
        %v2472 = vadd.f32 %v2428, %v2457
        %v2473 = vadd.f32 %v2429, %v2461
        %v2474 = vadd.f32 %v2430, %v2441
        %v2475 = vadd.f32 %v2431, %v2445
        %v2476 = vadd.f32 %v2432, %v2449
        %v2477 = vadd.f32 %v2433, %v2453
        %v2478 = vadd.f32 %v2434, %v2457
        %v2479 = vadd.f32 %v2435, %v2461
        %v2480 = vmax.f32 %v2468, 0.0
        %v2481 = vmax.f32 %v2469, 0.0
        %v2482 = vmax.f32 %v2470, 0.0
        %v2483 = vmax.f32 %v2471, 0.0
        %v2484 = vmax.f32 %v2472, 0.0
        %v2485 = vmax.f32 %v2473, 0.0
        %v2486 = vmax.f32 %v2474, 0.0
        %v2487 = vmax.f32 %v2475, 0.0
        %v2488 = vmax.f32 %v2476, 0.0
        %v2489 = vmax.f32 %v2477, 0.0
        %v2490 = vmax.f32 %v2478, 0.0
        %v2491 = vmax.f32 %v2479, 0.0
        %v2492 = vmax.f32 %v2480, %v2481
        %v2493 = vmax.f32 %v2486, %v2487
        %v2494 = vmax.f32 %v2492, %v2482
        %v2495 = vmax.f32 %v2493, %v2488
        %v2496 = vmax.f32 %v2494, %v2483
        %v2497 = vmax.f32 %v2495, %v2489
        %v2498 = vmax.f32 %v2496, %v2484
        %v2499 = vmax.f32 %v2497, %v2490
        %v2500 = vmax.f32 %v2498, %v2485
        %v2501 = vmax.f32 %v2499, %v2491
        %v2502 = vpack.c.bf16 %v2501, %v2500
        %v2504 = vunpack.c.l.b16 %v2502
        %v2505 = vunpack.c.h.b16 %v2502
        %v2506 = vpack.c.b16 %v2504, %v2504
        %v2507 = vpack.c.b16 %v2505, %v2505
        %2510 = vst [vmem:[%s339] sm:$0xf] %v2506
        %2511 = vst [vmem:[%s339 + $0x4] sm:$0xf] %v2507
        %s2512 = smul.u32 2, %s19
        %p2513 = scmp.lt.s32.totalorder %s2512, 3
        %s2514 = scalar_select %p2513, %s2512, 3
        %s2515 = smul.addr %s2514, 4
        %s2516 = scalar_lea.vmem %s7, %s2515
        // Predicated region
        $region53: #{conv_layer_pallas.1} parent=47 // pred_check
          %p2517 = pneg %p199
        $region54: #{conv_layer_pallas.1} parent=47 // pred_check_branch
          %2519 = sbr.rel (%p2517) target = $region56
        $region55: #{conv_layer_pallas.1} parent=47 // pred_region
          %s2520 = smul.u32 2, %s19
        $region56: #{conv_layer_pallas.1} parent=47 // pred_fallthru
          _
      $region48: #{conv_layer_pallas.1} parent=5 // pred_fallthru
        _
      %p2521 = scmp.le.s32.totalorder 2, %s14
      // Predicated region
      $region57: #{conv_layer_pallas.1} parent=5 // pred_check
        %p2522 = pneg %p2521
      $region58: #{conv_layer_pallas.1} parent=5 // pred_check_branch
        %2524 = sbr.rel (%p2522) target = $region60
      $region59: #{conv_layer_pallas.1} parent=5 // pred_region
        %s2525 = ssub.s32 %s14, 2
        // Predicated region
        $region61: #{conv_layer_pallas.1} parent=59 // pred_check
          %p2526 = pneg %p205
        $region62: #{conv_layer_pallas.1} parent=59 // pred_check_branch
          %2528 = sbr.rel (%p2526) target = $region64
        $region63: #{conv_layer_pallas.1} parent=59 // pred_region
          %s2529 = smul.u32 2, %s20
          %p2530 = scmp.lt.s32.totalorder %s2529, 3
          %s2531 = scalar_select %p2530, %s2529, 3
          %s2532 = smul.addr %s2531, 4
          %s2533 = scalar_lea.vmem %s7, %s2532
        $region64: #{conv_layer_pallas.1} parent=59 // pred_fallthru
          _
      $region60: #{conv_layer_pallas.1} parent=5 // pred_fallthru
        _
    $region6: #{conv_layer_pallas.1} parent=1 // loop_footer
      %s18 = sadd.s32 1, %s14
    $region7: #{conv_layer_pallas.1} parent=1 // loop_footer_branch
      %13 = sbr.rel target = $region3
    $region8: #{conv_layer_pallas.1} parent=1 // loop_exit
      _
    %2534 = vsyncpa [#allocation3], 1
    %s2535 = scalar_lea.sflag [#allocation3], 1
    %2536 = vsyncpa %s2535, 1

// kernel: conv_layer_pallas.1
$region0: #{conv_layer_pallas.1}
  #allocation0 [shape = 'u32[]', space=smem, size = 0x4, offset = 0x4, fixed_abs, tag = 'smem constant byte address 0x4 - core index']
  #allocation1 [shape = 'u32[144,128]{1,0:T(1,128)}', space=vmem, size = 0x12000, scoped, tag = 'internal scratch']
  %s0 = inlined_call_operand.vmem [shape: s32[32,7], index: 0, kind: input, shape index: {}]
  %s1 = inlined_call_operand.vmem [shape: s32[32,7], index: 1, kind: input, shape index: {}]
  %s2 = inlined_call_operand.vmem [shape: s32[32,7], index: 2, kind: input, shape index: {}]
  %s3 = inlined_call_operand.vmem [shape: bf16[64,32], index: 3, kind: input, shape index: {}]
  %s4 = inlined_call_operand.vmem [shape: f32[2,32], index: 4, kind: input, shape index: {}]
  %s5 = inlined_call_operand.hbm [shape: bf16[224,768], index: 5, kind: input, shape index: {}]
  %s6 = inlined_call_operand.vmem [shape: f32[1,768], index: 6, kind: input, shape index: {}]
  %s7 = inlined_call_operand.vmem [shape: bf16[32,128], index: 7, kind: output, shape index: {}]
  %s8 = sld [smem:[#allocation0]]
  $region65: #{conv_layer_pallas.1} parent=0
    _
  %s10 = ssub.s32 1, %s8
  %s11 = scalar_select 0, %s10, %s8
  $region1: #{conv_layer_pallas.1} parent=0
    #allocation2 [shape = 'u8[344064]{0}', space=vmem, size = 0x54000, scoped, tag = 'input window, operand 5, single buffered']
    #allocation3 [shape = 's32[2]{0}', space=sflag, size = 0x8, scoped, tag = 'scoped memory for conv_layer_pallas.1']
    %12 = vsyncpa [#allocation3], 0
    loop: start=0, step=1, limit=4
    $region2: #{conv_layer_pallas.1} parent=1 // loop_pre_header
      _
    $region3: #{conv_layer_pallas.1} parent=1 // loop_header
      %s14 = sphi 0, %s18
      %p15 = scmp.ge.s32.totalorder %s14, 4
      %s24 = sphi 0, %s26
      %s27 = sphi 0, %s24
      %s28 = sphi 0, %s27
      %s44 = sphi 0, %s28
      %s50 = sphi 0, %s52
      %s53 = sphi 0, %s50
      %s54 = sphi 0, %s53
      %s70 = sphi 0, %s54
      %s76 = sphi 0, %s78
      %s79 = sphi 0, %s76
      %s80 = sphi 0, %s79
      %s96 = sphi 0, %s80
      %s100 = sphi 0, %s100
      %s102 = sphi 0, %s100
      %s103 = sphi 0, %s102
      %s117 = sphi 0, %s103
      %s121 = sphi 0, %s121
      %s123 = sphi 0, %s121
      %s124 = sphi 0, %s123
      %s138 = sphi 0, %s124
      %s142 = sphi 0, %s142
      %s144 = sphi 0, %s142
      %s145 = sphi 0, %s144
      %s159 = sphi 0, %s145
      %s163 = sphi 0, %s163
      %s165 = sphi 0, %s163
      %s166 = sphi 0, %s165
      %s180 = sphi 0, %s166
      %s186 = sphi 0, %s188
      %s189 = sphi 0, %s186
      %s190 = sphi 0, %s189
      %s206 = sphi 0, %s190
    $region4: #{conv_layer_pallas.1} parent=1 // loop_header_branch
      %17 = sbr.rel (%p15) target = $region8
    $region5: #{conv_layer_pallas.1} parent=1 // loop_body
      %s19 = ssub.s32 %s14, 1
      %s20 = ssub.s32 %s14, 2
      %s21 = sadd.s32 %s14, 1
      %s22 = ssub.s32 %s14, %s21
      %p23 = scmp.eq.s32.totalorder %s22, 0
      %s25 = sadd.s32 %s24, 1
      %s26 = scalar_select %p23, %s24, %s25
      %p29 = pneg %p23
      %p30 = scmp.eq.s32.totalorder %s14, 1
      %p31 = por %p29, %p30
      %p32 = scmp.ne.s32.totalorder %s24, %s27
      %p33 = scmp.eq.s32.totalorder %s14, 0
      %p34 = por %p32, %p33
      %p35 = scmp.ne.s32.totalorder %s24, %s27
      %p36 = scmp.eq.s32.totalorder %s19, 1
      %p37 = por %p35, %p36
      %p38 = scmp.ne.s32.totalorder %s27, %s28
      %p39 = scmp.eq.s32.totalorder %s19, 0
      %p40 = por %p38, %p39
      %p41 = scmp.ne.s32.totalorder %s27, %s28
      %p42 = scmp.eq.s32.totalorder %s20, 1
      %p43 = por %p41, %p42
      %p45 = scmp.ne.s32.totalorder %s28, %s44
      %p46 = scmp.eq.s32.totalorder %s20, 0
      %p47 = por %p45, %p46
      %s48 = ssub.s32 %s14, %s21
      %p49 = scmp.eq.s32.totalorder %s48, 0
      %s51 = sadd.s32 %s50, 1
      %s52 = scalar_select %p49, %s50, %s51
      %p55 = pneg %p49
      %p56 = scmp.eq.s32.totalorder %s14, 1
      %p57 = por %p55, %p56
      %p58 = scmp.ne.s32.totalorder %s50, %s53
      %p59 = scmp.eq.s32.totalorder %s14, 0
      %p60 = por %p58, %p59
      %p61 = scmp.ne.s32.totalorder %s50, %s53
      %p62 = scmp.eq.s32.totalorder %s19, 1
      %p63 = por %p61, %p62
      %p64 = scmp.ne.s32.totalorder %s53, %s54
      %p65 = scmp.eq.s32.totalorder %s19, 0
      %p66 = por %p64, %p65
      %p67 = scmp.ne.s32.totalorder %s53, %s54
      %p68 = scmp.eq.s32.totalorder %s20, 1
      %p69 = por %p67, %p68
      %p71 = scmp.ne.s32.totalorder %s54, %s70
      %p72 = scmp.eq.s32.totalorder %s20, 0
      %p73 = por %p71, %p72
      %s74 = ssub.s32 %s14, %s21
      %p75 = scmp.eq.s32.totalorder %s74, 0
      %s77 = sadd.s32 %s76, 1
      %s78 = scalar_select %p75, %s76, %s77
      %p81 = pneg %p75
      %p82 = scmp.eq.s32.totalorder %s14, 1
      %p83 = por %p81, %p82
      %p84 = scmp.ne.s32.totalorder %s76, %s79
      %p85 = scmp.eq.s32.totalorder %s14, 0
      %p86 = por %p84, %p85
      %p87 = scmp.ne.s32.totalorder %s76, %s79
      %p88 = scmp.eq.s32.totalorder %s19, 1
      %p89 = por %p87, %p88
      %p90 = scmp.ne.s32.totalorder %s79, %s80
      %p91 = scmp.eq.s32.totalorder %s19, 0
      %p92 = por %p90, %p91
      %p93 = scmp.ne.s32.totalorder %s79, %s80
      %p94 = scmp.eq.s32.totalorder %s20, 1
      %p95 = por %p93, %p94
      %p97 = scmp.ne.s32.totalorder %s80, %s96
      %p98 = scmp.eq.s32.totalorder %s20, 0
      %p99 = por %p97, %p98
      %s101 = sadd.s32 %s100, 1
      %p104 = scmp.eq.s32.totalorder %s14, 1
      %p105 = scmp.ne.s32.totalorder %s100, %s102
      %p106 = scmp.eq.s32.totalorder %s14, 0
      %p107 = por %p105, %p106
      %p108 = scmp.ne.s32.totalorder %s100, %s102
      %p109 = scmp.eq.s32.totalorder %s19, 1
      %p110 = por %p108, %p109
      %p111 = scmp.ne.s32.totalorder %s102, %s103
      %p112 = scmp.eq.s32.totalorder %s19, 0
      %p113 = por %p111, %p112
      %p114 = scmp.ne.s32.totalorder %s102, %s103
      %p115 = scmp.eq.s32.totalorder %s20, 1
      %p116 = por %p114, %p115
      %p118 = scmp.ne.s32.totalorder %s103, %s117
      %p119 = scmp.eq.s32.totalorder %s20, 0
      %p120 = por %p118, %p119
      %s122 = sadd.s32 %s121, 1
      %p125 = scmp.eq.s32.totalorder %s14, 1
      %p126 = scmp.ne.s32.totalorder %s121, %s123
      %p127 = scmp.eq.s32.totalorder %s14, 0
      %p128 = por %p126, %p127
      %p129 = scmp.ne.s32.totalorder %s121, %s123
      %p130 = scmp.eq.s32.totalorder %s19, 1
      %p131 = por %p129, %p130
      %p132 = scmp.ne.s32.totalorder %s123, %s124
      %p133 = scmp.eq.s32.totalorder %s19, 0
      %p134 = por %p132, %p133
      %p135 = scmp.ne.s32.totalorder %s123, %s124
      %p136 = scmp.eq.s32.totalorder %s20, 1
      %p137 = por %p135, %p136
      %p139 = scmp.ne.s32.totalorder %s124, %s138
      %p140 = scmp.eq.s32.totalorder %s20, 0
      %p141 = por %p139, %p140
      %s143 = sadd.s32 %s142, 1
      %p146 = scmp.eq.s32.totalorder %s14, 1
      %p147 = scmp.ne.s32.totalorder %s142, %s144
      %p148 = scmp.eq.s32.totalorder %s14, 0
      %p149 = por %p147, %p148
      %p150 = scmp.ne.s32.totalorder %s142, %s144
      %p151 = scmp.eq.s32.totalorder %s19, 1
      %p152 = por %p150, %p151
      %p153 = scmp.ne.s32.totalorder %s144, %s145
      %p154 = scmp.eq.s32.totalorder %s19, 0
      %p155 = por %p153, %p154
      %p156 = scmp.ne.s32.totalorder %s144, %s145
      %p157 = scmp.eq.s32.totalorder %s20, 1
      %p158 = por %p156, %p157
      %p160 = scmp.ne.s32.totalorder %s145, %s159
      %p161 = scmp.eq.s32.totalorder %s20, 0
      %p162 = por %p160, %p161
      %s164 = sadd.s32 %s163, 1
      %p167 = scmp.eq.s32.totalorder %s14, 1
      %p168 = scmp.ne.s32.totalorder %s163, %s165
      %p169 = scmp.eq.s32.totalorder %s14, 0
      %p170 = por %p168, %p169
      %p171 = scmp.ne.s32.totalorder %s163, %s165
      %p172 = scmp.eq.s32.totalorder %s19, 1
      %p173 = por %p171, %p172
      %p174 = scmp.ne.s32.totalorder %s165, %s166
      %p175 = scmp.eq.s32.totalorder %s19, 0
      %p176 = por %p174, %p175
      %p177 = scmp.ne.s32.totalorder %s165, %s166
      %p178 = scmp.eq.s32.totalorder %s20, 1
      %p179 = por %p177, %p178
      %p181 = scmp.ne.s32.totalorder %s166, %s180
      %p182 = scmp.eq.s32.totalorder %s20, 0
      %p183 = por %p181, %p182
      %s184 = ssub.s32 %s14, %s21
      %p185 = scmp.eq.s32.totalorder %s184, 0
      %s187 = sadd.s32 %s186, 1
      %s188 = scalar_select %p185, %s186, %s187
      %p191 = pneg %p185
      %p192 = scmp.eq.s32.totalorder %s14, 1
      %p193 = por %p191, %p192
      %p194 = scmp.ne.s32.totalorder %s186, %s189
      %p195 = scmp.eq.s32.totalorder %s14, 0
      %p196 = por %p194, %p195
      %p197 = scmp.ne.s32.totalorder %s186, %s189
      %p198 = scmp.eq.s32.totalorder %s19, 1
      %p199 = por %p197, %p198
      %p200 = scmp.ne.s32.totalorder %s189, %s190
      %p201 = scmp.eq.s32.totalorder %s19, 0
      %p202 = por %p200, %p201
      %p203 = scmp.ne.s32.totalorder %s189, %s190
      %p204 = scmp.eq.s32.totalorder %s20, 1
      %p205 = por %p203, %p204
      %p207 = scmp.ne.s32.totalorder %s190, %s206
      %p208 = scmp.eq.s32.totalorder %s20, 0
      %p209 = por %p207, %p208
      %p210 = scmp.le.s32.totalorder 1, %s14
      %p211 = scmp.lt.s32.totalorder %s14, 3
      %p212 = pnand %p210, %p211
      %p213 = pneg %p212
      // Predicated region
      $region9: #{conv_layer_pallas.1} parent=5 // pred_check
        _
      $region10: #{conv_layer_pallas.1} parent=5 // pred_check_branch
        %215 = sbr.rel (%p212) target = $region12
      $region11: #{conv_layer_pallas.1} parent=5 // pred_region
        %s216 = ssub.s32 %s14, 1
        // Predicated region
        $region13: #{conv_layer_pallas.1} parent=11 // pred_check
          %p217 = pneg %p113
        $region14: #{conv_layer_pallas.1} parent=11 // pred_check_branch
          %219 = sbr.rel (%p217) target = $region16
        $region15: #{conv_layer_pallas.1} parent=11 // pred_region
          _
        $region16: #{conv_layer_pallas.1} parent=11 // pred_fallthru
          _
        // Predicated region
        $region17: #{conv_layer_pallas.1} parent=11 // pred_check
          %p220 = pneg %p134
        $region18: #{conv_layer_pallas.1} parent=11 // pred_check_branch
          %222 = sbr.rel (%p220) target = $region20
        $region19: #{conv_layer_pallas.1} parent=11 // pred_region
          _
        $region20: #{conv_layer_pallas.1} parent=11 // pred_fallthru
          _
        // Predicated region
        $region21: #{conv_layer_pallas.1} parent=11 // pred_check
          %p223 = pneg %p155
        $region22: #{conv_layer_pallas.1} parent=11 // pred_check_branch
          %225 = sbr.rel (%p223) target = $region24
        $region23: #{conv_layer_pallas.1} parent=11 // pred_region
          %s227 = ssub.s32 10752, 10752
          %228 = vsyncadd [#allocation3], %s227
          %s229 = sshll.u32 [#allocation2], 4
          %s230 = int_to_ptr.vmem [resolvable:$true] %s229
          %235 = dma.hbm_to_vmem [thread:$0]  %s5, 10752, %s230, [#allocation3], 384, 384, 24
        $region24: #{conv_layer_pallas.1} parent=11 // pred_fallthru
          _
        // Predicated region
        $region25: #{conv_layer_pallas.1} parent=11 // pred_check
          %p236 = pneg %p176
        $region26: #{conv_layer_pallas.1} parent=11 // pred_check_branch
          %238 = sbr.rel (%p236) target = $region28
        $region27: #{conv_layer_pallas.1} parent=11 // pred_region
          _
        $region28: #{conv_layer_pallas.1} parent=11 // pred_fallthru
          _
      $region12: #{conv_layer_pallas.1} parent=5 // pred_fallthru
        _
      %p239 = scmp.lt.s32.totalorder %s14, 2
      // Predicated region
      $region29: #{conv_layer_pallas.1} parent=5 // pred_check
        %p240 = pneg %p239
      $region30: #{conv_layer_pallas.1} parent=5 // pred_check_branch
        %242 = sbr.rel (%p240) target = $region32
      $region31: #{conv_layer_pallas.1} parent=5 // pred_region
        // Predicated region
        $region33: #{conv_layer_pallas.1} parent=31 // pred_check
          %p243 = pneg %p34
        $region34: #{conv_layer_pallas.1} parent=31 // pred_check_branch
          %245 = sbr.rel (%p243) target = $region36
        $region35: #{conv_layer_pallas.1} parent=31 // pred_region
          %s246 = smul.u32 2, %s14
          %p247 = scmp.lt.s32.totalorder %s246, 3
          %s248 = scalar_select %p247, %s246, 3
          %s249 = smul.addr %s248, 8
          %s250 = scalar_lea.vmem %s0, %s249
          %s251 = smul.u32 2, %s14
        $region36: #{conv_layer_pallas.1} parent=31 // pred_fallthru
          _
        // Predicated region
        $region37: #{conv_layer_pallas.1} parent=31 // pred_check
          %p252 = pneg %p60
        $region38: #{conv_layer_pallas.1} parent=31 // pred_check_branch
          %254 = sbr.rel (%p252) target = $region40
        $region39: #{conv_layer_pallas.1} parent=31 // pred_region
          %s255 = smul.u32 2, %s14
          %p256 = scmp.lt.s32.totalorder %s255, 3
          %s257 = scalar_select %p256, %s255, 3
          %s258 = smul.addr %s257, 8
          %s259 = scalar_lea.vmem %s1, %s258
          %s260 = smul.u32 2, %s14
        $region40: #{conv_layer_pallas.1} parent=31 // pred_fallthru
          _
        // Predicated region
        $region41: #{conv_layer_pallas.1} parent=31 // pred_check
          %p261 = pneg %p86
        $region42: #{conv_layer_pallas.1} parent=31 // pred_check_branch
          %263 = sbr.rel (%p261) target = $region44
        $region43: #{conv_layer_pallas.1} parent=31 // pred_region
          %s264 = smul.u32 2, %s14
          %p265 = scmp.lt.s32.totalorder %s264, 3
          %s266 = scalar_select %p265, %s264, 3
          %s267 = smul.addr %s266, 8
          %s268 = scalar_lea.vmem %s2, %s267
          %s269 = smul.u32 2, %s14
        $region44: #{conv_layer_pallas.1} parent=31 // pred_fallthru
          _
      $region32: #{conv_layer_pallas.1} parent=5 // pred_fallthru
        _
      %p270 = scmp.le.s32.totalorder 1, %s14
      %p271 = scmp.lt.s32.totalorder %s14, 3
      %p272 = pnand %p270, %p271
      %p273 = pneg %p272
      // Predicated region
      $region45: #{conv_layer_pallas.1} parent=5 // pred_check
        _
      $region46: #{conv_layer_pallas.1} parent=5 // pred_check_branch
        %275 = sbr.rel (%p272) target = $region48
      $region47: #{conv_layer_pallas.1} parent=5 // pred_region
        %s276 = ssub.s32 %s14, 1
        // Predicated region
        $region49: #{conv_layer_pallas.1} parent=47 // pred_check
          %p277 = pneg %p155
        $region50: #{conv_layer_pallas.1} parent=47 // pred_check_branch
          %279 = sbr.rel (%p277) target = $region52
        $region51: #{conv_layer_pallas.1} parent=47 // pred_region
          %280 = dma.done [#allocation3], 10752
        $region52: #{conv_layer_pallas.1} parent=47 // pred_fallthru
          _
        %s281 = smul.u32 2, %s19
        %p282 = scmp.lt.s32.totalorder %s281, 3
        %s283 = scalar_select %p282, %s281, 3
        %s284 = smul.addr %s283, 8
        %s285 = scalar_lea.vmem %s0, %s284
        %p286 = pneg %p40
        %p287 = pneg %p37
        %s288 = smul.u32 2, %s19
        %p289 = scmp.lt.s32.totalorder %s288, 3
        %s290 = scalar_select %p289, %s288, 3
        %s291 = smul.addr %s290, 8
        %s292 = scalar_lea.vmem %s1, %s291
        %p293 = pneg %p66
        %p294 = pneg %p63
        %s295 = smul.u32 2, %s19
        %p296 = scmp.lt.s32.totalorder %s295, 3
        %s297 = scalar_select %p296, %s295, 3
        %s298 = smul.addr %s297, 8
        %s299 = scalar_lea.vmem %s2, %s298
        %p300 = pneg %p92
        %p301 = pneg %p89
        %p302 = pneg %p113
        %p303 = pneg %p110
        %p304 = pneg %p134
        %p305 = pneg %p131
        %p306 = pneg %p155
        %p307 = pneg %p152
        %p308 = pneg %p176
        %p309 = pneg %p173
        %p310 = pneg %p202
        %p311 = pneg %p199
        %s312 = smul.u32 2, %s19
        %p313 = scmp.lt.s32.totalorder %s312, 3
        %s314 = scalar_select %p313, %s312, 3
        %s315 = smul.addr %s314, 4
        %s316 = scalar_lea.vmem %s7, %s315
        %s317 = smul.u32 2, %s19
        %p318 = scmp.lt.s32.totalorder %s317, 3
        %s319 = scalar_select %p318, %s317, 3
        %s320 = smul.addr %s319, 8
        %s321 = scalar_lea.vmem %s0, %s320
        %s322 = smul.u32 2, %s19
        %s323 = smul.u32 2, %s19
        %p324 = scmp.lt.s32.totalorder %s323, 3
        %s325 = scalar_select %p324, %s323, 3
        %s326 = smul.addr %s325, 8
        %s327 = scalar_lea.vmem %s1, %s326
        %s328 = smul.u32 2, %s19
        %s329 = smul.u32 2, %s19
        %p330 = scmp.lt.s32.totalorder %s329, 3
        %s331 = scalar_select %p330, %s329, 3
        %s332 = smul.addr %s331, 8
        %s333 = scalar_lea.vmem %s2, %s332
        %s334 = smul.u32 2, %s19
        %s335 = smul.u32 2, %s19
        %p336 = scmp.lt.s32.totalorder %s335, 3
        %s337 = scalar_select %p336, %s335, 3
        %s338 = smul.addr %s337, 4
        %s339 = scalar_lea.vmem %s7, %s338
        %s340 = smul.u32 2, %s19
        %v342 = vlaneseq
        %v343 = vand.u32 %v342, 127
        %v344 = vld [vmem:[%s4] sm:$0x1]
        %v345 = vld [vmem:[%s4 + $0x1] sm:$0x1]
        %v346 = vld [vmem:[%s321] sm:$0xff]
        %v347 = vld [vmem:[%s321 + $0x8] sm:$0xff]
        %348 = vset.pattern.permute.xlu0 0
        %349 = vperm.xlu0 %348, %v346
        %v350 = vpop.permute.xlu0 %349
        %351 = vset.pattern.permute.xlu0 0
        %352 = vperm.xlu0 %351, %v347
        %v353 = vpop.permute.xlu0 %352
        %vm354 = vcmp.eq.s32.totalorder %v350, %v343
        %vm355 = vcmp.eq.s32.totalorder %v353, %v343
        %v356 = vsel %vm354, 1.0, 0.0
        %v357 = vsel %vm355, 1.0, 0.0
        %v358 = vpack.c.bf16 %v357, %v356
        %v359 = vld [vmem:[%s3] sm:$0xf]
        %v360 = vld [vmem:[%s3 + $0x4] sm:$0xf]
        %v361 = vld [vmem:[%s3 + $0x8] sm:$0xf]
        %v362 = vld [vmem:[%s3 + $0xc] sm:$0xf]
        %v363 = vld [vmem:[%s3 + $0x10] sm:$0xf]
        %v364 = vld [vmem:[%s3 + $0x14] sm:$0xf]
        %v365 = vld [vmem:[%s3 + $0x18] sm:$0xf]
        %v366 = vld [vmem:[%s3 + $0x1c] sm:$0xf]
        %v367 = vld [vmem:[%s327] sm:$0xff]
        %v368 = vld [vmem:[%s327 + $0x8] sm:$0xff]
        %v369 = vcvt.s32.f32 %v367
        %v370 = vcvt.s32.f32 %v368
        %v371 = vld [vmem:[%s333] sm:$0xff]
        %v372 = vld [vmem:[%s333 + $0x8] sm:$0xff]
        %v373 = vcvt.s32.f32 %v371
        %v374 = vcvt.s32.f32 %v372
        %376 = vset.pattern.permute.xlu0 0
        %377 = vperm.xlu0 %376, %v369
        %v378 = vpop.permute.xlu0 %377
        %381 = vset.pattern.permute.xlu0 0
        %382 = vperm.xlu0 %381, %v370
        %v383 = vpop.permute.xlu0 %382
        %v385 = vlaneseq
        %v386 = vshrl.u32 %v385, 7
        %v387 = vsub.s32 0, %v386
        %v388 = vrot.slane %v344, %v387
        %v389 = vmul.f32 %v378, %v388
        %v390 = vmul.f32 %v383, %v388
        %v399 = vunpack.c.l.b16 %v359
        %v400 = vunpack.c.l.b16 %v360
        %v401 = vunpack.c.l.b16 %v361
        %v402 = vunpack.c.l.b16 %v362
        %v403 = vunpack.c.l.b16 %v363
        %v404 = vunpack.c.l.b16 %v364
        %v405 = vunpack.c.l.b16 %v365
        %v406 = vunpack.c.l.b16 %v366
        %v407 = vpack.c.b16 %v400, %v399
        %v408 = vpack.c.b16 %v402, %v401
        %v409 = vpack.c.b16 %v404, %v403
        %v410 = vpack.c.b16 %v406, %v405
        %vm415 = vcmask 523264
        %v417 = vsel %vm415, %v358, 0
        %419 = vmatprep.subr.bf16.mxu0 0
        %420 = vmatpush1.bf16.msra.mxu0 %v407
        %421 = vmatprep.subr.bf16.mxu0 0
        %422 = vmatpush1.bf16.msra.mxu0 %v408
        %423 = vmatprep.subr.bf16.mxu0 0
        %424 = vmatpush1.bf16.msra.mxu0 %v409
        %425 = vmatprep.subr.bf16.mxu0 0
        %426 = vmatpush1.bf16.msra.mxu0 %v410
        %427 = vmatprep.subr.bf16.mxu0 0
        %428 = vmatpush1.bf16.msra.mxu0 0
        %429 = vmatprep.subr.bf16.mxu0 0
        %430 = vmatpush1.bf16.msra.mxu0 0
        %431 = vmatprep.subr.bf16.mxu0 0
        %432 = vmatpush1.bf16.msra.mxu0 0
        %433 = vmatprep.subr.bf16.mxu0 0
        %434 = vmatpush1.bf16.msra.mxu0 0
        %435 = vmatprep.subr.bf16.mxu0 0
        %436 = vmatpush1.bf16.msra.mxu0 0
        %437 = vmatprep.subr.bf16.mxu0 0
        %438 = vmatpush1.bf16.msra.mxu0 0
        %439 = vmatprep.subr.bf16.mxu0 0
        %440 = vmatpush1.bf16.msra.mxu0 0
        %441 = vmatprep.subr.bf16.mxu0 0
        %442 = vmatpush1.bf16.msra.mxu0 0
        %443 = vmatprep.subr.bf16.mxu0 0
        %444 = vmatpush1.bf16.msra.mxu0 0
        %445 = vmatprep.subr.bf16.mxu0 0
        %446 = vmatpush1.bf16.msra.mxu0 0
        %447 = vmatprep.subr.bf16.mxu0 0
        %448 = vmatpush1.bf16.msra.mxu0 0
        %449 = vmatprep.subr.bf16.mxu0 0
        %450 = vmatpush1.bf16.msra.mxu0 0
        %451 = vmatprep.mubr.bf16.mxu0 0
        %452 = vmatmul.mubr.bf16.gmra.mrb[0].mxu0 %v417
        %v453 = vpop.f32.mrb[0].mxu0
        %v454 = vadd.f32 %v389, %v453
        %v455 = vpop.f32.mrb[0].mxu0
        %v456 = vpop.f32.mrb[0].mxu0
        %v457 = vadd.f32 %v390, %v456
        %v458 = vpop.f32.mrb[0].mxu0
        %459 = vdwg.mxu0
        %461 = vset.pattern.permute.xlu0 0
        %462 = vperm.xlu0 %461, %v373
        %v463 = vpop.permute.xlu0 %462
        %466 = vset.pattern.permute.xlu0 0
        %467 = vperm.xlu0 %466, %v374
        %v468 = vpop.permute.xlu0 %467
        %v470 = vlaneseq
        %v471 = vshrl.u32 %v470, 7
        %v472 = vsub.s32 0, %v471
        %v473 = vrot.slane %v345, %v472
        %v474 = vmul.f32 %v463, %v473
        %v475 = vmul.f32 %v468, %v473
        %v476 = vadd.f32 %v454, %v474
        %v477 = vadd.f32 %v457, %v475
        %v478 = vpack.c.bf16 %v477, %v476
        %v479 = vld [vmem:[#allocation2] sm:$0xff]
        %v480 = vld [vmem:[#allocation2 + $0x8] sm:$0xff]
        %v481 = vld [vmem:[#allocation2 + $0x10] sm:$0xff]
        %v482 = vld [vmem:[#allocation2 + $0x18] sm:$0xff]
        %v483 = vld [vmem:[#allocation2 + $0x20] sm:$0xff]
        %v484 = vld [vmem:[#allocation2 + $0x28] sm:$0xff]
        %v485 = vld [vmem:[#allocation2 + $0x30] sm:$0xff]
        %v486 = vld [vmem:[#allocation2 + $0x38] sm:$0xff]
        %v487 = vld [vmem:[#allocation2 + $0x40] sm:$0xff]
        %v488 = vld [vmem:[#allocation2 + $0x48] sm:$0xff]
        %v489 = vld [vmem:[#allocation2 + $0x50] sm:$0xff]
        %v490 = vld [vmem:[#allocation2 + $0x58] sm:$0xff]
        %491 = vset.pattern.permute.xlu0 1
        %492 = vperm.xlu0 %491, %v346
        %v493 = vpop.permute.xlu0 %492
        %494 = vset.pattern.permute.xlu0 1
        %495 = vperm.xlu0 %494, %v347
        %v496 = vpop.permute.xlu0 %495
        %vm497 = vcmp.eq.s32.totalorder %v493, %v343
        %vm498 = vcmp.eq.s32.totalorder %v496, %v343
        %v499 = vsel %vm497, 1.0, 0.0
        %v500 = vsel %vm498, 1.0, 0.0
        %v501 = vpack.c.bf16 %v500, %v499
        %502 = vset.pattern.permute.xlu0 1
        %503 = vperm.xlu0 %502, %v369
        %v504 = vpop.permute.xlu0 %503
        %506 = vset.pattern.permute.xlu0 1
        %507 = vperm.xlu0 %506, %v370
        %v508 = vpop.permute.xlu0 %507
        %v510 = vmul.f32 %v504, %v388
        %v511 = vmul.f32 %v508, %v388
        %v513 = vsel %vm415, %v501, 0
        %515 = vmatprep.subr.bf16.mxu0 0
        %516 = vmatpush1.bf16.msra.mxu0 %v407
        %517 = vmatprep.subr.bf16.mxu0 0
        %518 = vmatpush1.bf16.msra.mxu0 %v408
        %519 = vmatprep.subr.bf16.mxu0 0
        %520 = vmatpush1.bf16.msra.mxu0 %v409
        %521 = vmatprep.subr.bf16.mxu0 0
        %522 = vmatpush1.bf16.msra.mxu0 %v410
        %523 = vmatprep.subr.bf16.mxu0 0
        %524 = vmatpush1.bf16.msra.mxu0 0
        %525 = vmatprep.subr.bf16.mxu0 0
        %526 = vmatpush1.bf16.msra.mxu0 0
        %527 = vmatprep.subr.bf16.mxu0 0
        %528 = vmatpush1.bf16.msra.mxu0 0
        %529 = vmatprep.subr.bf16.mxu0 0
        %530 = vmatpush1.bf16.msra.mxu0 0
        %531 = vmatprep.subr.bf16.mxu0 0
        %532 = vmatpush1.bf16.msra.mxu0 0
        %533 = vmatprep.subr.bf16.mxu0 0
        %534 = vmatpush1.bf16.msra.mxu0 0
        %535 = vmatprep.subr.bf16.mxu0 0
        %536 = vmatpush1.bf16.msra.mxu0 0
        %537 = vmatprep.subr.bf16.mxu0 0
        %538 = vmatpush1.bf16.msra.mxu0 0
        %539 = vmatprep.subr.bf16.mxu0 0
        %540 = vmatpush1.bf16.msra.mxu0 0
        %541 = vmatprep.subr.bf16.mxu0 0
        %542 = vmatpush1.bf16.msra.mxu0 0
        %543 = vmatprep.subr.bf16.mxu0 0
        %544 = vmatpush1.bf16.msra.mxu0 0
        %545 = vmatprep.subr.bf16.mxu0 0
        %546 = vmatpush1.bf16.msra.mxu0 0
        %547 = vmatprep.mubr.bf16.mxu0 0
        %548 = vmatmul.mubr.bf16.gmra.mrb[0].mxu0 %v513
        %v549 = vpop.f32.mrb[0].mxu0
        %v550 = vadd.f32 %v510, %v549
        %v551 = vpop.f32.mrb[0].mxu0
        %v552 = vpop.f32.mrb[0].mxu0
        %v553 = vadd.f32 %v511, %v552
        %v554 = vpop.f32.mrb[0].mxu0
        %555 = vdwg.mxu0
        %556 = vset.pattern.permute.xlu0 1
        %557 = vperm.xlu0 %556, %v373
        %v558 = vpop.permute.xlu0 %557
        %560 = vset.pattern.permute.xlu0 1
        %561 = vperm.xlu0 %560, %v374
        %v562 = vpop.permute.xlu0 %561
        %v564 = vmul.f32 %v558, %v473
        %v565 = vmul.f32 %v562, %v473
        %v566 = vadd.f32 %v550, %v564
        %v567 = vadd.f32 %v553, %v565
        %v568 = vpack.c.bf16 %v567, %v566
        %v569 = vld [vmem:[#allocation2 + $0x60] sm:$0xff]
        %v570 = vld [vmem:[#allocation2 + $0x68] sm:$0xff]
        %v571 = vld [vmem:[#allocation2 + $0x70] sm:$0xff]
        %v572 = vld [vmem:[#allocation2 + $0x78] sm:$0xff]
        %v573 = vld [vmem:[#allocation2 + $0x80] sm:$0xff]
        %v574 = vld [vmem:[#allocation2 + $0x88] sm:$0xff]
        %v575 = vld [vmem:[#allocation2 + $0x90] sm:$0xff]
        %v576 = vld [vmem:[#allocation2 + $0x98] sm:$0xff]
        %v577 = vld [vmem:[#allocation2 + $0xa0] sm:$0xff]
        %v578 = vld [vmem:[#allocation2 + $0xa8] sm:$0xff]
        %v579 = vld [vmem:[#allocation2 + $0xb0] sm:$0xff]
        %v580 = vld [vmem:[#allocation2 + $0xb8] sm:$0xff]
        %v593 = vunpack.c.l.b16 %v569
        %v594 = vunpack.c.h.b16 %v569
        %v595 = vunpack.c.l.b16 %v570
        %v596 = vunpack.c.h.b16 %v570
        %v597 = vunpack.c.l.b16 %v571
        %v598 = vunpack.c.h.b16 %v571
        %v599 = vunpack.c.l.b16 %v572
        %v600 = vunpack.c.h.b16 %v572
        %v601 = vunpack.c.l.b16 %v573
        %v602 = vunpack.c.h.b16 %v573
        %v603 = vunpack.c.l.b16 %v574
        %v604 = vunpack.c.h.b16 %v574
        %v605 = vunpack.c.l.b16 %v575
        %v606 = vunpack.c.h.b16 %v575
        %v607 = vunpack.c.l.b16 %v576
        %v608 = vunpack.c.h.b16 %v576
        %v609 = vunpack.c.l.b16 %v577
        %v610 = vunpack.c.h.b16 %v577
        %v611 = vunpack.c.l.b16 %v578
        %v612 = vunpack.c.h.b16 %v578
        %v613 = vunpack.c.l.b16 %v579
        %v614 = vunpack.c.h.b16 %v579
        %v615 = vunpack.c.l.b16 %v580
        %v616 = vunpack.c.h.b16 %v580
        %v617 = vpack.c.b16 %v599, %v593
        %v618 = vpack.c.b16 %v600, %v594
        %v619 = vpack.c.b16 %v601, %v595
        %v620 = vpack.c.b16 %v602, %v596
        %v621 = vpack.c.b16 %v603, %v597
        %v622 = vpack.c.b16 %v604, %v598
        %v623 = vpack.c.b16 %v611, %v605
        %v624 = vpack.c.b16 %v612, %v606
        %v625 = vpack.c.b16 %v613, %v607
        %v626 = vpack.c.b16 %v614, %v608
        %v627 = vpack.c.b16 %v615, %v609
        %v628 = vpack.c.b16 %v616, %v610
        %vm641 = vcmask 261120
        %v643 = vsel %vm641, %v568, 0
        %645 = vmatprep.subr.bf16.mxu0 %v618
        %646 = vmatpush1.bf16.msra.mxu0 %v617
        %647 = vmatprep.subr.bf16.mxu0 %v624
        %648 = vmatpush1.bf16.msra.mxu0 %v623
        %649 = vmatprep.subr.bf16.mxu0 0
        %650 = vmatpush1.bf16.msra.mxu0 0
        %651 = vmatprep.subr.bf16.mxu0 0
        %652 = vmatpush1.bf16.msra.mxu0 0
        %653 = vmatprep.subr.bf16.mxu0 0
        %654 = vmatpush1.bf16.msra.mxu0 0
        %655 = vmatprep.subr.bf16.mxu0 0
        %656 = vmatpush1.bf16.msra.mxu0 0
        %657 = vmatprep.subr.bf16.mxu0 0
        %658 = vmatpush1.bf16.msra.mxu0 0
        %659 = vmatprep.subr.bf16.mxu0 0
        %660 = vmatpush1.bf16.msra.mxu0 0
        %661 = vmatprep.subr.bf16.mxu0 0
        %662 = vmatpush1.bf16.msra.mxu0 0
        %663 = vmatprep.subr.bf16.mxu0 0
        %664 = vmatpush1.bf16.msra.mxu0 0
        %665 = vmatprep.subr.bf16.mxu0 0
        %666 = vmatpush1.bf16.msra.mxu0 0
        %667 = vmatprep.subr.bf16.mxu0 0
        %668 = vmatpush1.bf16.msra.mxu0 0
        %669 = vmatprep.subr.bf16.mxu0 0
        %670 = vmatpush1.bf16.msra.mxu0 0
        %671 = vmatprep.subr.bf16.mxu0 0
        %672 = vmatpush1.bf16.msra.mxu0 0
        %673 = vmatprep.subr.bf16.mxu0 0
        %674 = vmatpush1.bf16.msra.mxu0 0
        %675 = vmatprep.subr.bf16.mxu0 0
        %676 = vmatpush1.bf16.msra.mxu0 0
        %677 = vmatprep.mubr.bf16.mxu0 0
        %678 = vmatmul.mubr.bf16.gmra.mrb[0].mxu0 %v643
        %v679 = vpop.f32.mrb[0].mxu0
        %v680 = vadd.f32 0.0, %v679
        %v681 = vpop.f32.mrb[0].mxu0
        %v682 = vadd.f32 0.0, %v681
        %v683 = vpop.f32.mrb[0].mxu0
        %v684 = vadd.f32 0.0, %v683
        %v685 = vpop.f32.mrb[0].mxu0
        %v686 = vadd.f32 0.0, %v685
        %687 = vdwg.mxu0
        %688 = vmatprep.subr.bf16.mxu0 %v620
        %689 = vmatpush1.bf16.msra.mxu0 %v619
        %690 = vmatprep.subr.bf16.mxu0 %v626
        %691 = vmatpush1.bf16.msra.mxu0 %v625
        %692 = vmatprep.subr.bf16.mxu0 0
        %693 = vmatpush1.bf16.msra.mxu0 0
        %694 = vmatprep.subr.bf16.mxu0 0
        %695 = vmatpush1.bf16.msra.mxu0 0
        %696 = vmatprep.subr.bf16.mxu0 0
        %697 = vmatpush1.bf16.msra.mxu0 0
        %698 = vmatprep.subr.bf16.mxu0 0
        %699 = vmatpush1.bf16.msra.mxu0 0
        %700 = vmatprep.subr.bf16.mxu0 0
        %701 = vmatpush1.bf16.msra.mxu0 0
        %702 = vmatprep.subr.bf16.mxu0 0
        %703 = vmatpush1.bf16.msra.mxu0 0
        %704 = vmatprep.subr.bf16.mxu0 0
        %705 = vmatpush1.bf16.msra.mxu0 0
        %706 = vmatprep.subr.bf16.mxu0 0
        %707 = vmatpush1.bf16.msra.mxu0 0
        %708 = vmatprep.subr.bf16.mxu0 0
        %709 = vmatpush1.bf16.msra.mxu0 0
        %710 = vmatprep.subr.bf16.mxu0 0
        %711 = vmatpush1.bf16.msra.mxu0 0
        %712 = vmatprep.subr.bf16.mxu0 0
        %713 = vmatpush1.bf16.msra.mxu0 0
        %714 = vmatprep.subr.bf16.mxu0 0
        %715 = vmatpush1.bf16.msra.mxu0 0
        %716 = vmatprep.subr.bf16.mxu0 0
        %717 = vmatpush1.bf16.msra.mxu0 0
        %718 = vmatprep.subr.bf16.mxu0 0
        %719 = vmatpush1.bf16.msra.mxu0 0
        %720 = vmatprep.mubr.bf16.mxu0 0
        %721 = vmatmul.mubr.bf16.gmra.mrb[0].mxu0 %v643
        %v722 = vpop.f32.mrb[0].mxu0
        %v723 = vadd.f32 0.0, %v722
        %v724 = vpop.f32.mrb[0].mxu0
        %v725 = vadd.f32 0.0, %v724
        %v726 = vpop.f32.mrb[0].mxu0
        %v727 = vadd.f32 0.0, %v726
        %v728 = vpop.f32.mrb[0].mxu0
        %v729 = vadd.f32 0.0, %v728
        %730 = vdwg.mxu0
        %731 = vmatprep.subr.bf16.mxu0 %v622
        %732 = vmatpush1.bf16.msra.mxu0 %v621
        %733 = vmatprep.subr.bf16.mxu0 %v628
        %734 = vmatpush1.bf16.msra.mxu0 %v627
        %735 = vmatprep.subr.bf16.mxu0 0
        %736 = vmatpush1.bf16.msra.mxu0 0
        %737 = vmatprep.subr.bf16.mxu0 0
        %738 = vmatpush1.bf16.msra.mxu0 0
        %739 = vmatprep.subr.bf16.mxu0 0
        %740 = vmatpush1.bf16.msra.mxu0 0
        %741 = vmatprep.subr.bf16.mxu0 0
        %742 = vmatpush1.bf16.msra.mxu0 0
        %743 = vmatprep.subr.bf16.mxu0 0
        %744 = vmatpush1.bf16.msra.mxu0 0
        %745 = vmatprep.subr.bf16.mxu0 0
        %746 = vmatpush1.bf16.msra.mxu0 0
        %747 = vmatprep.subr.bf16.mxu0 0
        %748 = vmatpush1.bf16.msra.mxu0 0
        %749 = vmatprep.subr.bf16.mxu0 0
        %750 = vmatpush1.bf16.msra.mxu0 0
        %751 = vmatprep.subr.bf16.mxu0 0
        %752 = vmatpush1.bf16.msra.mxu0 0
        %753 = vmatprep.subr.bf16.mxu0 0
        %754 = vmatpush1.bf16.msra.mxu0 0
        %755 = vmatprep.subr.bf16.mxu0 0
        %756 = vmatpush1.bf16.msra.mxu0 0
        %757 = vmatprep.subr.bf16.mxu0 0
        %758 = vmatpush1.bf16.msra.mxu0 0
        %759 = vmatprep.subr.bf16.mxu0 0
        %760 = vmatpush1.bf16.msra.mxu0 0
        %761 = vmatprep.subr.bf16.mxu0 0
        %762 = vmatpush1.bf16.msra.mxu0 0
        %763 = vmatprep.mubr.bf16.mxu0 0
        %764 = vmatmul.mubr.bf16.gmra.mrb[0].mxu0 %v643
        %v765 = vpop.f32.mrb[0].mxu0
        %v766 = vadd.f32 0.0, %v765
        %v767 = vpop.f32.mrb[0].mxu0
        %v768 = vadd.f32 0.0, %v767
        %v769 = vpop.f32.mrb[0].mxu0
        %v770 = vadd.f32 0.0, %v769
        %v771 = vpop.f32.mrb[0].mxu0
        %v772 = vadd.f32 0.0, %v771
        %773 = vdwg.mxu0
        %v786 = vunpack.c.l.b16 %v479
        %v787 = vunpack.c.h.b16 %v479
        %v788 = vunpack.c.l.b16 %v480
        %v789 = vunpack.c.h.b16 %v480
        %v790 = vunpack.c.l.b16 %v481
        %v791 = vunpack.c.h.b16 %v481
        %v792 = vunpack.c.l.b16 %v482
        %v793 = vunpack.c.h.b16 %v482
        %v794 = vunpack.c.l.b16 %v483
        %v795 = vunpack.c.h.b16 %v483
        %v796 = vunpack.c.l.b16 %v484
        %v797 = vunpack.c.h.b16 %v484
        %v798 = vunpack.c.l.b16 %v485
        %v799 = vunpack.c.h.b16 %v485
        %v800 = vunpack.c.l.b16 %v486
        %v801 = vunpack.c.h.b16 %v486
        %v802 = vunpack.c.l.b16 %v487
        %v803 = vunpack.c.h.b16 %v487
        %v804 = vunpack.c.l.b16 %v488
        %v805 = vunpack.c.h.b16 %v488
        %v806 = vunpack.c.l.b16 %v489
        %v807 = vunpack.c.h.b16 %v489
        %v808 = vunpack.c.l.b16 %v490
        %v809 = vunpack.c.h.b16 %v490
        %v810 = vpack.c.b16 %v792, %v786
        %v811 = vpack.c.b16 %v793, %v787
        %v812 = vpack.c.b16 %v794, %v788
        %v813 = vpack.c.b16 %v795, %v789
        %v814 = vpack.c.b16 %v796, %v790
        %v815 = vpack.c.b16 %v797, %v791
        %v816 = vpack.c.b16 %v804, %v798
        %v817 = vpack.c.b16 %v805, %v799
        %v818 = vpack.c.b16 %v806, %v800
        %v819 = vpack.c.b16 %v807, %v801
        %v820 = vpack.c.b16 %v808, %v802
        %v821 = vpack.c.b16 %v809, %v803
        %v835 = vsel %vm641, %v478, 0
        %837 = vmatprep.subr.bf16.mxu0 %v811
        %838 = vmatpush1.bf16.msra.mxu0 %v810
        %839 = vmatprep.subr.bf16.mxu0 %v817
        %840 = vmatpush1.bf16.msra.mxu0 %v816
        %841 = vmatprep.subr.bf16.mxu0 0
        %842 = vmatpush1.bf16.msra.mxu0 0
        %843 = vmatprep.subr.bf16.mxu0 0
        %844 = vmatpush1.bf16.msra.mxu0 0
        %845 = vmatprep.subr.bf16.mxu0 0
        %846 = vmatpush1.bf16.msra.mxu0 0
        %847 = vmatprep.subr.bf16.mxu0 0
        %848 = vmatpush1.bf16.msra.mxu0 0
        %849 = vmatprep.subr.bf16.mxu0 0
        %850 = vmatpush1.bf16.msra.mxu0 0
        %851 = vmatprep.subr.bf16.mxu0 0
        %852 = vmatpush1.bf16.msra.mxu0 0
        %853 = vmatprep.subr.bf16.mxu0 0
        %854 = vmatpush1.bf16.msra.mxu0 0
        %855 = vmatprep.subr.bf16.mxu0 0
        %856 = vmatpush1.bf16.msra.mxu0 0
        %857 = vmatprep.subr.bf16.mxu0 0
        %858 = vmatpush1.bf16.msra.mxu0 0
        %859 = vmatprep.subr.bf16.mxu0 0
        %860 = vmatpush1.bf16.msra.mxu0 0
        %861 = vmatprep.subr.bf16.mxu0 0
        %862 = vmatpush1.bf16.msra.mxu0 0
        %863 = vmatprep.subr.bf16.mxu0 0
        %864 = vmatpush1.bf16.msra.mxu0 0
        %865 = vmatprep.subr.bf16.mxu0 0
        %866 = vmatpush1.bf16.msra.mxu0 0
        %867 = vmatprep.subr.bf16.mxu0 0
        %868 = vmatpush1.bf16.msra.mxu0 0
        %869 = vmatprep.mubr.bf16.mxu0 0
        %870 = vmatmul.mubr.bf16.gmra.mrb[0].mxu0 %v835
        %v871 = vpop.f32.mrb[0].mxu0
        %v872 = vadd.f32 %v680, %v871
        %v873 = vpop.f32.mrb[0].mxu0
        %v874 = vadd.f32 %v682, %v873
        %v875 = vpop.f32.mrb[0].mxu0
        %v876 = vadd.f32 %v684, %v875
        %v877 = vpop.f32.mrb[0].mxu0
        %v878 = vadd.f32 %v686, %v877
        %879 = vdwg.mxu0
        %880 = vmatprep.subr.bf16.mxu0 %v813
        %881 = vmatpush1.bf16.msra.mxu0 %v812
        %882 = vmatprep.subr.bf16.mxu0 %v819
        %883 = vmatpush1.bf16.msra.mxu0 %v818
        %884 = vmatprep.subr.bf16.mxu0 0
        %885 = vmatpush1.bf16.msra.mxu0 0
        %886 = vmatprep.subr.bf16.mxu0 0
        %887 = vmatpush1.bf16.msra.mxu0 0
        %888 = vmatprep.subr.bf16.mxu0 0
        %889 = vmatpush1.bf16.msra.mxu0 0
        %890 = vmatprep.subr.bf16.mxu0 0
        %891 = vmatpush1.bf16.msra.mxu0 0
        %892 = vmatprep.subr.bf16.mxu0 0
        %893 = vmatpush1.bf16.msra.mxu0 0
        %894 = vmatprep.subr.bf16.mxu0 0
        %895 = vmatpush1.bf16.msra.mxu0 0
        %896 = vmatprep.subr.bf16.mxu0 0
        %897 = vmatpush1.bf16.msra.mxu0 0
        %898 = vmatprep.subr.bf16.mxu0 0
        %899 = vmatpush1.bf16.msra.mxu0 0
        %900 = vmatprep.subr.bf16.mxu0 0
        %901 = vmatpush1.bf16.msra.mxu0 0
        %902 = vmatprep.subr.bf16.mxu0 0
        %903 = vmatpush1.bf16.msra.mxu0 0
        %904 = vmatprep.subr.bf16.mxu0 0
        %905 = vmatpush1.bf16.msra.mxu0 0
        %906 = vmatprep.subr.bf16.mxu0 0
        %907 = vmatpush1.bf16.msra.mxu0 0
        %908 = vmatprep.subr.bf16.mxu0 0
        %909 = vmatpush1.bf16.msra.mxu0 0
        %910 = vmatprep.subr.bf16.mxu0 0
        %911 = vmatpush1.bf16.msra.mxu0 0
        %912 = vmatprep.mubr.bf16.mxu0 0
        %913 = vmatmul.mubr.bf16.gmra.mrb[0].mxu0 %v835
        %v914 = vpop.f32.mrb[0].mxu0
        %v915 = vadd.f32 %v723, %v914
        %v916 = vpop.f32.mrb[0].mxu0
        %v917 = vadd.f32 %v725, %v916
        %v918 = vpop.f32.mrb[0].mxu0
        %v919 = vadd.f32 %v727, %v918
        %v920 = vpop.f32.mrb[0].mxu0
        %v921 = vadd.f32 %v729, %v920
        %922 = vdwg.mxu0
        %923 = vmatprep.subr.bf16.mxu0 %v815
        %924 = vmatpush1.bf16.msra.mxu0 %v814
        %925 = vmatprep.subr.bf16.mxu0 %v821
        %926 = vmatpush1.bf16.msra.mxu0 %v820
        %927 = vmatprep.subr.bf16.mxu0 0
        %928 = vmatpush1.bf16.msra.mxu0 0
        %929 = vmatprep.subr.bf16.mxu0 0
        %930 = vmatpush1.bf16.msra.mxu0 0
        %931 = vmatprep.subr.bf16.mxu0 0
        %932 = vmatpush1.bf16.msra.mxu0 0
        %933 = vmatprep.subr.bf16.mxu0 0
        %934 = vmatpush1.bf16.msra.mxu0 0
        %935 = vmatprep.subr.bf16.mxu0 0
        %936 = vmatpush1.bf16.msra.mxu0 0
        %937 = vmatprep.subr.bf16.mxu0 0
        %938 = vmatpush1.bf16.msra.mxu0 0
        %939 = vmatprep.subr.bf16.mxu0 0
        %940 = vmatpush1.bf16.msra.mxu0 0
        %941 = vmatprep.subr.bf16.mxu0 0
        %942 = vmatpush1.bf16.msra.mxu0 0
        %943 = vmatprep.subr.bf16.mxu0 0
        %944 = vmatpush1.bf16.msra.mxu0 0
        %945 = vmatprep.subr.bf16.mxu0 0
        %946 = vmatpush1.bf16.msra.mxu0 0
        %947 = vmatprep.subr.bf16.mxu0 0
        %948 = vmatpush1.bf16.msra.mxu0 0
        %949 = vmatprep.subr.bf16.mxu0 0
        %950 = vmatpush1.bf16.msra.mxu0 0
        %951 = vmatprep.subr.bf16.mxu0 0
        %952 = vmatpush1.bf16.msra.mxu0 0
        %953 = vmatprep.subr.bf16.mxu0 0
        %954 = vmatpush1.bf16.msra.mxu0 0
        %955 = vmatprep.mubr.bf16.mxu0 0
        %956 = vmatmul.mubr.bf16.gmra.mrb[0].mxu0 %v835
        %v957 = vpop.f32.mrb[0].mxu0
        %v958 = vadd.f32 %v766, %v957
        %v959 = vpop.f32.mrb[0].mxu0
        %v960 = vadd.f32 %v768, %v959
        %v961 = vpop.f32.mrb[0].mxu0
        %v962 = vadd.f32 %v770, %v961
        %v963 = vpop.f32.mrb[0].mxu0
        %v964 = vadd.f32 %v772, %v963
        %965 = vdwg.mxu0
        %966 = vset.pattern.permute.xlu0 2
        %967 = vperm.xlu0 %966, %v346
        %v968 = vpop.permute.xlu0 %967
        %969 = vset.pattern.permute.xlu0 2
        %970 = vperm.xlu0 %969, %v347
        %v971 = vpop.permute.xlu0 %970
        %vm972 = vcmp.eq.s32.totalorder %v968, %v343
        %vm973 = vcmp.eq.s32.totalorder %v971, %v343
        %v974 = vsel %vm972, 1.0, 0.0
        %v975 = vsel %vm973, 1.0, 0.0
        %v976 = vpack.c.bf16 %v975, %v974
        %977 = vset.pattern.permute.xlu0 2
        %978 = vperm.xlu0 %977, %v369
        %v979 = vpop.permute.xlu0 %978
        %981 = vset.pattern.permute.xlu0 2
        %982 = vperm.xlu0 %981, %v370
        %v983 = vpop.permute.xlu0 %982
        %v985 = vmul.f32 %v979, %v388
        %v986 = vmul.f32 %v983, %v388
        %v988 = vsel %vm415, %v976, 0
        %990 = vmatprep.subr.bf16.mxu0 0
        %991 = vmatpush1.bf16.msra.mxu0 %v407
        %992 = vmatprep.subr.bf16.mxu0 0
        %993 = vmatpush1.bf16.msra.mxu0 %v408
        %994 = vmatprep.subr.bf16.mxu0 0
        %995 = vmatpush1.bf16.msra.mxu0 %v409
        %996 = vmatprep.subr.bf16.mxu0 0
        %997 = vmatpush1.bf16.msra.mxu0 %v410
        %998 = vmatprep.subr.bf16.mxu0 0
        %999 = vmatpush1.bf16.msra.mxu0 0
        %1000 = vmatprep.subr.bf16.mxu0 0
        %1001 = vmatpush1.bf16.msra.mxu0 0
        %1002 = vmatprep.subr.bf16.mxu0 0
        %1003 = vmatpush1.bf16.msra.mxu0 0
        %1004 = vmatprep.subr.bf16.mxu0 0
        %1005 = vmatpush1.bf16.msra.mxu0 0
        %1006 = vmatprep.subr.bf16.mxu0 0
        %1007 = vmatpush1.bf16.msra.mxu0 0
        %1008 = vmatprep.subr.bf16.mxu0 0
        %1009 = vmatpush1.bf16.msra.mxu0 0
        %1010 = vmatprep.subr.bf16.mxu0 0
        %1011 = vmatpush1.bf16.msra.mxu0 0
        %1012 = vmatprep.subr.bf16.mxu0 0
        %1013 = vmatpush1.bf16.msra.mxu0 0
        %1014 = vmatprep.subr.bf16.mxu0 0
        %1015 = vmatpush1.bf16.msra.mxu0 0
        %1016 = vmatprep.subr.bf16.mxu0 0
        %1017 = vmatpush1.bf16.msra.mxu0 0
        %1018 = vmatprep.subr.bf16.mxu0 0
        %1019 = vmatpush1.bf16.msra.mxu0 0
        %1020 = vmatprep.subr.bf16.mxu0 0
        %1021 = vmatpush1.bf16.msra.mxu0 0
        %1022 = vmatprep.mubr.bf16.mxu0 0
        %1023 = vmatmul.mubr.bf16.gmra.mrb[0].mxu0 %v988
        %v1024 = vpop.f32.mrb[0].mxu0
        %v1025 = vadd.f32 %v985, %v1024
        %v1026 = vpop.f32.mrb[0].mxu0
        %v1027 = vpop.f32.mrb[0].mxu0
        %v1028 = vadd.f32 %v986, %v1027
        %v1029 = vpop.f32.mrb[0].mxu0
        %1030 = vdwg.mxu0
        %1031 = vset.pattern.permute.xlu0 2
        %1032 = vperm.xlu0 %1031, %v373
        %v1033 = vpop.permute.xlu0 %1032
        %1035 = vset.pattern.permute.xlu0 2
        %1036 = vperm.xlu0 %1035, %v374
        %v1037 = vpop.permute.xlu0 %1036
        %v1039 = vmul.f32 %v1033, %v473
        %v1040 = vmul.f32 %v1037, %v473
        %v1041 = vadd.f32 %v1025, %v1039
        %v1042 = vadd.f32 %v1028, %v1040
        %v1043 = vpack.c.bf16 %v1042, %v1041
        %v1044 = vld [vmem:[#allocation2 + $0xc0] sm:$0xff]
        %v1045 = vld [vmem:[#allocation2 + $0xc8] sm:$0xff]
        %v1046 = vld [vmem:[#allocation2 + $0xd0] sm:$0xff]
        %v1047 = vld [vmem:[#allocation2 + $0xd8] sm:$0xff]
        %v1048 = vld [vmem:[#allocation2 + $0xe0] sm:$0xff]
        %v1049 = vld [vmem:[#allocation2 + $0xe8] sm:$0xff]
        %v1050 = vld [vmem:[#allocation2 + $0xf0] sm:$0xff]
        %v1051 = vld [vmem:[#allocation2 + $0xf8] sm:$0xff]
        %v1052 = vld [vmem:[#allocation2 + $0x100] sm:$0xff]
        %v1053 = vld [vmem:[#allocation2 + $0x108] sm:$0xff]
        %v1054 = vld [vmem:[#allocation2 + $0x110] sm:$0xff]
        %v1055 = vld [vmem:[#allocation2 + $0x118] sm:$0xff]
        %v1068 = vunpack.c.l.b16 %v1044
        %v1069 = vunpack.c.h.b16 %v1044
        %v1070 = vunpack.c.l.b16 %v1045
        %v1071 = vunpack.c.h.b16 %v1045
        %v1072 = vunpack.c.l.b16 %v1046
        %v1073 = vunpack.c.h.b16 %v1046
        %v1074 = vunpack.c.l.b16 %v1047
        %v1075 = vunpack.c.h.b16 %v1047
        %v1076 = vunpack.c.l.b16 %v1048
        %v1077 = vunpack.c.h.b16 %v1048
        %v1078 = vunpack.c.l.b16 %v1049
        %v1079 = vunpack.c.h.b16 %v1049
        %v1080 = vunpack.c.l.b16 %v1050
        %v1081 = vunpack.c.h.b16 %v1050
        %v1082 = vunpack.c.l.b16 %v1051
        %v1083 = vunpack.c.h.b16 %v1051
        %v1084 = vunpack.c.l.b16 %v1052
        %v1085 = vunpack.c.h.b16 %v1052
        %v1086 = vunpack.c.l.b16 %v1053
        %v1087 = vunpack.c.h.b16 %v1053
        %v1088 = vunpack.c.l.b16 %v1054
        %v1089 = vunpack.c.h.b16 %v1054
        %v1090 = vunpack.c.l.b16 %v1055
        %v1091 = vunpack.c.h.b16 %v1055
        %v1092 = vpack.c.b16 %v1074, %v1068
        %v1093 = vpack.c.b16 %v1075, %v1069
        %v1094 = vpack.c.b16 %v1076, %v1070
        %v1095 = vpack.c.b16 %v1077, %v1071
        %v1096 = vpack.c.b16 %v1078, %v1072
        %v1097 = vpack.c.b16 %v1079, %v1073
        %v1098 = vpack.c.b16 %v1086, %v1080
        %v1099 = vpack.c.b16 %v1087, %v1081
        %v1100 = vpack.c.b16 %v1088, %v1082
        %v1101 = vpack.c.b16 %v1089, %v1083
        %v1102 = vpack.c.b16 %v1090, %v1084
        %v1103 = vpack.c.b16 %v1091, %v1085
        %v1117 = vsel %vm641, %v1043, 0
        %1119 = vmatprep.subr.bf16.mxu0 %v1093
        %1120 = vmatpush1.bf16.msra.mxu0 %v1092
        %1121 = vmatprep.subr.bf16.mxu0 %v1099
        %1122 = vmatpush1.bf16.msra.mxu0 %v1098
        %1123 = vmatprep.subr.bf16.mxu0 0
        %1124 = vmatpush1.bf16.msra.mxu0 0
        %1125 = vmatprep.subr.bf16.mxu0 0
        %1126 = vmatpush1.bf16.msra.mxu0 0
        %1127 = vmatprep.subr.bf16.mxu0 0
        %1128 = vmatpush1.bf16.msra.mxu0 0
        %1129 = vmatprep.subr.bf16.mxu0 0
        %1130 = vmatpush1.bf16.msra.mxu0 0
        %1131 = vmatprep.subr.bf16.mxu0 0
        %1132 = vmatpush1.bf16.msra.mxu0 0
        %1133 = vmatprep.subr.bf16.mxu0 0
        %1134 = vmatpush1.bf16.msra.mxu0 0
        %1135 = vmatprep.subr.bf16.mxu0 0
        %1136 = vmatpush1.bf16.msra.mxu0 0
        %1137 = vmatprep.subr.bf16.mxu0 0
        %1138 = vmatpush1.bf16.msra.mxu0 0
        %1139 = vmatprep.subr.bf16.mxu0 0
        %1140 = vmatpush1.bf16.msra.mxu0 0
        %1141 = vmatprep.subr.bf16.mxu0 0
        %1142 = vmatpush1.bf16.msra.mxu0 0
        %1143 = vmatprep.subr.bf16.mxu0 0
        %1144 = vmatpush1.bf16.msra.mxu0 0
        %1145 = vmatprep.subr.bf16.mxu0 0
        %1146 = vmatpush1.bf16.msra.mxu0 0
        %1147 = vmatprep.subr.bf16.mxu0 0
        %1148 = vmatpush1.bf16.msra.mxu0 0
        %1149 = vmatprep.subr.bf16.mxu0 0
        %1150 = vmatpush1.bf16.msra.mxu0 0
        %1151 = vmatprep.mubr.bf16.mxu0 0
        %1152 = vmatmul.mubr.bf16.gmra.mrb[0].mxu0 %v1117
        %v1153 = vpop.f32.mrb[0].mxu0
        %v1154 = vadd.f32 0.0, %v1153
        %v1155 = vpop.f32.mrb[0].mxu0
        %v1156 = vadd.f32 0.0, %v1155
        %v1157 = vpop.f32.mrb[0].mxu0
        %v1158 = vadd.f32 0.0, %v1157
        %v1159 = vpop.f32.mrb[0].mxu0
        %v1160 = vadd.f32 0.0, %v1159
        %1161 = vdwg.mxu0
        %1162 = vmatprep.subr.bf16.mxu0 %v1095
        %1163 = vmatpush1.bf16.msra.mxu0 %v1094
        %1164 = vmatprep.subr.bf16.mxu0 %v1101
        %1165 = vmatpush1.bf16.msra.mxu0 %v1100
        %1166 = vmatprep.subr.bf16.mxu0 0
        %1167 = vmatpush1.bf16.msra.mxu0 0
        %1168 = vmatprep.subr.bf16.mxu0 0
        %1169 = vmatpush1.bf16.msra.mxu0 0
        %1170 = vmatprep.subr.bf16.mxu0 0
        %1171 = vmatpush1.bf16.msra.mxu0 0
        %1172 = vmatprep.subr.bf16.mxu0 0
        %1173 = vmatpush1.bf16.msra.mxu0 0
        %1174 = vmatprep.subr.bf16.mxu0 0
        %1175 = vmatpush1.bf16.msra.mxu0 0
        %1176 = vmatprep.subr.bf16.mxu0 0
        %1177 = vmatpush1.bf16.msra.mxu0 0
        %1178 = vmatprep.subr.bf16.mxu0 0
        %1179 = vmatpush1.bf16.msra.mxu0 0
        %1180 = vmatprep.subr.bf16.mxu0 0
        %1181 = vmatpush1.bf16.msra.mxu0 0
        %1182 = vmatprep.subr.bf16.mxu0 0
        %1183 = vmatpush1.bf16.msra.mxu0 0
        %1184 = vmatprep.subr.bf16.mxu0 0
        %1185 = vmatpush1.bf16.msra.mxu0 0
        %1186 = vmatprep.subr.bf16.mxu0 0
        %1187 = vmatpush1.bf16.msra.mxu0 0
        %1188 = vmatprep.subr.bf16.mxu0 0
        %1189 = vmatpush1.bf16.msra.mxu0 0
        %1190 = vmatprep.subr.bf16.mxu0 0
        %1191 = vmatpush1.bf16.msra.mxu0 0
        %1192 = vmatprep.subr.bf16.mxu0 0
        %1193 = vmatpush1.bf16.msra.mxu0 0
        %1194 = vmatprep.mubr.bf16.mxu0 0
        %1195 = vmatmul.mubr.bf16.gmra.mrb[0].mxu0 %v1117
        %v1196 = vpop.f32.mrb[0].mxu0
        %v1197 = vadd.f32 0.0, %v1196
        %v1198 = vpop.f32.mrb[0].mxu0
        %v1199 = vadd.f32 0.0, %v1198
        %v1200 = vpop.f32.mrb[0].mxu0
        %v1201 = vadd.f32 0.0, %v1200
        %v1202 = vpop.f32.mrb[0].mxu0
        %v1203 = vadd.f32 0.0, %v1202
        %1204 = vdwg.mxu0
        %1205 = vmatprep.subr.bf16.mxu0 %v1097
        %1206 = vmatpush1.bf16.msra.mxu0 %v1096
        %1207 = vmatprep.subr.bf16.mxu0 %v1103
        %1208 = vmatpush1.bf16.msra.mxu0 %v1102
        %1209 = vmatprep.subr.bf16.mxu0 0
        %1210 = vmatpush1.bf16.msra.mxu0 0
        %1211 = vmatprep.subr.bf16.mxu0 0
        %1212 = vmatpush1.bf16.msra.mxu0 0
        %1213 = vmatprep.subr.bf16.mxu0 0
        %1214 = vmatpush1.bf16.msra.mxu0 0
        %1215 = vmatprep.subr.bf16.mxu0 0
        %1216 = vmatpush1.bf16.msra.mxu0 0
        %1217 = vmatprep.subr.bf16.mxu0 0
        %1218 = vmatpush1.bf16.msra.mxu0 0
        %1219 = vmatprep.subr.bf16.mxu0 0
        %1220 = vmatpush1.bf16.msra.mxu0 0
        %1221 = vmatprep.subr.bf16.mxu0 0
        %1222 = vmatpush1.bf16.msra.mxu0 0
        %1223 = vmatprep.subr.bf16.mxu0 0
        %1224 = vmatpush1.bf16.msra.mxu0 0
        %1225 = vmatprep.subr.bf16.mxu0 0
        %1226 = vmatpush1.bf16.msra.mxu0 0
        %1227 = vmatprep.subr.bf16.mxu0 0
        %1228 = vmatpush1.bf16.msra.mxu0 0
        %1229 = vmatprep.subr.bf16.mxu0 0
        %1230 = vmatpush1.bf16.msra.mxu0 0
        %1231 = vmatprep.subr.bf16.mxu0 0
        %1232 = vmatpush1.bf16.msra.mxu0 0
        %1233 = vmatprep.subr.bf16.mxu0 0
        %1234 = vmatpush1.bf16.msra.mxu0 0
        %1235 = vmatprep.subr.bf16.mxu0 0
        %1236 = vmatpush1.bf16.msra.mxu0 0
        %1237 = vmatprep.mubr.bf16.mxu0 0
        %1238 = vmatmul.mubr.bf16.gmra.mrb[0].mxu0 %v1117
        %v1239 = vpop.f32.mrb[0].mxu0
        %v1240 = vadd.f32 0.0, %v1239
        %v1241 = vpop.f32.mrb[0].mxu0
        %v1242 = vadd.f32 0.0, %v1241
        %v1243 = vpop.f32.mrb[0].mxu0
        %v1244 = vadd.f32 0.0, %v1243
        %v1245 = vpop.f32.mrb[0].mxu0
        %v1246 = vadd.f32 0.0, %v1245
        %1247 = vdwg.mxu0
        %v1248 = vadd.f32 %v872, %v1154
        %v1249 = vadd.f32 %v874, %v1156
        %v1250 = vadd.f32 %v915, %v1197
        %v1251 = vadd.f32 %v917, %v1199
        %v1252 = vadd.f32 %v958, %v1240
        %v1253 = vadd.f32 %v960, %v1242
        %v1254 = vadd.f32 %v876, %v1158
        %v1255 = vadd.f32 %v878, %v1160
        %v1256 = vadd.f32 %v919, %v1201
        %v1257 = vadd.f32 %v921, %v1203
        %v1258 = vadd.f32 %v962, %v1244
        %v1259 = vadd.f32 %v964, %v1246
        %1260 = vset.pattern.permute.xlu0 3
        %1261 = vperm.xlu0 %1260, %v346
        %v1262 = vpop.permute.xlu0 %1261
        %1263 = vset.pattern.permute.xlu0 3
        %1264 = vperm.xlu0 %1263, %v347
        %v1265 = vpop.permute.xlu0 %1264
        %vm1266 = vcmp.eq.s32.totalorder %v1262, %v343
        %vm1267 = vcmp.eq.s32.totalorder %v1265, %v343
        %v1268 = vsel %vm1266, 1.0, 0.0
        %v1269 = vsel %vm1267, 1.0, 0.0
        %v1270 = vpack.c.bf16 %v1269, %v1268
        %1271 = vset.pattern.permute.xlu0 3
        %1272 = vperm.xlu0 %1271, %v369
        %v1273 = vpop.permute.xlu0 %1272
        %1275 = vset.pattern.permute.xlu0 3
        %1276 = vperm.xlu0 %1275, %v370
        %v1277 = vpop.permute.xlu0 %1276
        %v1279 = vmul.f32 %v1273, %v388
        %v1280 = vmul.f32 %v1277, %v388
        %v1282 = vsel %vm415, %v1270, 0
        %1284 = vmatprep.subr.bf16.mxu0 0
        %1285 = vmatpush1.bf16.msra.mxu0 %v407
        %1286 = vmatprep.subr.bf16.mxu0 0
        %1287 = vmatpush1.bf16.msra.mxu0 %v408
        %1288 = vmatprep.subr.bf16.mxu0 0
        %1289 = vmatpush1.bf16.msra.mxu0 %v409
        %1290 = vmatprep.subr.bf16.mxu0 0
        %1291 = vmatpush1.bf16.msra.mxu0 %v410
        %1292 = vmatprep.subr.bf16.mxu0 0
        %1293 = vmatpush1.bf16.msra.mxu0 0
        %1294 = vmatprep.subr.bf16.mxu0 0
        %1295 = vmatpush1.bf16.msra.mxu0 0
        %1296 = vmatprep.subr.bf16.mxu0 0
        %1297 = vmatpush1.bf16.msra.mxu0 0
        %1298 = vmatprep.subr.bf16.mxu0 0
        %1299 = vmatpush1.bf16.msra.mxu0 0
        %1300 = vmatprep.subr.bf16.mxu0 0
        %1301 = vmatpush1.bf16.msra.mxu0 0
        %1302 = vmatprep.subr.bf16.mxu0 0
        %1303 = vmatpush1.bf16.msra.mxu0 0
        %1304 = vmatprep.subr.bf16.mxu0 0
        %1305 = vmatpush1.bf16.msra.mxu0 0
        %1306 = vmatprep.subr.bf16.mxu0 0
        %1307 = vmatpush1.bf16.msra.mxu0 0
        %1308 = vmatprep.subr.bf16.mxu0 0
        %1309 = vmatpush1.bf16.msra.mxu0 0
        %1310 = vmatprep.subr.bf16.mxu0 0
        %1311 = vmatpush1.bf16.msra.mxu0 0
        %1312 = vmatprep.subr.bf16.mxu0 0
        %1313 = vmatpush1.bf16.msra.mxu0 0
        %1314 = vmatprep.subr.bf16.mxu0 0
        %1315 = vmatpush1.bf16.msra.mxu0 0
        %1316 = vmatprep.mubr.bf16.mxu0 0
        %1317 = vmatmul.mubr.bf16.gmra.mrb[0].mxu0 %v1282
        %v1318 = vpop.f32.mrb[0].mxu0
        %v1319 = vadd.f32 %v1279, %v1318
        %v1320 = vpop.f32.mrb[0].mxu0
        %v1321 = vpop.f32.mrb[0].mxu0
        %v1322 = vadd.f32 %v1280, %v1321
        %v1323 = vpop.f32.mrb[0].mxu0
        %1324 = vdwg.mxu0
        %1325 = vset.pattern.permute.xlu0 3
        %1326 = vperm.xlu0 %1325, %v373
        %v1327 = vpop.permute.xlu0 %1326
        %1329 = vset.pattern.permute.xlu0 3
        %1330 = vperm.xlu0 %1329, %v374
        %v1331 = vpop.permute.xlu0 %1330
        %v1333 = vmul.f32 %v1327, %v473
        %v1334 = vmul.f32 %v1331, %v473
        %v1335 = vadd.f32 %v1319, %v1333
        %v1336 = vadd.f32 %v1322, %v1334
        %v1337 = vpack.c.bf16 %v1336, %v1335
        %v1338 = vld [vmem:[#allocation2 + $0x120] sm:$0xff]
        %v1339 = vld [vmem:[#allocation2 + $0x128] sm:$0xff]
        %v1340 = vld [vmem:[#allocation2 + $0x130] sm:$0xff]
        %v1341 = vld [vmem:[#allocation2 + $0x138] sm:$0xff]
        %v1342 = vld [vmem:[#allocation2 + $0x140] sm:$0xff]
        %v1343 = vld [vmem:[#allocation2 + $0x148] sm:$0xff]
        %v1344 = vld [vmem:[#allocation2 + $0x150] sm:$0xff]
        %v1345 = vld [vmem:[#allocation2 + $0x158] sm:$0xff]
        %v1346 = vld [vmem:[#allocation2 + $0x160] sm:$0xff]
        %v1347 = vld [vmem:[#allocation2 + $0x168] sm:$0xff]
        %v1348 = vld [vmem:[#allocation2 + $0x170] sm:$0xff]
        %v1349 = vld [vmem:[#allocation2 + $0x178] sm:$0xff]
        %v1362 = vunpack.c.l.b16 %v1338
        %v1363 = vunpack.c.h.b16 %v1338
        %v1364 = vunpack.c.l.b16 %v1339
        %v1365 = vunpack.c.h.b16 %v1339
        %v1366 = vunpack.c.l.b16 %v1340
        %v1367 = vunpack.c.h.b16 %v1340
        %v1368 = vunpack.c.l.b16 %v1341
        %v1369 = vunpack.c.h.b16 %v1341
        %v1370 = vunpack.c.l.b16 %v1342
        %v1371 = vunpack.c.h.b16 %v1342
        %v1372 = vunpack.c.l.b16 %v1343
        %v1373 = vunpack.c.h.b16 %v1343
        %v1374 = vunpack.c.l.b16 %v1344
        %v1375 = vunpack.c.h.b16 %v1344
        %v1376 = vunpack.c.l.b16 %v1345
        %v1377 = vunpack.c.h.b16 %v1345
        %v1378 = vunpack.c.l.b16 %v1346
        %v1379 = vunpack.c.h.b16 %v1346
        %v1380 = vunpack.c.l.b16 %v1347
        %v1381 = vunpack.c.h.b16 %v1347
        %v1382 = vunpack.c.l.b16 %v1348
        %v1383 = vunpack.c.h.b16 %v1348
        %v1384 = vunpack.c.l.b16 %v1349
        %v1385 = vunpack.c.h.b16 %v1349
        %v1386 = vpack.c.b16 %v1368, %v1362
        %v1387 = vpack.c.b16 %v1369, %v1363
        %v1388 = vpack.c.b16 %v1370, %v1364
        %v1389 = vpack.c.b16 %v1371, %v1365
        %v1390 = vpack.c.b16 %v1372, %v1366
        %v1391 = vpack.c.b16 %v1373, %v1367
        %v1392 = vpack.c.b16 %v1380, %v1374
        %v1393 = vpack.c.b16 %v1381, %v1375
        %v1394 = vpack.c.b16 %v1382, %v1376
        %v1395 = vpack.c.b16 %v1383, %v1377
        %v1396 = vpack.c.b16 %v1384, %v1378
        %v1397 = vpack.c.b16 %v1385, %v1379
        %v1411 = vsel %vm641, %v1337, 0
        %1413 = vmatprep.subr.bf16.mxu0 %v1387
        %1414 = vmatpush1.bf16.msra.mxu0 %v1386
        %1415 = vmatprep.subr.bf16.mxu0 %v1393
        %1416 = vmatpush1.bf16.msra.mxu0 %v1392
        %1417 = vmatprep.subr.bf16.mxu0 0
        %1418 = vmatpush1.bf16.msra.mxu0 0
        %1419 = vmatprep.subr.bf16.mxu0 0
        %1420 = vmatpush1.bf16.msra.mxu0 0
        %1421 = vmatprep.subr.bf16.mxu0 0
        %1422 = vmatpush1.bf16.msra.mxu0 0
        %1423 = vmatprep.subr.bf16.mxu0 0
        %1424 = vmatpush1.bf16.msra.mxu0 0
        %1425 = vmatprep.subr.bf16.mxu0 0
        %1426 = vmatpush1.bf16.msra.mxu0 0
        %1427 = vmatprep.subr.bf16.mxu0 0
        %1428 = vmatpush1.bf16.msra.mxu0 0
        %1429 = vmatprep.subr.bf16.mxu0 0
        %1430 = vmatpush1.bf16.msra.mxu0 0
        %1431 = vmatprep.subr.bf16.mxu0 0
        %1432 = vmatpush1.bf16.msra.mxu0 0
        %1433 = vmatprep.subr.bf16.mxu0 0
        %1434 = vmatpush1.bf16.msra.mxu0 0
        %1435 = vmatprep.subr.bf16.mxu0 0
        %1436 = vmatpush1.bf16.msra.mxu0 0
        %1437 = vmatprep.subr.bf16.mxu0 0
        %1438 = vmatpush1.bf16.msra.mxu0 0
        %1439 = vmatprep.subr.bf16.mxu0 0
        %1440 = vmatpush1.bf16.msra.mxu0 0
        %1441 = vmatprep.subr.bf16.mxu0 0
        %1442 = vmatpush1.bf16.msra.mxu0 0
        %1443 = vmatprep.subr.bf16.mxu0 0
        %1444 = vmatpush1.bf16.msra.mxu0 0
        %1445 = vmatprep.mubr.bf16.mxu0 0
        %1446 = vmatmul.mubr.bf16.gmra.mrb[0].mxu0 %v1411
        %v1447 = vpop.f32.mrb[0].mxu0
        %v1448 = vadd.f32 0.0, %v1447
        %v1449 = vpop.f32.mrb[0].mxu0
        %v1450 = vadd.f32 0.0, %v1449
        %v1451 = vpop.f32.mrb[0].mxu0
        %v1452 = vadd.f32 0.0, %v1451
        %v1453 = vpop.f32.mrb[0].mxu0
        %v1454 = vadd.f32 0.0, %v1453
        %1455 = vdwg.mxu0
        %1456 = vmatprep.subr.bf16.mxu0 %v1389
        %1457 = vmatpush1.bf16.msra.mxu0 %v1388
        %1458 = vmatprep.subr.bf16.mxu0 %v1395
        %1459 = vmatpush1.bf16.msra.mxu0 %v1394
        %1460 = vmatprep.subr.bf16.mxu0 0
        %1461 = vmatpush1.bf16.msra.mxu0 0
        %1462 = vmatprep.subr.bf16.mxu0 0
        %1463 = vmatpush1.bf16.msra.mxu0 0
        %1464 = vmatprep.subr.bf16.mxu0 0
        %1465 = vmatpush1.bf16.msra.mxu0 0
        %1466 = vmatprep.subr.bf16.mxu0 0
        %1467 = vmatpush1.bf16.msra.mxu0 0
        %1468 = vmatprep.subr.bf16.mxu0 0
        %1469 = vmatpush1.bf16.msra.mxu0 0
        %1470 = vmatprep.subr.bf16.mxu0 0
        %1471 = vmatpush1.bf16.msra.mxu0 0
        %1472 = vmatprep.subr.bf16.mxu0 0
        %1473 = vmatpush1.bf16.msra.mxu0 0
        %1474 = vmatprep.subr.bf16.mxu0 0
        %1475 = vmatpush1.bf16.msra.mxu0 0
        %1476 = vmatprep.subr.bf16.mxu0 0
        %1477 = vmatpush1.bf16.msra.mxu0 0
        %1478 = vmatprep.subr.bf16.mxu0 0
        %1479 = vmatpush1.bf16.msra.mxu0 0
        %1480 = vmatprep.subr.bf16.mxu0 0
        %1481 = vmatpush1.bf16.msra.mxu0 0
        %1482 = vmatprep.subr.bf16.mxu0 0
        %1483 = vmatpush1.bf16.msra.mxu0 0
        %1484 = vmatprep.subr.bf16.mxu0 0
        %1485 = vmatpush1.bf16.msra.mxu0 0
        %1486 = vmatprep.subr.bf16.mxu0 0
        %1487 = vmatpush1.bf16.msra.mxu0 0
        %1488 = vmatprep.mubr.bf16.mxu0 0
        %1489 = vmatmul.mubr.bf16.gmra.mrb[0].mxu0 %v1411
        %v1490 = vpop.f32.mrb[0].mxu0
        %v1491 = vadd.f32 0.0, %v1490
        %v1492 = vpop.f32.mrb[0].mxu0
        %v1493 = vadd.f32 0.0, %v1492
        %v1494 = vpop.f32.mrb[0].mxu0
        %v1495 = vadd.f32 0.0, %v1494
        %v1496 = vpop.f32.mrb[0].mxu0
        %v1497 = vadd.f32 0.0, %v1496
        %1498 = vdwg.mxu0
        %1499 = vmatprep.subr.bf16.mxu0 %v1391
        %1500 = vmatpush1.bf16.msra.mxu0 %v1390
        %1501 = vmatprep.subr.bf16.mxu0 %v1397
        %1502 = vmatpush1.bf16.msra.mxu0 %v1396
        %1503 = vmatprep.subr.bf16.mxu0 0
        %1504 = vmatpush1.bf16.msra.mxu0 0
        %1505 = vmatprep.subr.bf16.mxu0 0
        %1506 = vmatpush1.bf16.msra.mxu0 0
        %1507 = vmatprep.subr.bf16.mxu0 0
        %1508 = vmatpush1.bf16.msra.mxu0 0
        %1509 = vmatprep.subr.bf16.mxu0 0
        %1510 = vmatpush1.bf16.msra.mxu0 0
        %1511 = vmatprep.subr.bf16.mxu0 0
        %1512 = vmatpush1.bf16.msra.mxu0 0
        %1513 = vmatprep.subr.bf16.mxu0 0
        %1514 = vmatpush1.bf16.msra.mxu0 0
        %1515 = vmatprep.subr.bf16.mxu0 0
        %1516 = vmatpush1.bf16.msra.mxu0 0
        %1517 = vmatprep.subr.bf16.mxu0 0
        %1518 = vmatpush1.bf16.msra.mxu0 0
        %1519 = vmatprep.subr.bf16.mxu0 0
        %1520 = vmatpush1.bf16.msra.mxu0 0
        %1521 = vmatprep.subr.bf16.mxu0 0
        %1522 = vmatpush1.bf16.msra.mxu0 0
        %1523 = vmatprep.subr.bf16.mxu0 0
        %1524 = vmatpush1.bf16.msra.mxu0 0
        %1525 = vmatprep.subr.bf16.mxu0 0
        %1526 = vmatpush1.bf16.msra.mxu0 0
        %1527 = vmatprep.subr.bf16.mxu0 0
        %1528 = vmatpush1.bf16.msra.mxu0 0
        %1529 = vmatprep.subr.bf16.mxu0 0
        %1530 = vmatpush1.bf16.msra.mxu0 0
        %1531 = vmatprep.mubr.bf16.mxu0 0
        %1532 = vmatmul.mubr.bf16.gmra.mrb[0].mxu0 %v1411
        %v1533 = vpop.f32.mrb[0].mxu0
        %v1534 = vadd.f32 0.0, %v1533
        %v1535 = vpop.f32.mrb[0].mxu0
        %v1536 = vadd.f32 0.0, %v1535
        %v1537 = vpop.f32.mrb[0].mxu0
        %v1538 = vadd.f32 0.0, %v1537
        %v1539 = vpop.f32.mrb[0].mxu0
        %v1540 = vadd.f32 0.0, %v1539
        %1541 = vdwg.mxu0
        %v1542 = vadd.f32 %v1248, %v1448
        %v1543 = vadd.f32 %v1249, %v1450
        %v1544 = vadd.f32 %v1250, %v1491
        %v1545 = vadd.f32 %v1251, %v1493
        %v1546 = vadd.f32 %v1252, %v1534
        %v1547 = vadd.f32 %v1253, %v1536
        %v1548 = vadd.f32 %v1254, %v1452
        %v1549 = vadd.f32 %v1255, %v1454
        %v1550 = vadd.f32 %v1256, %v1495
        %v1551 = vadd.f32 %v1257, %v1497
        %v1552 = vadd.f32 %v1258, %v1538
        %v1553 = vadd.f32 %v1259, %v1540
        %1554 = vset.pattern.permute.xlu0 4
        %1555 = vperm.xlu0 %1554, %v346
        %v1556 = vpop.permute.xlu0 %1555
        %1557 = vset.pattern.permute.xlu0 4
        %1558 = vperm.xlu0 %1557, %v347
        %v1559 = vpop.permute.xlu0 %1558
        %vm1560 = vcmp.eq.s32.totalorder %v1556, %v343
        %vm1561 = vcmp.eq.s32.totalorder %v1559, %v343
        %v1562 = vsel %vm1560, 1.0, 0.0
        %v1563 = vsel %vm1561, 1.0, 0.0
        %v1564 = vpack.c.bf16 %v1563, %v1562
        %1565 = vset.pattern.permute.xlu0 4
        %1566 = vperm.xlu0 %1565, %v369
        %v1567 = vpop.permute.xlu0 %1566
        %1569 = vset.pattern.permute.xlu0 4
        %1570 = vperm.xlu0 %1569, %v370
        %v1571 = vpop.permute.xlu0 %1570
        %v1573 = vmul.f32 %v1567, %v388
        %v1574 = vmul.f32 %v1571, %v388
        %v1576 = vsel %vm415, %v1564, 0
        %1578 = vmatprep.subr.bf16.mxu0 0
        %1579 = vmatpush1.bf16.msra.mxu0 %v407
        %1580 = vmatprep.subr.bf16.mxu0 0
        %1581 = vmatpush1.bf16.msra.mxu0 %v408
        %1582 = vmatprep.subr.bf16.mxu0 0
        %1583 = vmatpush1.bf16.msra.mxu0 %v409
        %1584 = vmatprep.subr.bf16.mxu0 0
        %1585 = vmatpush1.bf16.msra.mxu0 %v410
        %1586 = vmatprep.subr.bf16.mxu0 0
        %1587 = vmatpush1.bf16.msra.mxu0 0
        %1588 = vmatprep.subr.bf16.mxu0 0
        %1589 = vmatpush1.bf16.msra.mxu0 0
        %1590 = vmatprep.subr.bf16.mxu0 0
        %1591 = vmatpush1.bf16.msra.mxu0 0
        %1592 = vmatprep.subr.bf16.mxu0 0
        %1593 = vmatpush1.bf16.msra.mxu0 0
        %1594 = vmatprep.subr.bf16.mxu0 0
        %1595 = vmatpush1.bf16.msra.mxu0 0
        %1596 = vmatprep.subr.bf16.mxu0 0
        %1597 = vmatpush1.bf16.msra.mxu0 0
        %1598 = vmatprep.subr.bf16.mxu0 0
        %1599 = vmatpush1.bf16.msra.mxu0 0
        %1600 = vmatprep.subr.bf16.mxu0 0
        %1601 = vmatpush1.bf16.msra.mxu0 0
        %1602 = vmatprep.subr.bf16.mxu0 0
        %1603 = vmatpush1.bf16.msra.mxu0 0
        %1604 = vmatprep.subr.bf16.mxu0 0
        %1605 = vmatpush1.bf16.msra.mxu0 0
        %1606 = vmatprep.subr.bf16.mxu0 0
        %1607 = vmatpush1.bf16.msra.mxu0 0
        %1608 = vmatprep.subr.bf16.mxu0 0
        %1609 = vmatpush1.bf16.msra.mxu0 0
        %1610 = vmatprep.mubr.bf16.mxu0 0
        %1611 = vmatmul.mubr.bf16.gmra.mrb[0].mxu0 %v1576
        %v1612 = vpop.f32.mrb[0].mxu0
        %v1613 = vadd.f32 %v1573, %v1612
        %v1614 = vpop.f32.mrb[0].mxu0
        %v1615 = vpop.f32.mrb[0].mxu0
        %v1616 = vadd.f32 %v1574, %v1615
        %v1617 = vpop.f32.mrb[0].mxu0
        %1618 = vdwg.mxu0
        %1619 = vset.pattern.permute.xlu0 4
        %1620 = vperm.xlu0 %1619, %v373
        %v1621 = vpop.permute.xlu0 %1620
        %1623 = vset.pattern.permute.xlu0 4
        %1624 = vperm.xlu0 %1623, %v374
        %v1625 = vpop.permute.xlu0 %1624
        %v1627 = vmul.f32 %v1621, %v473
        %v1628 = vmul.f32 %v1625, %v473
        %v1629 = vadd.f32 %v1613, %v1627
        %v1630 = vadd.f32 %v1616, %v1628
        %v1631 = vpack.c.bf16 %v1630, %v1629
        %v1632 = vld [vmem:[#allocation2 + $0x180] sm:$0xff]
        %v1633 = vld [vmem:[#allocation2 + $0x188] sm:$0xff]
        %v1634 = vld [vmem:[#allocation2 + $0x190] sm:$0xff]
        %v1635 = vld [vmem:[#allocation2 + $0x198] sm:$0xff]
        %v1636 = vld [vmem:[#allocation2 + $0x1a0] sm:$0xff]
        %v1637 = vld [vmem:[#allocation2 + $0x1a8] sm:$0xff]
        %v1638 = vld [vmem:[#allocation2 + $0x1b0] sm:$0xff]
        %v1639 = vld [vmem:[#allocation2 + $0x1b8] sm:$0xff]
        %v1640 = vld [vmem:[#allocation2 + $0x1c0] sm:$0xff]
        %v1641 = vld [vmem:[#allocation2 + $0x1c8] sm:$0xff]
        %v1642 = vld [vmem:[#allocation2 + $0x1d0] sm:$0xff]
        %v1643 = vld [vmem:[#allocation2 + $0x1d8] sm:$0xff]
        %v1656 = vunpack.c.l.b16 %v1632
        %v1657 = vunpack.c.h.b16 %v1632
        %v1658 = vunpack.c.l.b16 %v1633
        %v1659 = vunpack.c.h.b16 %v1633
        %v1660 = vunpack.c.l.b16 %v1634
        %v1661 = vunpack.c.h.b16 %v1634
        %v1662 = vunpack.c.l.b16 %v1635
        %v1663 = vunpack.c.h.b16 %v1635
        %v1664 = vunpack.c.l.b16 %v1636
        %v1665 = vunpack.c.h.b16 %v1636
        %v1666 = vunpack.c.l.b16 %v1637
        %v1667 = vunpack.c.h.b16 %v1637
        %v1668 = vunpack.c.l.b16 %v1638
        %v1669 = vunpack.c.h.b16 %v1638
        %v1670 = vunpack.c.l.b16 %v1639
        %v1671 = vunpack.c.h.b16 %v1639
        %v1672 = vunpack.c.l.b16 %v1640
        %v1673 = vunpack.c.h.b16 %v1640
        %v1674 = vunpack.c.l.b16 %v1641
        %v1675 = vunpack.c.h.b16 %v1641
        %v1676 = vunpack.c.l.b16 %v1642
        %v1677 = vunpack.c.h.b16 %v1642
        %v1678 = vunpack.c.l.b16 %v1643
        %v1679 = vunpack.c.h.b16 %v1643
        %v1680 = vpack.c.b16 %v1662, %v1656
        %v1681 = vpack.c.b16 %v1663, %v1657
        %v1682 = vpack.c.b16 %v1664, %v1658
        %v1683 = vpack.c.b16 %v1665, %v1659
        %v1684 = vpack.c.b16 %v1666, %v1660
        %v1685 = vpack.c.b16 %v1667, %v1661
        %v1686 = vpack.c.b16 %v1674, %v1668
        %v1687 = vpack.c.b16 %v1675, %v1669
        %v1688 = vpack.c.b16 %v1676, %v1670
        %v1689 = vpack.c.b16 %v1677, %v1671
        %v1690 = vpack.c.b16 %v1678, %v1672
        %v1691 = vpack.c.b16 %v1679, %v1673
        %v1705 = vsel %vm641, %v1631, 0
        %1707 = vmatprep.subr.bf16.mxu0 %v1681
        %1708 = vmatpush1.bf16.msra.mxu0 %v1680
        %1709 = vmatprep.subr.bf16.mxu0 %v1687
        %1710 = vmatpush1.bf16.msra.mxu0 %v1686
        %1711 = vmatprep.subr.bf16.mxu0 0
        %1712 = vmatpush1.bf16.msra.mxu0 0
        %1713 = vmatprep.subr.bf16.mxu0 0
        %1714 = vmatpush1.bf16.msra.mxu0 0
        %1715 = vmatprep.subr.bf16.mxu0 0
        %1716 = vmatpush1.bf16.msra.mxu0 0
        %1717 = vmatprep.subr.bf16.mxu0 0
        %1718 = vmatpush1.bf16.msra.mxu0 0
        %1719 = vmatprep.subr.bf16.mxu0 0
        %1720 = vmatpush1.bf16.msra.mxu0 0
        %1721 = vmatprep.subr.bf16.mxu0 0
        %1722 = vmatpush1.bf16.msra.mxu0 0
        %1723 = vmatprep.subr.bf16.mxu0 0
        %1724 = vmatpush1.bf16.msra.mxu0 0
        %1725 = vmatprep.subr.bf16.mxu0 0
        %1726 = vmatpush1.bf16.msra.mxu0 0
        %1727 = vmatprep.subr.bf16.mxu0 0
        %1728 = vmatpush1.bf16.msra.mxu0 0
        %1729 = vmatprep.subr.bf16.mxu0 0
        %1730 = vmatpush1.bf16.msra.mxu0 0
        %1731 = vmatprep.subr.bf16.mxu0 0
        %1732 = vmatpush1.bf16.msra.mxu0 0
        %1733 = vmatprep.subr.bf16.mxu0 0
        %1734 = vmatpush1.bf16.msra.mxu0 0
        %1735 = vmatprep.subr.bf16.mxu0 0
        %1736 = vmatpush1.bf16.msra.mxu0 0
        %1737 = vmatprep.subr.bf16.mxu0 0
        %1738 = vmatpush1.bf16.msra.mxu0 0
        %1739 = vmatprep.mubr.bf16.mxu0 0
        %1740 = vmatmul.mubr.bf16.gmra.mrb[0].mxu0 %v1705
        %v1741 = vpop.f32.mrb[0].mxu0
        %v1742 = vadd.f32 0.0, %v1741
        %v1743 = vpop.f32.mrb[0].mxu0
        %v1744 = vadd.f32 0.0, %v1743
        %v1745 = vpop.f32.mrb[0].mxu0
        %v1746 = vadd.f32 0.0, %v1745
        %v1747 = vpop.f32.mrb[0].mxu0
        %v1748 = vadd.f32 0.0, %v1747
        %1749 = vdwg.mxu0
        %1750 = vmatprep.subr.bf16.mxu0 %v1683
        %1751 = vmatpush1.bf16.msra.mxu0 %v1682
        %1752 = vmatprep.subr.bf16.mxu0 %v1689
        %1753 = vmatpush1.bf16.msra.mxu0 %v1688
        %1754 = vmatprep.subr.bf16.mxu0 0
        %1755 = vmatpush1.bf16.msra.mxu0 0
        %1756 = vmatprep.subr.bf16.mxu0 0
        %1757 = vmatpush1.bf16.msra.mxu0 0
        %1758 = vmatprep.subr.bf16.mxu0 0
        %1759 = vmatpush1.bf16.msra.mxu0 0
        %1760 = vmatprep.subr.bf16.mxu0 0
        %1761 = vmatpush1.bf16.msra.mxu0 0
        %1762 = vmatprep.subr.bf16.mxu0 0
        %1763 = vmatpush1.bf16.msra.mxu0 0
        %1764 = vmatprep.subr.bf16.mxu0 0
        %1765 = vmatpush1.bf16.msra.mxu0 0
        %1766 = vmatprep.subr.bf16.mxu0 0
        %1767 = vmatpush1.bf16.msra.mxu0 0
        %1768 = vmatprep.subr.bf16.mxu0 0
        %1769 = vmatpush1.bf16.msra.mxu0 0
        %1770 = vmatprep.subr.bf16.mxu0 0
        %1771 = vmatpush1.bf16.msra.mxu0 0
        %1772 = vmatprep.subr.bf16.mxu0 0
        %1773 = vmatpush1.bf16.msra.mxu0 0
        %1774 = vmatprep.subr.bf16.mxu0 0
        %1775 = vmatpush1.bf16.msra.mxu0 0
        %1776 = vmatprep.subr.bf16.mxu0 0
        %1777 = vmatpush1.bf16.msra.mxu0 0
        %1778 = vmatprep.subr.bf16.mxu0 0
        %1779 = vmatpush1.bf16.msra.mxu0 0
        %1780 = vmatprep.subr.bf16.mxu0 0
        %1781 = vmatpush1.bf16.msra.mxu0 0
        %1782 = vmatprep.mubr.bf16.mxu0 0
        %1783 = vmatmul.mubr.bf16.gmra.mrb[0].mxu0 %v1705
        %v1784 = vpop.f32.mrb[0].mxu0
        %v1785 = vadd.f32 0.0, %v1784
        %v1786 = vpop.f32.mrb[0].mxu0
        %v1787 = vadd.f32 0.0, %v1786
        %v1788 = vpop.f32.mrb[0].mxu0
        %v1789 = vadd.f32 0.0, %v1788
        %v1790 = vpop.f32.mrb[0].mxu0
        %v1791 = vadd.f32 0.0, %v1790
        %1792 = vdwg.mxu0
        %1793 = vmatprep.subr.bf16.mxu0 %v1685
        %1794 = vmatpush1.bf16.msra.mxu0 %v1684
        %1795 = vmatprep.subr.bf16.mxu0 %v1691
        %1796 = vmatpush1.bf16.msra.mxu0 %v1690
        %1797 = vmatprep.subr.bf16.mxu0 0
        %1798 = vmatpush1.bf16.msra.mxu0 0
        %1799 = vmatprep.subr.bf16.mxu0 0
        %1800 = vmatpush1.bf16.msra.mxu0 0
        %1801 = vmatprep.subr.bf16.mxu0 0
        %1802 = vmatpush1.bf16.msra.mxu0 0
        %1803 = vmatprep.subr.bf16.mxu0 0
        %1804 = vmatpush1.bf16.msra.mxu0 0
        %1805 = vmatprep.subr.bf16.mxu0 0
        %1806 = vmatpush1.bf16.msra.mxu0 0
        %1807 = vmatprep.subr.bf16.mxu0 0
        %1808 = vmatpush1.bf16.msra.mxu0 0
        %1809 = vmatprep.subr.bf16.mxu0 0
        %1810 = vmatpush1.bf16.msra.mxu0 0
        %1811 = vmatprep.subr.bf16.mxu0 0
        %1812 = vmatpush1.bf16.msra.mxu0 0
        %1813 = vmatprep.subr.bf16.mxu0 0
        %1814 = vmatpush1.bf16.msra.mxu0 0
        %1815 = vmatprep.subr.bf16.mxu0 0
        %1816 = vmatpush1.bf16.msra.mxu0 0
        %1817 = vmatprep.subr.bf16.mxu0 0
        %1818 = vmatpush1.bf16.msra.mxu0 0
        %1819 = vmatprep.subr.bf16.mxu0 0
        %1820 = vmatpush1.bf16.msra.mxu0 0
        %1821 = vmatprep.subr.bf16.mxu0 0
        %1822 = vmatpush1.bf16.msra.mxu0 0
        %1823 = vmatprep.subr.bf16.mxu0 0
        %1824 = vmatpush1.bf16.msra.mxu0 0
        %1825 = vmatprep.mubr.bf16.mxu0 0
        %1826 = vmatmul.mubr.bf16.gmra.mrb[0].mxu0 %v1705
        %v1827 = vpop.f32.mrb[0].mxu0
        %v1828 = vadd.f32 0.0, %v1827
        %v1829 = vpop.f32.mrb[0].mxu0
        %v1830 = vadd.f32 0.0, %v1829
        %v1831 = vpop.f32.mrb[0].mxu0
        %v1832 = vadd.f32 0.0, %v1831
        %v1833 = vpop.f32.mrb[0].mxu0
        %v1834 = vadd.f32 0.0, %v1833
        %1835 = vdwg.mxu0
        %v1836 = vadd.f32 %v1542, %v1742
        %v1837 = vadd.f32 %v1543, %v1744
        %v1838 = vadd.f32 %v1544, %v1785
        %v1839 = vadd.f32 %v1545, %v1787
        %v1840 = vadd.f32 %v1546, %v1828
        %v1841 = vadd.f32 %v1547, %v1830
        %v1842 = vadd.f32 %v1548, %v1746
        %v1843 = vadd.f32 %v1549, %v1748
        %v1844 = vadd.f32 %v1550, %v1789
        %v1845 = vadd.f32 %v1551, %v1791
        %v1846 = vadd.f32 %v1552, %v1832
        %v1847 = vadd.f32 %v1553, %v1834
        %1848 = vset.pattern.permute.xlu0 5
        %1849 = vperm.xlu0 %1848, %v346
        %v1850 = vpop.permute.xlu0 %1849
        %1851 = vset.pattern.permute.xlu0 5
        %1852 = vperm.xlu0 %1851, %v347
        %v1853 = vpop.permute.xlu0 %1852
        %vm1854 = vcmp.eq.s32.totalorder %v1850, %v343
        %vm1855 = vcmp.eq.s32.totalorder %v1853, %v343
        %v1856 = vsel %vm1854, 1.0, 0.0
        %v1857 = vsel %vm1855, 1.0, 0.0
        %v1858 = vpack.c.bf16 %v1857, %v1856
        %1859 = vset.pattern.permute.xlu0 5
        %1860 = vperm.xlu0 %1859, %v369
        %v1861 = vpop.permute.xlu0 %1860
        %1863 = vset.pattern.permute.xlu0 5
        %1864 = vperm.xlu0 %1863, %v370
        %v1865 = vpop.permute.xlu0 %1864
        %v1867 = vmul.f32 %v1861, %v388
        %v1868 = vmul.f32 %v1865, %v388
        %v1870 = vsel %vm415, %v1858, 0
        %1872 = vmatprep.subr.bf16.mxu0 0
        %1873 = vmatpush1.bf16.msra.mxu0 %v407
        %1874 = vmatprep.subr.bf16.mxu0 0
        %1875 = vmatpush1.bf16.msra.mxu0 %v408
        %1876 = vmatprep.subr.bf16.mxu0 0
        %1877 = vmatpush1.bf16.msra.mxu0 %v409
        %1878 = vmatprep.subr.bf16.mxu0 0
        %1879 = vmatpush1.bf16.msra.mxu0 %v410
        %1880 = vmatprep.subr.bf16.mxu0 0
        %1881 = vmatpush1.bf16.msra.mxu0 0
        %1882 = vmatprep.subr.bf16.mxu0 0
        %1883 = vmatpush1.bf16.msra.mxu0 0
        %1884 = vmatprep.subr.bf16.mxu0 0
        %1885 = vmatpush1.bf16.msra.mxu0 0
        %1886 = vmatprep.subr.bf16.mxu0 0
        %1887 = vmatpush1.bf16.msra.mxu0 0
        %1888 = vmatprep.subr.bf16.mxu0 0
        %1889 = vmatpush1.bf16.msra.mxu0 0
        %1890 = vmatprep.subr.bf16.mxu0 0
        %1891 = vmatpush1.bf16.msra.mxu0 0
        %1892 = vmatprep.subr.bf16.mxu0 0
        %1893 = vmatpush1.bf16.msra.mxu0 0
        %1894 = vmatprep.subr.bf16.mxu0 0
        %1895 = vmatpush1.bf16.msra.mxu0 0
        %1896 = vmatprep.subr.bf16.mxu0 0
        %1897 = vmatpush1.bf16.msra.mxu0 0
        %1898 = vmatprep.subr.bf16.mxu0 0
        %1899 = vmatpush1.bf16.msra.mxu0 0
        %1900 = vmatprep.subr.bf16.mxu0 0
        %1901 = vmatpush1.bf16.msra.mxu0 0
        %1902 = vmatprep.subr.bf16.mxu0 0
        %1903 = vmatpush1.bf16.msra.mxu0 0
        %1904 = vmatprep.mubr.bf16.mxu0 0
        %1905 = vmatmul.mubr.bf16.gmra.mrb[0].mxu0 %v1870
        %v1906 = vpop.f32.mrb[0].mxu0
        %v1907 = vadd.f32 %v1867, %v1906
        %v1908 = vpop.f32.mrb[0].mxu0
        %v1909 = vpop.f32.mrb[0].mxu0
        %v1910 = vadd.f32 %v1868, %v1909
        %v1911 = vpop.f32.mrb[0].mxu0
        %1912 = vdwg.mxu0
        %1913 = vset.pattern.permute.xlu0 5
        %1914 = vperm.xlu0 %1913, %v373
        %v1915 = vpop.permute.xlu0 %1914
        %1917 = vset.pattern.permute.xlu0 5
        %1918 = vperm.xlu0 %1917, %v374
        %v1919 = vpop.permute.xlu0 %1918
        %v1921 = vmul.f32 %v1915, %v473
        %v1922 = vmul.f32 %v1919, %v473
        %v1923 = vadd.f32 %v1907, %v1921
        %v1924 = vadd.f32 %v1910, %v1922
        %v1925 = vpack.c.bf16 %v1924, %v1923
        %v1926 = vld [vmem:[#allocation2 + $0x1e0] sm:$0xff]
        %v1927 = vld [vmem:[#allocation2 + $0x1e8] sm:$0xff]
        %v1928 = vld [vmem:[#allocation2 + $0x1f0] sm:$0xff]
        %v1929 = vld [vmem:[#allocation2 + $0x1f8] sm:$0xff]
        %v1930 = vld [vmem:[#allocation2 + $0x200] sm:$0xff]
        %v1931 = vld [vmem:[#allocation2 + $0x208] sm:$0xff]
        %v1932 = vld [vmem:[#allocation2 + $0x210] sm:$0xff]
        %v1933 = vld [vmem:[#allocation2 + $0x218] sm:$0xff]
        %v1934 = vld [vmem:[#allocation2 + $0x220] sm:$0xff]
        %v1935 = vld [vmem:[#allocation2 + $0x228] sm:$0xff]
        %v1936 = vld [vmem:[#allocation2 + $0x230] sm:$0xff]
        %v1937 = vld [vmem:[#allocation2 + $0x238] sm:$0xff]
        %v1950 = vunpack.c.l.b16 %v1926
        %v1951 = vunpack.c.h.b16 %v1926
        %v1952 = vunpack.c.l.b16 %v1927
        %v1953 = vunpack.c.h.b16 %v1927
        %v1954 = vunpack.c.l.b16 %v1928
        %v1955 = vunpack.c.h.b16 %v1928
        %v1956 = vunpack.c.l.b16 %v1929
        %v1957 = vunpack.c.h.b16 %v1929
        %v1958 = vunpack.c.l.b16 %v1930
        %v1959 = vunpack.c.h.b16 %v1930
        %v1960 = vunpack.c.l.b16 %v1931
        %v1961 = vunpack.c.h.b16 %v1931
        %v1962 = vunpack.c.l.b16 %v1932
        %v1963 = vunpack.c.h.b16 %v1932
        %v1964 = vunpack.c.l.b16 %v1933
        %v1965 = vunpack.c.h.b16 %v1933
        %v1966 = vunpack.c.l.b16 %v1934
        %v1967 = vunpack.c.h.b16 %v1934
        %v1968 = vunpack.c.l.b16 %v1935
        %v1969 = vunpack.c.h.b16 %v1935
        %v1970 = vunpack.c.l.b16 %v1936
        %v1971 = vunpack.c.h.b16 %v1936
        %v1972 = vunpack.c.l.b16 %v1937
        %v1973 = vunpack.c.h.b16 %v1937
        %v1974 = vpack.c.b16 %v1956, %v1950
        %v1975 = vpack.c.b16 %v1957, %v1951
        %v1976 = vpack.c.b16 %v1958, %v1952
        %v1977 = vpack.c.b16 %v1959, %v1953
        %v1978 = vpack.c.b16 %v1960, %v1954
        %v1979 = vpack.c.b16 %v1961, %v1955
        %v1980 = vpack.c.b16 %v1968, %v1962
        %v1981 = vpack.c.b16 %v1969, %v1963
        %v1982 = vpack.c.b16 %v1970, %v1964
        %v1983 = vpack.c.b16 %v1971, %v1965
        %v1984 = vpack.c.b16 %v1972, %v1966
        %v1985 = vpack.c.b16 %v1973, %v1967
        %v1999 = vsel %vm641, %v1925, 0
        %2001 = vmatprep.subr.bf16.mxu0 %v1975
        %2002 = vmatpush1.bf16.msra.mxu0 %v1974
        %2003 = vmatprep.subr.bf16.mxu0 %v1981
        %2004 = vmatpush1.bf16.msra.mxu0 %v1980
        %2005 = vmatprep.subr.bf16.mxu0 0
        %2006 = vmatpush1.bf16.msra.mxu0 0
        %2007 = vmatprep.subr.bf16.mxu0 0
        %2008 = vmatpush1.bf16.msra.mxu0 0
        %2009 = vmatprep.subr.bf16.mxu0 0
        %2010 = vmatpush1.bf16.msra.mxu0 0
        %2011 = vmatprep.subr.bf16.mxu0 0
        %2012 = vmatpush1.bf16.msra.mxu0 0
        %2013 = vmatprep.subr.bf16.mxu0 0
        %2014 = vmatpush1.bf16.msra.mxu0 0
        %2015 = vmatprep.subr.bf16.mxu0 0
        %2016 = vmatpush1.bf16.msra.mxu0 0
        %2017 = vmatprep.subr.bf16.mxu0 0
        %2018 = vmatpush1.bf16.msra.mxu0 0
        %2019 = vmatprep.subr.bf16.mxu0 0
        %2020 = vmatpush1.bf16.msra.mxu0 0
        %2021 = vmatprep.subr.bf16.mxu0 0
        %2022 = vmatpush1.bf16.msra.mxu0 0
        %2023 = vmatprep.subr.bf16.mxu0 0
        %2024 = vmatpush1.bf16.msra.mxu0 0
        %2025 = vmatprep.subr.bf16.mxu0 0
        %2026 = vmatpush1.bf16.msra.mxu0 0
        %2027 = vmatprep.subr.bf16.mxu0 0
        %2028 = vmatpush1.bf16.msra.mxu0 0
        %2029 = vmatprep.subr.bf16.mxu0 0
        %2030 = vmatpush1.bf16.msra.mxu0 0
        %2031 = vmatprep.subr.bf16.mxu0 0
        %2032 = vmatpush1.bf16.msra.mxu0 0
        %2033 = vmatprep.mubr.bf16.mxu0 0
        %2034 = vmatmul.mubr.bf16.gmra.mrb[0].mxu0 %v1999
        %v2035 = vpop.f32.mrb[0].mxu0
        %v2036 = vadd.f32 0.0, %v2035
        %v2037 = vpop.f32.mrb[0].mxu0
        %v2038 = vadd.f32 0.0, %v2037
        %v2039 = vpop.f32.mrb[0].mxu0
        %v2040 = vadd.f32 0.0, %v2039
        %v2041 = vpop.f32.mrb[0].mxu0
        %v2042 = vadd.f32 0.0, %v2041
        %2043 = vdwg.mxu0
        %2044 = vmatprep.subr.bf16.mxu0 %v1977
        %2045 = vmatpush1.bf16.msra.mxu0 %v1976
        %2046 = vmatprep.subr.bf16.mxu0 %v1983
        %2047 = vmatpush1.bf16.msra.mxu0 %v1982
        %2048 = vmatprep.subr.bf16.mxu0 0
        %2049 = vmatpush1.bf16.msra.mxu0 0
        %2050 = vmatprep.subr.bf16.mxu0 0
        %2051 = vmatpush1.bf16.msra.mxu0 0
        %2052 = vmatprep.subr.bf16.mxu0 0
        %2053 = vmatpush1.bf16.msra.mxu0 0
        %2054 = vmatprep.subr.bf16.mxu0 0
        %2055 = vmatpush1.bf16.msra.mxu0 0
        %2056 = vmatprep.subr.bf16.mxu0 0
        %2057 = vmatpush1.bf16.msra.mxu0 0
        %2058 = vmatprep.subr.bf16.mxu0 0
        %2059 = vmatpush1.bf16.msra.mxu0 0
        %2060 = vmatprep.subr.bf16.mxu0 0
        %2061 = vmatpush1.bf16.msra.mxu0 0
        %2062 = vmatprep.subr.bf16.mxu0 0
        %2063 = vmatpush1.bf16.msra.mxu0 0
        %2064 = vmatprep.subr.bf16.mxu0 0
        %2065 = vmatpush1.bf16.msra.mxu0 0
        %2066 = vmatprep.subr.bf16.mxu0 0
        %2067 = vmatpush1.bf16.msra.mxu0 0
        %2068 = vmatprep.subr.bf16.mxu0 0
        %2069 = vmatpush1.bf16.msra.mxu0 0
        %2070 = vmatprep.subr.bf16.mxu0 0
        %2071 = vmatpush1.bf16.msra.mxu0 0
        %2072 = vmatprep.subr.bf16.mxu0 0
        %2073 = vmatpush1.bf16.msra.mxu0 0
        %2074 = vmatprep.subr.bf16.mxu0 0
        %2075 = vmatpush1.bf16.msra.mxu0 0
        %2076 = vmatprep.mubr.bf16.mxu0 0
        %2077 = vmatmul.mubr.bf16.gmra.mrb[0].mxu0 %v1999
        %v2078 = vpop.f32.mrb[0].mxu0
        %v2079 = vadd.f32 0.0, %v2078
        %v2080 = vpop.f32.mrb[0].mxu0
        %v2081 = vadd.f32 0.0, %v2080
        %v2082 = vpop.f32.mrb[0].mxu0
        %v2083 = vadd.f32 0.0, %v2082
        %v2084 = vpop.f32.mrb[0].mxu0
        %v2085 = vadd.f32 0.0, %v2084
        %2086 = vdwg.mxu0
        %2087 = vmatprep.subr.bf16.mxu0 %v1979
        %2088 = vmatpush1.bf16.msra.mxu0 %v1978
        %2089 = vmatprep.subr.bf16.mxu0 %v1985
        %2090 = vmatpush1.bf16.msra.mxu0 %v1984
        %2091 = vmatprep.subr.bf16.mxu0 0
        %2092 = vmatpush1.bf16.msra.mxu0 0
        %2093 = vmatprep.subr.bf16.mxu0 0
        %2094 = vmatpush1.bf16.msra.mxu0 0
        %2095 = vmatprep.subr.bf16.mxu0 0
        %2096 = vmatpush1.bf16.msra.mxu0 0
        %2097 = vmatprep.subr.bf16.mxu0 0
        %2098 = vmatpush1.bf16.msra.mxu0 0
        %2099 = vmatprep.subr.bf16.mxu0 0
        %2100 = vmatpush1.bf16.msra.mxu0 0
        %2101 = vmatprep.subr.bf16.mxu0 0
        %2102 = vmatpush1.bf16.msra.mxu0 0
        %2103 = vmatprep.subr.bf16.mxu0 0
        %2104 = vmatpush1.bf16.msra.mxu0 0
        %2105 = vmatprep.subr.bf16.mxu0 0
        %2106 = vmatpush1.bf16.msra.mxu0 0
        %2107 = vmatprep.subr.bf16.mxu0 0
        %2108 = vmatpush1.bf16.msra.mxu0 0
        %2109 = vmatprep.subr.bf16.mxu0 0
        %2110 = vmatpush1.bf16.msra.mxu0 0
        %2111 = vmatprep.subr.bf16.mxu0 0
        %2112 = vmatpush1.bf16.msra.mxu0 0
        %2113 = vmatprep.subr.bf16.mxu0 0
        %2114 = vmatpush1.bf16.msra.mxu0 0
        %2115 = vmatprep.subr.bf16.mxu0 0
        %2116 = vmatpush1.bf16.msra.mxu0 0
        %2117 = vmatprep.subr.bf16.mxu0 0
        %2118 = vmatpush1.bf16.msra.mxu0 0
        %2119 = vmatprep.mubr.bf16.mxu0 0
        %2120 = vmatmul.mubr.bf16.gmra.mrb[0].mxu0 %v1999
        %v2121 = vpop.f32.mrb[0].mxu0
        %v2122 = vadd.f32 0.0, %v2121
        %v2123 = vpop.f32.mrb[0].mxu0
        %v2124 = vadd.f32 0.0, %v2123
        %v2125 = vpop.f32.mrb[0].mxu0
        %v2126 = vadd.f32 0.0, %v2125
        %v2127 = vpop.f32.mrb[0].mxu0
        %v2128 = vadd.f32 0.0, %v2127
        %2129 = vdwg.mxu0
        %v2130 = vadd.f32 %v1836, %v2036
        %v2131 = vadd.f32 %v1837, %v2038
        %v2132 = vadd.f32 %v1838, %v2079
        %v2133 = vadd.f32 %v1839, %v2081
        %v2134 = vadd.f32 %v1840, %v2122
        %v2135 = vadd.f32 %v1841, %v2124
        %v2136 = vadd.f32 %v1842, %v2040
        %v2137 = vadd.f32 %v1843, %v2042
        %v2138 = vadd.f32 %v1844, %v2083
        %v2139 = vadd.f32 %v1845, %v2085
        %v2140 = vadd.f32 %v1846, %v2126
        %v2141 = vadd.f32 %v1847, %v2128
        %2142 = vset.pattern.permute.xlu0 6
        %2143 = vperm.xlu0 %2142, %v346
        %v2144 = vpop.permute.xlu0 %2143
        %2145 = vset.pattern.permute.xlu0 6
        %2146 = vperm.xlu0 %2145, %v347
        %v2147 = vpop.permute.xlu0 %2146
        %vm2148 = vcmp.eq.s32.totalorder %v2144, %v343
        %vm2149 = vcmp.eq.s32.totalorder %v2147, %v343
        %v2150 = vsel %vm2148, 1.0, 0.0
        %v2151 = vsel %vm2149, 1.0, 0.0
        %v2152 = vpack.c.bf16 %v2151, %v2150
        %2153 = vset.pattern.permute.xlu0 6
        %2154 = vperm.xlu0 %2153, %v369
        %v2155 = vpop.permute.xlu0 %2154
        %2157 = vset.pattern.permute.xlu0 6
        %2158 = vperm.xlu0 %2157, %v370
        %v2159 = vpop.permute.xlu0 %2158
        %v2161 = vmul.f32 %v2155, %v388
        %v2162 = vmul.f32 %v2159, %v388
        %v2164 = vsel %vm415, %v2152, 0
        %2166 = vmatprep.subr.bf16.mxu0 0
        %2167 = vmatpush1.bf16.msra.mxu0 %v407
        %2168 = vmatprep.subr.bf16.mxu0 0
        %2169 = vmatpush1.bf16.msra.mxu0 %v408
        %2170 = vmatprep.subr.bf16.mxu0 0
        %2171 = vmatpush1.bf16.msra.mxu0 %v409
        %2172 = vmatprep.subr.bf16.mxu0 0
        %2173 = vmatpush1.bf16.msra.mxu0 %v410
        %2174 = vmatprep.subr.bf16.mxu0 0
        %2175 = vmatpush1.bf16.msra.mxu0 0
        %2176 = vmatprep.subr.bf16.mxu0 0
        %2177 = vmatpush1.bf16.msra.mxu0 0
        %2178 = vmatprep.subr.bf16.mxu0 0
        %2179 = vmatpush1.bf16.msra.mxu0 0
        %2180 = vmatprep.subr.bf16.mxu0 0
        %2181 = vmatpush1.bf16.msra.mxu0 0
        %2182 = vmatprep.subr.bf16.mxu0 0
        %2183 = vmatpush1.bf16.msra.mxu0 0
        %2184 = vmatprep.subr.bf16.mxu0 0
        %2185 = vmatpush1.bf16.msra.mxu0 0
        %2186 = vmatprep.subr.bf16.mxu0 0
        %2187 = vmatpush1.bf16.msra.mxu0 0
        %2188 = vmatprep.subr.bf16.mxu0 0
        %2189 = vmatpush1.bf16.msra.mxu0 0
        %2190 = vmatprep.subr.bf16.mxu0 0
        %2191 = vmatpush1.bf16.msra.mxu0 0
        %2192 = vmatprep.subr.bf16.mxu0 0
        %2193 = vmatpush1.bf16.msra.mxu0 0
        %2194 = vmatprep.subr.bf16.mxu0 0
        %2195 = vmatpush1.bf16.msra.mxu0 0
        %2196 = vmatprep.subr.bf16.mxu0 0
        %2197 = vmatpush1.bf16.msra.mxu0 0
        %2198 = vmatprep.mubr.bf16.mxu0 0
        %2199 = vmatmul.mubr.bf16.gmra.mrb[0].mxu0 %v2164
        %v2200 = vpop.f32.mrb[0].mxu0
        %v2201 = vadd.f32 %v2161, %v2200
        %v2202 = vpop.f32.mrb[0].mxu0
        %v2203 = vpop.f32.mrb[0].mxu0
        %v2204 = vadd.f32 %v2162, %v2203
        %v2205 = vpop.f32.mrb[0].mxu0
        %2206 = vdwg.mxu0
        %2207 = vset.pattern.permute.xlu0 6
        %2208 = vperm.xlu0 %2207, %v373
        %v2209 = vpop.permute.xlu0 %2208
        %2211 = vset.pattern.permute.xlu0 6
        %2212 = vperm.xlu0 %2211, %v374
        %v2213 = vpop.permute.xlu0 %2212
        %v2215 = vmul.f32 %v2209, %v473
        %v2216 = vmul.f32 %v2213, %v473
        %v2217 = vadd.f32 %v2201, %v2215
        %v2218 = vadd.f32 %v2204, %v2216
        %v2219 = vpack.c.bf16 %v2218, %v2217
        %v2220 = vld [vmem:[#allocation2 + $0x240] sm:$0xff]
        %v2221 = vld [vmem:[#allocation2 + $0x248] sm:$0xff]
        %v2222 = vld [vmem:[#allocation2 + $0x250] sm:$0xff]
        %v2223 = vld [vmem:[#allocation2 + $0x258] sm:$0xff]
        %v2224 = vld [vmem:[#allocation2 + $0x260] sm:$0xff]
        %v2225 = vld [vmem:[#allocation2 + $0x268] sm:$0xff]
        %v2226 = vld [vmem:[#allocation2 + $0x270] sm:$0xff]
        %v2227 = vld [vmem:[#allocation2 + $0x278] sm:$0xff]
        %v2228 = vld [vmem:[#allocation2 + $0x280] sm:$0xff]
        %v2229 = vld [vmem:[#allocation2 + $0x288] sm:$0xff]
        %v2230 = vld [vmem:[#allocation2 + $0x290] sm:$0xff]
        %v2231 = vld [vmem:[#allocation2 + $0x298] sm:$0xff]
        %v2244 = vunpack.c.l.b16 %v2220
        %v2245 = vunpack.c.h.b16 %v2220
        %v2246 = vunpack.c.l.b16 %v2221
        %v2247 = vunpack.c.h.b16 %v2221
        %v2248 = vunpack.c.l.b16 %v2222
        %v2249 = vunpack.c.h.b16 %v2222
        %v2250 = vunpack.c.l.b16 %v2223
        %v2251 = vunpack.c.h.b16 %v2223
        %v2252 = vunpack.c.l.b16 %v2224
        %v2253 = vunpack.c.h.b16 %v2224
        %v2254 = vunpack.c.l.b16 %v2225
        %v2255 = vunpack.c.h.b16 %v2225
        %v2256 = vunpack.c.l.b16 %v2226
        %v2257 = vunpack.c.h.b16 %v2226
        %v2258 = vunpack.c.l.b16 %v2227
        %v2259 = vunpack.c.h.b16 %v2227
        %v2260 = vunpack.c.l.b16 %v2228
        %v2261 = vunpack.c.h.b16 %v2228
        %v2262 = vunpack.c.l.b16 %v2229
        %v2263 = vunpack.c.h.b16 %v2229
        %v2264 = vunpack.c.l.b16 %v2230
        %v2265 = vunpack.c.h.b16 %v2230
        %v2266 = vunpack.c.l.b16 %v2231
        %v2267 = vunpack.c.h.b16 %v2231
        %v2268 = vpack.c.b16 %v2250, %v2244
        %v2269 = vpack.c.b16 %v2251, %v2245
        %v2270 = vpack.c.b16 %v2252, %v2246
        %v2271 = vpack.c.b16 %v2253, %v2247
        %v2272 = vpack.c.b16 %v2254, %v2248
        %v2273 = vpack.c.b16 %v2255, %v2249
        %v2274 = vpack.c.b16 %v2262, %v2256
        %v2275 = vpack.c.b16 %v2263, %v2257
        %v2276 = vpack.c.b16 %v2264, %v2258
        %v2277 = vpack.c.b16 %v2265, %v2259
        %v2278 = vpack.c.b16 %v2266, %v2260
        %v2279 = vpack.c.b16 %v2267, %v2261
        %v2293 = vsel %vm641, %v2219, 0
        %2295 = vmatprep.subr.bf16.mxu0 %v2269
        %2296 = vmatpush1.bf16.msra.mxu0 %v2268
        %2297 = vmatprep.subr.bf16.mxu0 %v2275
        %2298 = vmatpush1.bf16.msra.mxu0 %v2274
        %2299 = vmatprep.subr.bf16.mxu0 0
        %2300 = vmatpush1.bf16.msra.mxu0 0
        %2301 = vmatprep.subr.bf16.mxu0 0
        %2302 = vmatpush1.bf16.msra.mxu0 0
        %2303 = vmatprep.subr.bf16.mxu0 0
        %2304 = vmatpush1.bf16.msra.mxu0 0
        %2305 = vmatprep.subr.bf16.mxu0 0
        %2306 = vmatpush1.bf16.msra.mxu0 0
        %2307 = vmatprep.subr.bf16.mxu0 0
        %2308 = vmatpush1.bf16.msra.mxu0 0
        %2309 = vmatprep.subr.bf16.mxu0 0
        %2310 = vmatpush1.bf16.msra.mxu0 0
        %2311 = vmatprep.subr.bf16.mxu0 0
        %2312 = vmatpush1.bf16.msra.mxu0 0
        %2313 = vmatprep.subr.bf16.mxu0 0
        %2314 = vmatpush1.bf16.msra.mxu0 0
        %2315 = vmatprep.subr.bf16.mxu0 0
        %2316 = vmatpush1.bf16.msra.mxu0 0
        %2317 = vmatprep.subr.bf16.mxu0 0
        %2318 = vmatpush1.bf16.msra.mxu0 0
        %2319 = vmatprep.subr.bf16.mxu0 0
        %2320 = vmatpush1.bf16.msra.mxu0 0
        %2321 = vmatprep.subr.bf16.mxu0 0
        %2322 = vmatpush1.bf16.msra.mxu0 0
        %2323 = vmatprep.subr.bf16.mxu0 0
        %2324 = vmatpush1.bf16.msra.mxu0 0
        %2325 = vmatprep.subr.bf16.mxu0 0
        %2326 = vmatpush1.bf16.msra.mxu0 0
        %2327 = vmatprep.mubr.bf16.mxu0 0
        %2328 = vmatmul.mubr.bf16.gmra.mrb[0].mxu0 %v2293
        %v2329 = vpop.f32.mrb[0].mxu0
        %v2330 = vadd.f32 0.0, %v2329
        %v2331 = vpop.f32.mrb[0].mxu0
        %v2332 = vadd.f32 0.0, %v2331
        %v2333 = vpop.f32.mrb[0].mxu0
        %v2334 = vadd.f32 0.0, %v2333
        %v2335 = vpop.f32.mrb[0].mxu0
        %v2336 = vadd.f32 0.0, %v2335
        %2337 = vdwg.mxu0
        %2338 = vmatprep.subr.bf16.mxu0 %v2271
        %2339 = vmatpush1.bf16.msra.mxu0 %v2270
        %2340 = vmatprep.subr.bf16.mxu0 %v2277
        %2341 = vmatpush1.bf16.msra.mxu0 %v2276
        %2342 = vmatprep.subr.bf16.mxu0 0
        %2343 = vmatpush1.bf16.msra.mxu0 0
        %2344 = vmatprep.subr.bf16.mxu0 0
        %2345 = vmatpush1.bf16.msra.mxu0 0
        %2346 = vmatprep.subr.bf16.mxu0 0
        %2347 = vmatpush1.bf16.msra.mxu0 0
        %2348 = vmatprep.subr.bf16.mxu0 0
        %2349 = vmatpush1.bf16.msra.mxu0 0
        %2350 = vmatprep.subr.bf16.mxu0 0
        %2351 = vmatpush1.bf16.msra.mxu0 0
        %2352 = vmatprep.subr.bf16.mxu0 0
        %2353 = vmatpush1.bf16.msra.mxu0 0
        %2354 = vmatprep.subr.bf16.mxu0 0
        %2355 = vmatpush1.bf16.msra.mxu0 0
        %2356 = vmatprep.subr.bf16.mxu0 0
        %2357 = vmatpush1.bf16.msra.mxu0 0
        %2358 = vmatprep.subr.bf16.mxu0 0
        %2359 = vmatpush1.bf16.msra.mxu0 0
        %2360 = vmatprep.subr.bf16.mxu0 0
        %2361 = vmatpush1.bf16.msra.mxu0 0
        %2362 = vmatprep.subr.bf16.mxu0 0
        %2363 = vmatpush1.bf16.msra.mxu0 0
        %2364 = vmatprep.subr.bf16.mxu0 0
        %2365 = vmatpush1.bf16.msra.mxu0 0
        %2366 = vmatprep.subr.bf16.mxu0 0
        %2367 = vmatpush1.bf16.msra.mxu0 0
        %2368 = vmatprep.subr.bf16.mxu0 0
        %2369 = vmatpush1.bf16.msra.mxu0 0
        %2370 = vmatprep.mubr.bf16.mxu0 0
        %2371 = vmatmul.mubr.bf16.gmra.mrb[0].mxu0 %v2293
        %v2372 = vpop.f32.mrb[0].mxu0
        %v2373 = vadd.f32 0.0, %v2372
        %v2374 = vpop.f32.mrb[0].mxu0
        %v2375 = vadd.f32 0.0, %v2374
        %v2376 = vpop.f32.mrb[0].mxu0
        %v2377 = vadd.f32 0.0, %v2376
        %v2378 = vpop.f32.mrb[0].mxu0
        %v2379 = vadd.f32 0.0, %v2378
        %2380 = vdwg.mxu0
        %2381 = vmatprep.subr.bf16.mxu0 %v2273
        %2382 = vmatpush1.bf16.msra.mxu0 %v2272
        %2383 = vmatprep.subr.bf16.mxu0 %v2279
        %2384 = vmatpush1.bf16.msra.mxu0 %v2278
        %2385 = vmatprep.subr.bf16.mxu0 0
        %2386 = vmatpush1.bf16.msra.mxu0 0
        %2387 = vmatprep.subr.bf16.mxu0 0
        %2388 = vmatpush1.bf16.msra.mxu0 0
        %2389 = vmatprep.subr.bf16.mxu0 0
        %2390 = vmatpush1.bf16.msra.mxu0 0
        %2391 = vmatprep.subr.bf16.mxu0 0
        %2392 = vmatpush1.bf16.msra.mxu0 0
        %2393 = vmatprep.subr.bf16.mxu0 0
        %2394 = vmatpush1.bf16.msra.mxu0 0
        %2395 = vmatprep.subr.bf16.mxu0 0
        %2396 = vmatpush1.bf16.msra.mxu0 0
        %2397 = vmatprep.subr.bf16.mxu0 0
        %2398 = vmatpush1.bf16.msra.mxu0 0
        %2399 = vmatprep.subr.bf16.mxu0 0
        %2400 = vmatpush1.bf16.msra.mxu0 0
        %2401 = vmatprep.subr.bf16.mxu0 0
        %2402 = vmatpush1.bf16.msra.mxu0 0
        %2403 = vmatprep.subr.bf16.mxu0 0
        %2404 = vmatpush1.bf16.msra.mxu0 0
        %2405 = vmatprep.subr.bf16.mxu0 0
        %2406 = vmatpush1.bf16.msra.mxu0 0
        %2407 = vmatprep.subr.bf16.mxu0 0
        %2408 = vmatpush1.bf16.msra.mxu0 0
        %2409 = vmatprep.subr.bf16.mxu0 0
        %2410 = vmatpush1.bf16.msra.mxu0 0
        %2411 = vmatprep.subr.bf16.mxu0 0
        %2412 = vmatpush1.bf16.msra.mxu0 0
        %2413 = vmatprep.mubr.bf16.mxu0 0
        %2414 = vmatmul.mubr.bf16.gmra.mrb[0].mxu0 %v2293
        %v2415 = vpop.f32.mrb[0].mxu0
        %v2416 = vadd.f32 0.0, %v2415
        %v2417 = vpop.f32.mrb[0].mxu0
        %v2418 = vadd.f32 0.0, %v2417
        %v2419 = vpop.f32.mrb[0].mxu0
        %v2420 = vadd.f32 0.0, %v2419
        %v2421 = vpop.f32.mrb[0].mxu0
        %v2422 = vadd.f32 0.0, %v2421
        %2423 = vdwg.mxu0
        %v2424 = vadd.f32 %v2130, %v2330
        %v2425 = vadd.f32 %v2131, %v2332
        %v2426 = vadd.f32 %v2132, %v2373
        %v2427 = vadd.f32 %v2133, %v2375
        %v2428 = vadd.f32 %v2134, %v2416
        %v2429 = vadd.f32 %v2135, %v2418
        %v2430 = vadd.f32 %v2136, %v2334
        %v2431 = vadd.f32 %v2137, %v2336
        %v2432 = vadd.f32 %v2138, %v2377
        %v2433 = vadd.f32 %v2139, %v2379
        %v2434 = vadd.f32 %v2140, %v2420
        %v2435 = vadd.f32 %v2141, %v2422
        %v2436 = vld [vmem:[%s6] sm:$0x3f]
        %v2438 = vlaneseq
        %v2439 = vshrl.u32 %v2438, 7
        %v2440 = vsub.s32 0, %v2439
        %v2441 = vrot.slane %v2436, %v2440
        %v2442 = vlaneseq
        %v2443 = vshrl.u32 %v2442, 7
        %v2444 = vsub.s32 1, %v2443
        %v2445 = vrot.slane %v2436, %v2444
        %v2446 = vlaneseq
        %v2447 = vshrl.u32 %v2446, 7
        %v2448 = vsub.s32 2, %v2447
        %v2449 = vrot.slane %v2436, %v2448
        %v2450 = vlaneseq
        %v2451 = vshrl.u32 %v2450, 7
        %v2452 = vsub.s32 3, %v2451
        %v2453 = vrot.slane %v2436, %v2452
        %v2454 = vlaneseq
        %v2455 = vshrl.u32 %v2454, 7
        %v2456 = vsub.s32 4, %v2455
        %v2457 = vrot.slane %v2436, %v2456
        %v2458 = vlaneseq
        %v2459 = vshrl.u32 %v2458, 7
        %v2460 = vsub.s32 5, %v2459
        %v2461 = vrot.slane %v2436, %v2460
        %v2468 = vadd.f32 %v2424, %v2441
        %v2469 = vadd.f32 %v2425, %v2445
        %v2470 = vadd.f32 %v2426, %v2449
        %v2471 = vadd.f32 %v2427, %v2453
        %v2472 = vadd.f32 %v2428, %v2457
        %v2473 = vadd.f32 %v2429, %v2461
        %v2474 = vadd.f32 %v2430, %v2441
        %v2475 = vadd.f32 %v2431, %v2445
        %v2476 = vadd.f32 %v2432, %v2449
        %v2477 = vadd.f32 %v2433, %v2453
        %v2478 = vadd.f32 %v2434, %v2457
        %v2479 = vadd.f32 %v2435, %v2461
        %v2480 = vmax.f32 %v2468, 0.0
        %v2481 = vmax.f32 %v2469, 0.0
        %v2482 = vmax.f32 %v2470, 0.0
        %v2483 = vmax.f32 %v2471, 0.0
        %v2484 = vmax.f32 %v2472, 0.0
        %v2485 = vmax.f32 %v2473, 0.0
        %v2486 = vmax.f32 %v2474, 0.0
        %v2487 = vmax.f32 %v2475, 0.0
        %v2488 = vmax.f32 %v2476, 0.0
        %v2489 = vmax.f32 %v2477, 0.0
        %v2490 = vmax.f32 %v2478, 0.0
        %v2491 = vmax.f32 %v2479, 0.0
        %v2492 = vmax.f32 %v2480, %v2481
        %v2493 = vmax.f32 %v2486, %v2487
        %v2494 = vmax.f32 %v2492, %v2482
        %v2495 = vmax.f32 %v2493, %v2488
        %v2496 = vmax.f32 %v2494, %v2483
        %v2497 = vmax.f32 %v2495, %v2489
        %v2498 = vmax.f32 %v2496, %v2484
        %v2499 = vmax.f32 %v2497, %v2490
        %v2500 = vmax.f32 %v2498, %v2485
        %v2501 = vmax.f32 %v2499, %v2491
        %v2502 = vpack.c.bf16 %v2501, %v2500
        %v2504 = vunpack.c.l.b16 %v2502
        %v2505 = vunpack.c.h.b16 %v2502
        %v2506 = vpack.c.b16 %v2504, %v2504
        %v2507 = vpack.c.b16 %v2505, %v2505
        %2510 = vst [vmem:[%s339] sm:$0xf] %v2506
        %2511 = vst [vmem:[%s339 + $0x4] sm:$0xf] %v2507
        %s2512 = smul.u32 2, %s19
        %p2513 = scmp.lt.s32.totalorder %s2512, 3
        %s2514 = scalar_select %p2513, %s2512, 3
        %s2515 = smul.addr %s2514, 4
        %s2516 = scalar_lea.vmem %s7, %s2515
        // Predicated region
        $region53: #{conv_layer_pallas.1} parent=47 // pred_check
          %p2517 = pneg %p199
        $region54: #{conv_layer_pallas.1} parent=47 // pred_check_branch
          %2519 = sbr.rel (%p2517) target = $region56
        $region55: #{conv_layer_pallas.1} parent=47 // pred_region
          %s2520 = smul.u32 2, %s19
        $region56: #{conv_layer_pallas.1} parent=47 // pred_fallthru
          _
      $region48: #{conv_layer_pallas.1} parent=5 // pred_fallthru
        _
      %p2521 = scmp.le.s32.totalorder 2, %s14
      // Predicated region
      $region57: #{conv_layer_pallas.1} parent=5 // pred_check
        %p2522 = pneg %p2521
      $region58: #{conv_layer_pallas.1} parent=5 // pred_check_branch
        %2524 = sbr.rel (%p2522) target = $region60
      $region59: #{conv_layer_pallas.1} parent=5 // pred_region
        %s2525 = ssub.s32 %s14, 2
        // Predicated region
        $region61: #{conv_layer_pallas.1} parent=59 // pred_check
          %p2526 = pneg %p205
        $region62: #{conv_layer_pallas.1} parent=59 // pred_check_branch
          %2528 = sbr.rel (%p2526) target = $region64
        $region63: #{conv_layer_pallas.1} parent=59 // pred_region
          %s2529 = smul.u32 2, %s20
          %p2530 = scmp.lt.s32.totalorder %s2529, 3
          %s2531 = scalar_select %p2530, %s2529, 3
          %s2532 = smul.addr %s2531, 4
          %s2533 = scalar_lea.vmem %s7, %s2532
        $region64: #{conv_layer_pallas.1} parent=59 // pred_fallthru
          _
      $region60: #{conv_layer_pallas.1} parent=5 // pred_fallthru
        _
    $region6: #{conv_layer_pallas.1} parent=1 // loop_footer
      %s18 = sadd.s32 1, %s14
    $region7: #{conv_layer_pallas.1} parent=1 // loop_footer_branch
      %13 = sbr.rel target = $region3
    $region8: #{conv_layer_pallas.1} parent=1 // loop_exit
      _
    %2534 = vsyncpa [#allocation3], 1
    %s2535 = scalar_lea.sflag [#allocation3], 1
    %2536 = vsyncpa %s2535, 1

</llo_original>
